<compile_context>
chip_gen: v5e
topology: v5e:2x2
jax: 0.10.0
libtpu: 0.0.40
codegen_flags: <defaults>
</compile_context>

<pallas_src>
import jax
import jax.numpy as jnp
from jax.experimental import pallas as pl
from jax.experimental.pallas import tpu as pltpu

# ---------------- model config (small but structurally faithful) ----------------
B = 2            # batch
F = 4            # filter_size
D = 2            # depth multiplier
FD = F * D       # 8
H = 19           # electrode axis (kernel [19, 1] is hard-coded in the module)
RF = 20          # receptive_field (temporal kernel width)
KSEP = 16        # separable kernel width
T = 200          # time samples (divisible by 25; stands in for 30000)
T1 = T // 5      # after avgpool1 (stands in for 6000)
T2 = T1 // 5     # after avgpool2 (stands in for 1200)
TP = T + RF - 1  # padded temporal width for RF-tap stages (219)
KP = T1 + KSEP - 1   # padded width for KSEP-tap stages (55)

LPAD_RF = (RF - 1) // 2          # PyTorch padding='same' (even kernel): left 9
RPAD_RF = RF - 1 - LPAD_RF       # right 10
LPAD_K = (KSEP - 1) // 2         # left 7
RPAD_K = KSEP - 1 - LPAD_K       # right 8

PB = 8           # pool/upsample tile block width; at production keep it 128 (lane-dense)
assert T % 25 == 0 and T2 % PB == 0 and T1 % PB == 0

FP = jnp.float32


def _elu(y):
    # ELU(alpha=1); exp argument clamped so the unused branch cannot overflow.
    # TODO(synk): switch to jnp.expm1 (saves one VALU op, better accuracy near 0) once
    # its Mosaic lowering is confirmed on all target generations.
    return jnp.where(y > 0, y, jnp.exp(jnp.minimum(y, 0.0)) - 1.0)


# ---------------------------------------------------------------------------
# Fused kernel: one grid step == one batch sample, everything in VMEM.
# ---------------------------------------------------------------------------
def eegnet_fused_kernel(
        x_ref,                                  # (1, 1, H, T) input block (one sample)
        b6_ref,                                 # SMEM (1,) de-temporal BN shift
        wsp_ref, bsp_ref,                       # spatial-first conv (BN1+BN2 folded) + bias
        tband_ref, gmask_ref,                   # temporal Toeplitz bands (F,TP,T), group masks
        wdw_ref, wpw_ref, b3_ref,               # separable depthwise taps / pointwise (BN3 folded)
        wdedw_ref, wdepw_ref, b4_ref,           # de-separable (flipped taps) / pointwise (BN4 folded)
        wdsp_ref, b5_ref,                       # stacked de-spatial (BN5 folded) + bias rows
        wdet_ref,                               # stacked de-temporal Toeplitz band (F*TP, T)
        pool_ref, up_ref,                       # (5*PB, PB) avg-pool tile, (PB, 5*PB) upsample tile
        out_ref,                                # (1, 1, H, T) output block
        vpad_ref, p1pad_ref, u1pad_ref, z5cat_ref,   # VMEM scratch
):
    x = x_ref[0, 0]                                               # (H, T)
    pool_t = pool_ref[...]
    up_t = up_ref[...]

    # ---------------- encoder ----------------
    # Spatial contraction FIRST (temporal/spatial convs commute: both linear, act on
    # different axes).  BN1/BN2 scales folded into the weight, shifts into bias_sp.
    v = jnp.dot(wsp_ref[...], x, preferred_element_type=FP)       # (FD, T)

    # temporal 'same' pad: zero only the pad columns (interior fully overwritten).
    vpad_ref[:, :LPAD_RF] = jnp.zeros((FD, LPAD_RF), FP)
    vpad_ref[:, LPAD_RF + T:LPAD_RF + T + RPAD_RF] = jnp.zeros((FD, RPAD_RF), FP)
    vpad_ref[:, LPAD_RF:LPAD_RF + T] = v
    vpad = vpad_ref[...]                                          # (FD, TP)

    # temporal conv as per-group banded-Toeplitz MXU matmuls (masked row-sum over groups).
    sp = jnp.zeros((FD, T), FP)
    for g in range(F):
        sp = sp + gmask_ref[g] * jnp.dot(vpad, tband_ref[g], preferred_element_type=FP)
    z1 = _elu(sp + bsp_ref[...])                                  # (FD, T)

    # avgpool1 (/5): small shift-invariant pool tile, one tiny dot per output block.
    p1 = jnp.concatenate(
        [jnp.dot(z1[:, 5 * PB * b:5 * PB * (b + 1)], pool_t, preferred_element_type=FP)
         for b in range(T1 // PB)], axis=1)                       # (FD, T1)
    # (dropout = identity in inference)

    # separable: depthwise [1,16] 'same' (VPU taps on a ~1-vreg (FD,T1) slab) + pointwise.
    p1pad_ref[:, :LPAD_K] = jnp.zeros((FD, LPAD_K), FP)
    p1pad_ref[:, LPAD_K + T1:LPAD_K + T1 + RPAD_K] = jnp.zeros((FD, RPAD_K), FP)
    p1pad_ref[:, LPAD_K:LPAD_K + T1] = p1
    pp = p1pad_ref[...]                                           # (FD, KP)
    # TODO(synk): at production tile sizes convert to lax.fori_loop(unroll=4) with a
    # dynamic pl.ds window to bound vreg live ranges; here the slab is ~1 vreg.
    dw0 = jnp.zeros((FD, T1), FP)
    dw1 = jnp.zeros((FD, T1), FP)
    for k in range(KSEP):
        tap = wdw_ref[k] * pp[:, k:k + T1]                        # (FD,1) pre-broadcast taps
        if k % 2 == 0:
            dw0 = dw0 + tap
        else:
            dw1 = dw1 + tap
    z2 = _elu(jnp.dot(wpw_ref[...], dw0 + dw1, preferred_element_type=FP) + b3_ref[...])

    # avgpool2 (/5) with the same pool tile.  (dropout = identity in inference)
    enc = jnp.concatenate(
        [jnp.dot(z2[:, 5 * PB * b:5 * PB * (b + 1)], pool_t, preferred_element_type=FP)
         for b in range(T2 // PB)], axis=1)                       # (FD, T2)

    # ---------------- decoder ----------------
    # uppool1 (nearest x5) with the small upsample tile.
    u1 = jnp.concatenate(
        [jnp.dot(enc[:, PB * b:PB * (b + 1)], up_t, preferred_element_type=FP)
         for b in range(T2 // PB)], axis=1)                       # (FD, T1)

    # de_separable: depthwise ConvT [1,16] (first T1 outputs only == the [...,:6000] crop,
    # so only a left pad is needed), then pointwise ConvT 1x1 (BN4 folded) + ELU.
    u1pad_ref[:, :KSEP - 1] = jnp.zeros((FD, KSEP - 1), FP)
    u1pad_ref[:, KSEP - 1:KSEP - 1 + T1] = u1
    upd = u1pad_ref[...]                                          # (FD, KP)
    d0 = jnp.zeros((FD, T1), FP)
    d1 = jnp.zeros((FD, T1), FP)
    for j in range(KSEP):
        tap = wdedw_ref[j] * upd[:, j:j + T1]                     # taps pre-flipped in wrapper
        if j % 2 == 0:
            d0 = d0 + tap
        else:
            d1 = d1 + tap
    z3 = _elu(jnp.dot(wdepw_ref[...], d0 + d1, preferred_element_type=FP) + b4_ref[...])
    # (dropout = identity in inference)

    # uppool2 (nearest x5).
    u2 = jnp.concatenate(
        [jnp.dot(z3[:, PB * b:PB * (b + 1)], up_t, preferred_element_type=FP)
         for b in range(T1 // PB)], axis=1)                       # (FD, T)

    # de_spatial: all F groups as ONE stacked (F*H, FD) @ (FD, T) matmul, BN5 folded,
    # ELU on the stacked (F*H, T) result.
    z5s = _elu(jnp.dot(wdsp_ref[...], u2, preferred_element_type=FP) + b5_ref[...])   # (F*H, T)

    # Pack groups into the horizontally concatenated, left-padded layout feeding the
    # single de-temporal Toeplitz matmul (replaces the old (F,H,TP) scratch round trip);
    # only the pad columns are zeroed.
    for f in range(F):
        base = f * TP
        z5cat_ref[:, base:base + RF - 1] = jnp.zeros((H, RF - 1), FP)
        z5cat_ref[:, base + RF - 1:base + TP] = z5s[f * H:(f + 1) * H, :]

    # de_temporal ConvT (BN6 scale folded into the band, shift added at the end).
    # Only the first T output columns are produced == the [..., :30000] crop.
    out = jnp.dot(z5cat_ref[...], wdet_ref[...], preferred_element_type=FP)   # (H, T)
    out_ref[0, 0] = out + b6_ref[0]


# ---------------------------------------------------------------------------
# Wrapper: BN folding, Toeplitz band / pool / upsample tile construction, pallas_call.
# ---------------------------------------------------------------------------
def eegnet_autoencoder_forward(x, params):
    """x: (B, 1, H, T) float32 (NCHW, like the PyTorch module).  Returns (B, 1, H, T)."""
    p = params
    s1, b1 = p['bn1_scale'], p['bn1_shift']
    s2, b2 = p['bn2_scale'], p['bn2_shift']
    s3, b3 = p['bn3_scale'], p['bn3_shift']
    s4, b4 = p['bn4_scale'], p['bn4_shift']
    s5, b5 = p['bn5_scale'], p['bn5_shift']
    s6, b6 = p['bn6_scale'], p['bn6_shift']

    grp = jnp.arange(FD) // D                                     # mid-channel -> group id

    # spatial conv applied FIRST (temporal/spatial commute); BN1 (input side) and BN2
    # (output side) scales folded into the weight, shifts folded into bias_sp.
    wsp_all = ((s2 * s1[grp])[:, None] * p['w_spatial']).astype(FP)                 # (FD, H)
    bias_sp = ((s2 * b1[grp] * jnp.sum(p['w_spatial'], axis=1) + b2)[:, None]).astype(FP)

    # banded (Toeplitz) matrices for the RF-tap temporal conv / de-temporal ConvT.
    # Shift-invariant in time: at production T these are built once per time TILE.
    m_idx = jnp.arange(TP)[:, None]                                # padded-time index
    t_idx = jnp.arange(T)[None, :]                                 # output-time index
    diff = m_idx - t_idx
    valid = (diff >= 0) & (diff < RF)
    diff_c = jnp.clip(diff, 0, RF - 1)
    # encoder band: [g, m, t] = w_temporal[g, m - t]
    tband_enc = jnp.where(valid[None], p['w_temporal'][:, diff_c], 0.0).astype(FP)  # (F, TP, T)
    # decoder band: [f, m, t] = s6 * w_de_temporal[f, RF-1-(m-t)]   (ConvT = flipped band)
    w_det_eff = s6[0] * p['w_de_temporal']
    wdet_stack = jnp.where(valid[None], w_det_eff[:, RF - 1 - diff_c], 0.0)
    wdet_stack = wdet_stack.reshape(F * TP, T).astype(FP)                           # (F*TP, T)

    gmask = (grp[None, :] == jnp.arange(F)[:, None]).astype(FP)[:, :, None]         # (F, FD, 1)

    # separable / de-separable: taps pre-transposed (and pre-flipped for the ConvT) so
    # each in-kernel tap is a leading-axis read; pointwise weights with BN folded.
    wdw_t = jnp.transpose(p['w_dw'])[:, :, None].astype(FP)                 # (KSEP, FD, 1)
    wpw_eff = (s3[:, None] * p['w_pw']).astype(FP)                          # (FD, FD)
    b3c = b3[:, None].astype(FP)
    wdedw_t = jnp.transpose(p['w_de_dw'][:, ::-1])[:, :, None].astype(FP)   # (KSEP, FD, 1)
    wdepw_eff = (s4[:, None] * p['w_de_pw'].T).astype(FP)                   # ConvT 1x1 weight is (in,out)
    b4c = b4[:, None].astype(FP)

    # de_spatial grouped ConvT as one stacked matrix: row f*H+h, col c (BN5 folded).
    onehot_fc = (jnp.arange(F)[:, None] == grp[None, :]).astype(FP)         # (F, FD)
    wdsp_stack = (onehot_fc[:, None, :] * s5[:, None, None]
                  * jnp.transpose(p['w_de_spatial'])[None, :, :])
    wdsp_stack = wdsp_stack.reshape(F * H, FD).astype(FP)                   # (F*H, FD)
    b5rows = jnp.repeat(b5, H)[:, None].astype(FP)                          # (F*H, 1)

    # small shift-invariant avg-pool (/5) and nearest-upsample (x5) tiles, reused for
    # every time block (replaces the dense O(T^2) pool/upsample matrices).
    pool_tile = (0.2 * (jnp.arange(5 * PB)[:, None] // 5
                        == jnp.arange(PB)[None, :])).astype(FP)             # (5*PB, PB)
    up_tile = (jnp.arange(5 * PB)[None, :] // 5
               == jnp.arange(PB)[:, None]).astype(FP)                       # (PB, 5*PB)

    smem_args = [b6.astype(FP)]
    vmem_args = [wsp_all, bias_sp, tband_enc, gmask,
                 wdw_t, wpw_eff, b3c,
                 wdedw_t, wdepw_eff, b4c,
                 wdsp_stack, b5rows, wdet_stack,
                 pool_tile, up_tile]

    batch = x.shape[0]
    smem_spec = pl.BlockSpec(memory_space=pltpu.MemorySpace.SMEM)

    def const_spec(shape):
        nd = len(shape)
        # index_map is independent of the batch grid index -> blocks not re-fetched.
        return pl.BlockSpec(shape, lambda b, _nd=nd: (0,) * _nd)

    return pl.pallas_call(
        eegnet_fused_kernel,
        out_shape=jax.ShapeDtypeStruct((batch, 1, H, T), FP),
        grid=(batch,),
        in_specs=([pl.BlockSpec((1, 1, H, T), lambda b: (b, 0, 0, 0))]
                  + [smem_spec] * len(smem_args)
                  + [const_spec(a.shape) for a in vmem_args]),
        out_specs=pl.BlockSpec((1, 1, H, T), lambda b: (b, 0, 0, 0)),
        scratch_shapes=[
            pltpu.VMEM((FD, TP), FP),       # vpad   (temporal 'same' pad, pad cols only)
            pltpu.VMEM((FD, KP), FP),       # p1pad  (separable 'same' pad)
            pltpu.VMEM((FD, KP), FP),       # u1pad  (de-separable left pad)
            pltpu.VMEM((H, F * TP), FP),    # z5cat  (concat + left-pad feed for de-temporal matmul)
        ],
        compiler_params=pltpu.CompilerParams(
            dimension_semantics=("parallel",)),     # batch split across TensorCores on v7x
    )(x, *smem_args, *vmem_args)


# ---------------------------------------------------------------------------
# deterministic parameter init (shapes follow the nn.Module __init__)
# ---------------------------------------------------------------------------
def init_params(key):
    keys = jax.random.split(key, 32)
    it = iter(keys)

    def nrm(shape, scale=0.1):
        return (jax.random.normal(next(it), shape) * scale).astype(FP)

    def bn(c):
        gamma = 1.0 + 0.1 * jax.random.normal(next(it), (c,))
        beta = 0.1 * jax.random.normal(next(it), (c,))
        mean = 0.1 * jax.random.normal(next(it), (c,))
        var = jax.random.uniform(next(it), (c,), minval=0.5, maxval=1.5)
        scale = gamma / jnp.sqrt(var + 1e-5)
        shift = beta - mean * scale
        return scale.astype(FP), shift.astype(FP)

    p = {}
    p['w_temporal'] = nrm((F, RF))            # Conv2d(1, F, [1,RF])          weight (F,1,1,RF)
    p['bn1_scale'], p['bn1_shift'] = bn(F)
    p['w_spatial'] = nrm((FD, H))             # Conv2d(F, FD, [19,1], g=F)    weight (FD,1,19,1)
    p['bn2_scale'], p['bn2_shift'] = bn(FD)
    p['w_dw'] = nrm((FD, KSEP))               # Conv2d(FD, FD, [1,16], g=FD)  weight (FD,1,1,16)
    p['w_pw'] = nrm((FD, FD))                 # Conv2d(FD, FD, [1,1])         weight (out,in,1,1)
    p['bn3_scale'], p['bn3_shift'] = bn(FD)
    p['w_de_dw'] = nrm((FD, KSEP))            # ConvT(FD, FD, [1,16], g=FD)   weight (FD,1,1,16)
    p['w_de_pw'] = nrm((FD, FD))              # ConvT(FD, FD, [1,1])          weight (in,out,1,1)
    p['bn4_scale'], p['bn4_shift'] = bn(FD)
    p['w_de_spatial'] = nrm((FD, H))          # ConvT(FD, F, [19,1], g=F)     weight (FD,1,19,1)
    p['bn5_scale'], p['bn5_shift'] = bn(F)
    p['w_de_temporal'] = nrm((F, RF))         # ConvT(F, 1, [1,RF])           weight (F,1,1,RF)
    p['bn6_scale'], p['bn6_shift'] = bn(1)
    return p


if __name__ == "__main__":
    key = jax.random.PRNGKey(0)
    kx, kp = jax.random.split(key)
    x = jax.random.normal(kx, (B, 1, H, T), dtype=FP)
    params = init_params(kp)

    fwd = jax.jit(eegnet_autoencoder_forward)
    out = fwd(x, params)
    out = jax.block_until_ready(out)
    assert out.shape == (B, 1, H, T), out.shape
    assert bool(jnp.all(jnp.isfinite(out)))
    print("KERNEL_OK")
</pallas_src>

<mosaic_0001>
module attributes {stable_mosaic.version = 11 : i64} {
  func.func @eegnet_fused_kernel(%arg0: i32, %arg1: memref<1x1x19x200xf32, #tpu.memory_space<vmem>>, %arg2: memref<1xf32, #tpu.memory_space<smem>>, %arg3: memref<8x19xf32, #tpu.memory_space<vmem>>, %arg4: memref<8x1xf32, #tpu.memory_space<vmem>>, %arg5: memref<4x219x200xf32, #tpu.memory_space<vmem>>, %arg6: memref<4x8x1xf32, #tpu.memory_space<vmem>>, %arg7: memref<16x8x1xf32, #tpu.memory_space<vmem>>, %arg8: memref<8x8xf32, #tpu.memory_space<vmem>>, %arg9: memref<8x1xf32, #tpu.memory_space<vmem>>, %arg10: memref<16x8x1xf32, #tpu.memory_space<vmem>>, %arg11: memref<8x8xf32, #tpu.memory_space<vmem>>, %arg12: memref<8x1xf32, #tpu.memory_space<vmem>>, %arg13: memref<76x8xf32, #tpu.memory_space<vmem>>, %arg14: memref<76x1xf32, #tpu.memory_space<vmem>>, %arg15: memref<876x200xf32, #tpu.memory_space<vmem>>, %arg16: memref<40x8xf32, #tpu.memory_space<vmem>>, %arg17: memref<8x40xf32, #tpu.memory_space<vmem>>, %arg18: memref<1x1x19x200xf32, #tpu.memory_space<vmem>>, %arg19: memref<8x219xf32, #tpu.memory_space<vmem>>, %arg20: memref<8x55xf32, #tpu.memory_space<vmem>>, %arg21: memref<8x55xf32, #tpu.memory_space<vmem>>, %arg22: memref<19x876xf32, #tpu.memory_space<vmem>>) attributes {dimension_semantics = [#tpu.dimension_semantics<parallel>], iteration_bounds = array<i64: 2>, scalar_prefetch = 0 : i64, scratch_operands = 4 : i64, tpu.core_type = #tpu.core_type<tc>, window_params = [{transform_indices = @transform_0, window_bounds = array<i64: 1, 1, 19, 200>}, {transform_indices = @transform_1, window_bounds = array<i64: 1>}, {pipeline_mode = #tpu.pipeline_mode<synchronous>, transform_indices = @transform_2, window_bounds = array<i64: 8, 19>}, {pipeline_mode = #tpu.pipeline_mode<synchronous>, transform_indices = @transform_3, window_bounds = array<i64: 8, 1>}, {pipeline_mode = #tpu.pipeline_mode<synchronous>, transform_indices = @transform_4, window_bounds = array<i64: 4, 219, 200>}, {pipeline_mode = #tpu.pipeline_mode<synchronous>, transform_indices = @transform_5, window_bounds = array<i64: 4, 8, 1>}, {pipeline_mode = #tpu.pipeline_mode<synchronous>, transform_indices = @transform_6, window_bounds = array<i64: 16, 8, 1>}, {pipeline_mode = #tpu.pipeline_mode<synchronous>, transform_indices = @transform_7, window_bounds = array<i64: 8, 8>}, {pipeline_mode = #tpu.pipeline_mode<synchronous>, transform_indices = @transform_8, window_bounds = array<i64: 8, 1>}, {pipeline_mode = #tpu.pipeline_mode<synchronous>, transform_indices = @transform_9, window_bounds = array<i64: 16, 8, 1>}, {pipeline_mode = #tpu.pipeline_mode<synchronous>, transform_indices = @transform_10, window_bounds = array<i64: 8, 8>}, {pipeline_mode = #tpu.pipeline_mode<synchronous>, transform_indices = @transform_11, window_bounds = array<i64: 8, 1>}, {pipeline_mode = #tpu.pipeline_mode<synchronous>, transform_indices = @transform_12, window_bounds = array<i64: 76, 8>}, {pipeline_mode = #tpu.pipeline_mode<synchronous>, transform_indices = @transform_13, window_bounds = array<i64: 76, 1>}, {pipeline_mode = #tpu.pipeline_mode<synchronous>, transform_indices = @transform_14, window_bounds = array<i64: 876, 200>}, {pipeline_mode = #tpu.pipeline_mode<synchronous>, transform_indices = @transform_15, window_bounds = array<i64: 40, 8>}, {pipeline_mode = #tpu.pipeline_mode<synchronous>, transform_indices = @transform_16, window_bounds = array<i64: 8, 40>}, {transform_indices = @transform_17, window_bounds = array<i64: 1, 1, 19, 200>}]} {
    %c0 = arith.constant 0 : index
    %c0_0 = arith.constant 0 : index
    %c0_1 = arith.constant 0 : index
    %c0_2 = arith.constant 0 : index
    %0 = vector.load %arg1[%c0, %c0_0, %c0_1, %c0_2] : memref<1x1x19x200xf32, #tpu.memory_space<vmem>>, vector<1x1x19x200xf32>
    %1 = vector.shape_cast %0 : vector<1x1x19x200xf32> to vector<19x200xf32>
    %c0_3 = arith.constant 0 : index
    %c0_4 = arith.constant 0 : index
    %2 = vector.load %arg16[%c0_3, %c0_4] : memref<40x8xf32, #tpu.memory_space<vmem>>, vector<40x8xf32>
    %c0_5 = arith.constant 0 : index
    %c0_6 = arith.constant 0 : index
    %3 = vector.load %arg17[%c0_5, %c0_6] : memref<8x40xf32, #tpu.memory_space<vmem>>, vector<8x40xf32>
    %c0_7 = arith.constant 0 : index
    %c0_8 = arith.constant 0 : index
    %4 = vector.load %arg3[%c0_7, %c0_8] : memref<8x19xf32, #tpu.memory_space<vmem>>, vector<8x19xf32>
    %cst = arith.constant dense<0.000000e+00> : vector<8x200xf32>
    %5 = tpu.matmul %4, %1, %cst {dimension_numbers = #tpu.dot_dimension_numbers<[1], [0], [0], [1], [0, 0, 1, 1], [], []>} : vector<8x19xf32>, vector<19x200xf32>, vector<8x200xf32> -> vector<8x200xf32>
    %cst_9 = arith.constant 0.000000e+00 : f32
    %6 = vector.broadcast %cst_9 : f32 to vector<8x9xf32>
    %c0_10 = arith.constant 0 : index
    %c0_11 = arith.constant 0 : index
    %7 = vector.load %arg19[%c0_10, %c0_11] : memref<8x219xf32, #tpu.memory_space<vmem>>, vector<8x9xf32>
    tpu.vector_store %arg19[%c0_10, %c0_11], %6 {strides = array<i32>} : memref<8x219xf32, #tpu.memory_space<vmem>>, vector<8x9xf32>,
    %cst_12 = arith.constant 0.000000e+00 : f32
    %8 = vector.broadcast %cst_12 : f32 to vector<8x10xf32>
    %c0_13 = arith.constant 0 : index
    %c209 = arith.constant 209 : index
    %9 = vector.load %arg19[%c0_13, %c209] : memref<8x219xf32, #tpu.memory_space<vmem>>, vector<8x10xf32>
    tpu.vector_store %arg19[%c0_13, %c209], %8 {strides = array<i32>} : memref<8x219xf32, #tpu.memory_space<vmem>>, vector<8x10xf32>,
    %c0_14 = arith.constant 0 : index
    %c9 = arith.constant 9 : index
    %10 = vector.load %arg19[%c0_14, %c9] : memref<8x219xf32, #tpu.memory_space<vmem>>, vector<8x200xf32>
    tpu.vector_store %arg19[%c0_14, %c9], %5 {strides = array<i32>} : memref<8x219xf32, #tpu.memory_space<vmem>>, vector<8x200xf32>,
    %c0_15 = arith.constant 0 : index
    %c0_16 = arith.constant 0 : index
    %11 = vector.load %arg19[%c0_15, %c0_16] : memref<8x219xf32, #tpu.memory_space<vmem>>, vector<8x219xf32>
    %cst_17 = arith.constant 0.000000e+00 : f32
    %12 = vector.broadcast %cst_17 : f32 to vector<8x200xf32>
    %c0_18 = arith.constant 0 : index
    %c0_19 = arith.constant 0 : index
    %c0_20 = arith.constant 0 : index
    %13 = vector.load %arg6[%c0_18, %c0_19, %c0_20] : memref<4x8x1xf32, #tpu.memory_space<vmem>>, vector<1x8x1xf32>
    %14 = vector.shape_cast %13 : vector<1x8x1xf32> to vector<8x1xf32>
    %c0_21 = arith.constant 0 : index
    %c0_22 = arith.constant 0 : index
    %c0_23 = arith.constant 0 : index
    %15 = vector.load %arg5[%c0_21, %c0_22, %c0_23] : memref<4x219x200xf32, #tpu.memory_space<vmem>>, vector<1x219x200xf32>
    %16 = vector.shape_cast %15 : vector<1x219x200xf32> to vector<219x200xf32>
    %cst_24 = arith.constant dense<0.000000e+00> : vector<8x200xf32>
    %17 = tpu.matmul %11, %16, %cst_24 {dimension_numbers = #tpu.dot_dimension_numbers<[1], [0], [0], [1], [0, 0, 1, 1], [], []>} : vector<8x219xf32>, vector<219x200xf32>, vector<8x200xf32> -> vector<8x200xf32>
    %18 = vector.broadcast %14 : vector<8x1xf32> to vector<8x200xf32>
    %19 = arith.mulf %18, %17 : vector<8x200xf32>
    %20 = arith.addf %12, %19 : vector<8x200xf32>
    %c1 = arith.constant 1 : index
    %c0_25 = arith.constant 0 : index
    %c0_26 = arith.constant 0 : index
    %21 = vector.load %arg6[%c1, %c0_25, %c0_26] : memref<4x8x1xf32, #tpu.memory_space<vmem>>, vector<1x8x1xf32>
    %22 = vector.shape_cast %21 : vector<1x8x1xf32> to vector<8x1xf32>
    %c1_27 = arith.constant 1 : index
    %c0_28 = arith.constant 0 : index
    %c0_29 = arith.constant 0 : index
    %23 = vector.load %arg5[%c1_27, %c0_28, %c0_29] : memref<4x219x200xf32, #tpu.memory_space<vmem>>, vector<1x219x200xf32>
    %24 = vector.shape_cast %23 : vector<1x219x200xf32> to vector<219x200xf32>
    %cst_30 = arith.constant dense<0.000000e+00> : vector<8x200xf32>
    %25 = tpu.matmul %11, %24, %cst_30 {dimension_numbers = #tpu.dot_dimension_numbers<[1], [0], [0], [1], [0, 0, 1, 1], [], []>} : vector<8x219xf32>, vector<219x200xf32>, vector<8x200xf32> -> vector<8x200xf32>
    %26 = vector.broadcast %22 : vector<8x1xf32> to vector<8x200xf32>
    %27 = arith.mulf %26, %25 : vector<8x200xf32>
    %28 = arith.addf %20, %27 : vector<8x200xf32>
    %c2 = arith.constant 2 : index
    %c0_31 = arith.constant 0 : index
    %c0_32 = arith.constant 0 : index
    %29 = vector.load %arg6[%c2, %c0_31, %c0_32] : memref<4x8x1xf32, #tpu.memory_space<vmem>>, vector<1x8x1xf32>
    %30 = vector.shape_cast %29 : vector<1x8x1xf32> to vector<8x1xf32>
    %c2_33 = arith.constant 2 : index
    %c0_34 = arith.constant 0 : index
    %c0_35 = arith.constant 0 : index
    %31 = vector.load %arg5[%c2_33, %c0_34, %c0_35] : memref<4x219x200xf32, #tpu.memory_space<vmem>>, vector<1x219x200xf32>
    %32 = vector.shape_cast %31 : vector<1x219x200xf32> to vector<219x200xf32>
    %cst_36 = arith.constant dense<0.000000e+00> : vector<8x200xf32>
    %33 = tpu.matmul %11, %32, %cst_36 {dimension_numbers = #tpu.dot_dimension_numbers<[1], [0], [0], [1], [0, 0, 1, 1], [], []>} : vector<8x219xf32>, vector<219x200xf32>, vector<8x200xf32> -> vector<8x200xf32>
    %34 = vector.broadcast %30 : vector<8x1xf32> to vector<8x200xf32>
    %35 = arith.mulf %34, %33 : vector<8x200xf32>
    %36 = arith.addf %28, %35 : vector<8x200xf32>
    %c3 = arith.constant 3 : index
    %c0_37 = arith.constant 0 : index
    %c0_38 = arith.constant 0 : index
    %37 = vector.load %arg6[%c3, %c0_37, %c0_38] : memref<4x8x1xf32, #tpu.memory_space<vmem>>, vector<1x8x1xf32>
    %38 = vector.shape_cast %37 : vector<1x8x1xf32> to vector<8x1xf32>
    %c3_39 = arith.constant 3 : index
    %c0_40 = arith.constant 0 : index
    %c0_41 = arith.constant 0 : index
    %39 = vector.load %arg5[%c3_39, %c0_40, %c0_41] : memref<4x219x200xf32, #tpu.memory_space<vmem>>, vector<1x219x200xf32>
    %40 = vector.shape_cast %39 : vector<1x219x200xf32> to vector<219x200xf32>
    %cst_42 = arith.constant dense<0.000000e+00> : vector<8x200xf32>
    %41 = tpu.matmul %11, %40, %cst_42 {dimension_numbers = #tpu.dot_dimension_numbers<[1], [0], [0], [1], [0, 0, 1, 1], [], []>} : vector<8x219xf32>, vector<219x200xf32>, vector<8x200xf32> -> vector<8x200xf32>
    %42 = vector.broadcast %38 : vector<8x1xf32> to vector<8x200xf32>
    %43 = arith.mulf %42, %41 : vector<8x200xf32>
    %44 = arith.addf %36, %43 : vector<8x200xf32>
    %c0_43 = arith.constant 0 : index
    %c0_44 = arith.constant 0 : index
    %45 = vector.load %arg4[%c0_43, %c0_44] : memref<8x1xf32, #tpu.memory_space<vmem>>, vector<8x1xf32>
    %46 = vector.broadcast %45 : vector<8x1xf32> to vector<8x200xf32>
    %47 = arith.addf %44, %46 : vector<8x200xf32>
    %cst_45 = arith.constant 0.000000e+00 : f32
    %48 = vector.broadcast %cst_45 : f32 to vector<8x200xf32>
    %49 = arith.cmpf ogt, %47, %48 : vector<8x200xf32>
    %cst_46 = arith.constant 0.000000e+00 : f32
    %50 = vector.broadcast %cst_46 : f32 to vector<8x200xf32>
    %51 = arith.minimumf %47, %50 : vector<8x200xf32>
    %52 = math.exp %51 : vector<8x200xf32>
    %cst_47 = arith.constant 1.000000e+00 : f32
    %53 = vector.broadcast %cst_47 : f32 to vector<8x200xf32>
    %54 = arith.subf %52, %53 : vector<8x200xf32>
    %55 = arith.select %49, %47, %54 : vector<8x200xi1>, vector<8x200xf32>
    %56 = vector.extract_strided_slice %55 {offsets = [0, 0], sizes = [8, 40], strides = [1, 1]} : vector<8x200xf32> to vector<8x40xf32>
    %cst_48 = arith.constant dense<0.000000e+00> : vector<8x8xf32>
    %57 = tpu.matmul %56, %2, %cst_48 {dimension_numbers = #tpu.dot_dimension_numbers<[1], [0], [0], [1], [0, 0, 1, 1], [], []>} : vector<8x40xf32>, vector<40x8xf32>, vector<8x8xf32> -> vector<8x8xf32>
    %58 = vector.extract_strided_slice %55 {offsets = [0, 40], sizes = [8, 40], strides = [1, 1]} : vector<8x200xf32> to vector<8x40xf32>
    %cst_49 = arith.constant dense<0.000000e+00> : vector<8x8xf32>
    %59 = tpu.matmul %58, %2, %cst_49 {dimension_numbers = #tpu.dot_dimension_numbers<[1], [0], [0], [1], [0, 0, 1, 1], [], []>} : vector<8x40xf32>, vector<40x8xf32>, vector<8x8xf32> -> vector<8x8xf32>
    %60 = vector.extract_strided_slice %55 {offsets = [0, 80], sizes = [8, 40], strides = [1, 1]} : vector<8x200xf32> to vector<8x40xf32>
    %cst_50 = arith.constant dense<0.000000e+00> : vector<8x8xf32>
    %61 = tpu.matmul %60, %2, %cst_50 {dimension_numbers = #tpu.dot_dimension_numbers<[1], [0], [0], [1], [0, 0, 1, 1], [], []>} : vector<8x40xf32>, vector<40x8xf32>, vector<8x8xf32> -> vector<8x8xf32>
    %62 = vector.extract_strided_slice %55 {offsets = [0, 120], sizes = [8, 40], strides = [1, 1]} : vector<8x200xf32> to vector<8x40xf32>
    %cst_51 = arith.constant dense<0.000000e+00> : vector<8x8xf32>
    %63 = tpu.matmul %62, %2, %cst_51 {dimension_numbers = #tpu.dot_dimension_numbers<[1], [0], [0], [1], [0, 0, 1, 1], [], []>} : vector<8x40xf32>, vector<40x8xf32>, vector<8x8xf32> -> vector<8x8xf32>
    %64 = vector.extract_strided_slice %55 {offsets = [0, 160], sizes = [8, 40], strides = [1, 1]} : vector<8x200xf32> to vector<8x40xf32>
    %cst_52 = arith.constant dense<0.000000e+00> : vector<8x8xf32>
    %65 = tpu.matmul %64, %2, %cst_52 {dimension_numbers = #tpu.dot_dimension_numbers<[1], [0], [0], [1], [0, 0, 1, 1], [], []>} : vector<8x40xf32>, vector<40x8xf32>, vector<8x8xf32> -> vector<8x8xf32>
    %66 = tpu.concatenate %57, %59, %61, %63, %65 in 1 : vector<8x8xf32>, vector<8x8xf32>, vector<8x8xf32>, vector<8x8xf32>, vector<8x8xf32> -> vector<8x40xf32>
    %cst_53 = arith.constant 0.000000e+00 : f32
    %67 = vector.broadcast %cst_53 : f32 to vector<8x7xf32>
    %c0_54 = arith.constant 0 : index
    %c0_55 = arith.constant 0 : index
    %68 = vector.load %arg20[%c0_54, %c0_55] : memref<8x55xf32, #tpu.memory_space<vmem>>, vector<8x7xf32>
    tpu.vector_store %arg20[%c0_54, %c0_55], %67 {strides = array<i32>} : memref<8x55xf32, #tpu.memory_space<vmem>>, vector<8x7xf32>,
    %cst_56 = arith.constant 0.000000e+00 : f32
    %69 = vector.broadcast %cst_56 : f32 to vector<8x8xf32>
    %c0_57 = arith.constant 0 : index
    %c47 = arith.constant 47 : index
    %70 = vector.load %arg20[%c0_57, %c47] : memref<8x55xf32, #tpu.memory_space<vmem>>, vector<8x8xf32>
    tpu.vector_store %arg20[%c0_57, %c47], %69 {strides = array<i32>} : memref<8x55xf32, #tpu.memory_space<vmem>>, vector<8x8xf32>,
    %c0_58 = arith.constant 0 : index
    %c7 = arith.constant 7 : index
    %71 = vector.load %arg20[%c0_58, %c7] : memref<8x55xf32, #tpu.memory_space<vmem>>, vector<8x40xf32>
    tpu.vector_store %arg20[%c0_58, %c7], %66 {strides = array<i32>} : memref<8x55xf32, #tpu.memory_space<vmem>>, vector<8x40xf32>,
    %c0_59 = arith.constant 0 : index
    %c0_60 = arith.constant 0 : index
    %72 = vector.load %arg20[%c0_59, %c0_60] : memref<8x55xf32, #tpu.memory_space<vmem>>, vector<8x55xf32>
    %cst_61 = arith.constant 0.000000e+00 : f32
    %73 = vector.broadcast %cst_61 : f32 to vector<8x40xf32>
    %cst_62 = arith.constant 0.000000e+00 : f32
    %74 = vector.broadcast %cst_62 : f32 to vector<8x40xf32>
    %c0_63 = arith.constant 0 : index
    %c0_64 = arith.constant 0 : index
    %c0_65 = arith.constant 0 : index
    %75 = vector.load %arg7[%c0_63, %c0_64, %c0_65] : memref<16x8x1xf32, #tpu.memory_space<vmem>>, vector<1x8x1xf32>
    %76 = vector.shape_cast %75 : vector<1x8x1xf32> to vector<8x1xf32>
    %77 = vector.extract_strided_slice %72 {offsets = [0, 0], sizes = [8, 40], strides = [1, 1]} : vector<8x55xf32> to vector<8x40xf32>
    %78 = vector.broadcast %76 : vector<8x1xf32> to vector<8x40xf32>
    %79 = arith.mulf %78, %77 : vector<8x40xf32>
    %80 = arith.addf %73, %79 : vector<8x40xf32>
    %c1_66 = arith.constant 1 : index
    %c0_67 = arith.constant 0 : index
    %c0_68 = arith.constant 0 : index
    %81 = vector.load %arg7[%c1_66, %c0_67, %c0_68] : memref<16x8x1xf32, #tpu.memory_space<vmem>>, vector<1x8x1xf32>
    %82 = vector.shape_cast %81 : vector<1x8x1xf32> to vector<8x1xf32>
    %83 = vector.extract_strided_slice %72 {offsets = [0, 1], sizes = [8, 40], strides = [1, 1]} : vector<8x55xf32> to vector<8x40xf32>
    %84 = vector.broadcast %82 : vector<8x1xf32> to vector<8x40xf32>
    %85 = arith.mulf %84, %83 : vector<8x40xf32>
    %86 = arith.addf %74, %85 : vector<8x40xf32>
    %c2_69 = arith.constant 2 : index
    %c0_70 = arith.constant 0 : index
    %c0_71 = arith.constant 0 : index
    %87 = vector.load %arg7[%c2_69, %c0_70, %c0_71] : memref<16x8x1xf32, #tpu.memory_space<vmem>>, vector<1x8x1xf32>
    %88 = vector.shape_cast %87 : vector<1x8x1xf32> to vector<8x1xf32>
    %89 = vector.extract_strided_slice %72 {offsets = [0, 2], sizes = [8, 40], strides = [1, 1]} : vector<8x55xf32> to vector<8x40xf32>
    %90 = vector.broadcast %88 : vector<8x1xf32> to vector<8x40xf32>
    %91 = arith.mulf %90, %89 : vector<8x40xf32>
    %92 = arith.addf %80, %91 : vector<8x40xf32>
    %c3_72 = arith.constant 3 : index
    %c0_73 = arith.constant 0 : index
    %c0_74 = arith.constant 0 : index
    %93 = vector.load %arg7[%c3_72, %c0_73, %c0_74] : memref<16x8x1xf32, #tpu.memory_space<vmem>>, vector<1x8x1xf32>
    %94 = vector.shape_cast %93 : vector<1x8x1xf32> to vector<8x1xf32>
    %95 = vector.extract_strided_slice %72 {offsets = [0, 3], sizes = [8, 40], strides = [1, 1]} : vector<8x55xf32> to vector<8x40xf32>
    %96 = vector.broadcast %94 : vector<8x1xf32> to vector<8x40xf32>
    %97 = arith.mulf %96, %95 : vector<8x40xf32>
    %98 = arith.addf %86, %97 : vector<8x40xf32>
    %c4 = arith.constant 4 : index
    %c0_75 = arith.constant 0 : index
    %c0_76 = arith.constant 0 : index
    %99 = vector.load %arg7[%c4, %c0_75, %c0_76] : memref<16x8x1xf32, #tpu.memory_space<vmem>>, vector<1x8x1xf32>
    %100 = vector.shape_cast %99 : vector<1x8x1xf32> to vector<8x1xf32>
    %101 = vector.extract_strided_slice %72 {offsets = [0, 4], sizes = [8, 40], strides = [1, 1]} : vector<8x55xf32> to vector<8x40xf32>
    %102 = vector.broadcast %100 : vector<8x1xf32> to vector<8x40xf32>
    %103 = arith.mulf %102, %101 : vector<8x40xf32>
    %104 = arith.addf %92, %103 : vector<8x40xf32>
    %c5 = arith.constant 5 : index
    %c0_77 = arith.constant 0 : index
    %c0_78 = arith.constant 0 : index
    %105 = vector.load %arg7[%c5, %c0_77, %c0_78] : memref<16x8x1xf32, #tpu.memory_space<vmem>>, vector<1x8x1xf32>
    %106 = vector.shape_cast %105 : vector<1x8x1xf32> to vector<8x1xf32>
    %107 = vector.extract_strided_slice %72 {offsets = [0, 5], sizes = [8, 40], strides = [1, 1]} : vector<8x55xf32> to vector<8x40xf32>
    %108 = vector.broadcast %106 : vector<8x1xf32> to vector<8x40xf32>
    %109 = arith.mulf %108, %107 : vector<8x40xf32>
    %110 = arith.addf %98, %109 : vector<8x40xf32>
    %c6 = arith.constant 6 : index
    %c0_79 = arith.constant 0 : index
    %c0_80 = arith.constant 0 : index
    %111 = vector.load %arg7[%c6, %c0_79, %c0_80] : memref<16x8x1xf32, #tpu.memory_space<vmem>>, vector<1x8x1xf32>
    %112 = vector.shape_cast %111 : vector<1x8x1xf32> to vector<8x1xf32>
    %113 = vector.extract_strided_slice %72 {offsets = [0, 6], sizes = [8, 40], strides = [1, 1]} : vector<8x55xf32> to vector<8x40xf32>
    %114 = vector.broadcast %112 : vector<8x1xf32> to vector<8x40xf32>
    %115 = arith.mulf %114, %113 : vector<8x40xf32>
    %116 = arith.addf %104, %115 : vector<8x40xf32>
    %c7_81 = arith.constant 7 : index
    %c0_82 = arith.constant 0 : index
    %c0_83 = arith.constant 0 : index
    %117 = vector.load %arg7[%c7_81, %c0_82, %c0_83] : memref<16x8x1xf32, #tpu.memory_space<vmem>>, vector<1x8x1xf32>
    %118 = vector.shape_cast %117 : vector<1x8x1xf32> to vector<8x1xf32>
    %119 = vector.extract_strided_slice %72 {offsets = [0, 7], sizes = [8, 40], strides = [1, 1]} : vector<8x55xf32> to vector<8x40xf32>
    %120 = vector.broadcast %118 : vector<8x1xf32> to vector<8x40xf32>
    %121 = arith.mulf %120, %119 : vector<8x40xf32>
    %122 = arith.addf %110, %121 : vector<8x40xf32>
    %c8 = arith.constant 8 : index
    %c0_84 = arith.constant 0 : index
    %c0_85 = arith.constant 0 : index
    %123 = vector.load %arg7[%c8, %c0_84, %c0_85] : memref<16x8x1xf32, #tpu.memory_space<vmem>>, vector<1x8x1xf32>
    %124 = vector.shape_cast %123 : vector<1x8x1xf32> to vector<8x1xf32>
    %125 = vector.extract_strided_slice %72 {offsets = [0, 8], sizes = [8, 40], strides = [1, 1]} : vector<8x55xf32> to vector<8x40xf32>
    %126 = vector.broadcast %124 : vector<8x1xf32> to vector<8x40xf32>
    %127 = arith.mulf %126, %125 : vector<8x40xf32>
    %128 = arith.addf %116, %127 : vector<8x40xf32>
    %c9_86 = arith.constant 9 : index
    %c0_87 = arith.constant 0 : index
    %c0_88 = arith.constant 0 : index
    %129 = vector.load %arg7[%c9_86, %c0_87, %c0_88] : memref<16x8x1xf32, #tpu.memory_space<vmem>>, vector<1x8x1xf32>
    %130 = vector.shape_cast %129 : vector<1x8x1xf32> to vector<8x1xf32>
    %131 = vector.extract_strided_slice %72 {offsets = [0, 9], sizes = [8, 40], strides = [1, 1]} : vector<8x55xf32> to vector<8x40xf32>
    %132 = vector.broadcast %130 : vector<8x1xf32> to vector<8x40xf32>
    %133 = arith.mulf %132, %131 : vector<8x40xf32>
    %134 = arith.addf %122, %133 : vector<8x40xf32>
    %c10 = arith.constant 10 : index
    %c0_89 = arith.constant 0 : index
    %c0_90 = arith.constant 0 : index
    %135 = vector.load %arg7[%c10, %c0_89, %c0_90] : memref<16x8x1xf32, #tpu.memory_space<vmem>>, vector<1x8x1xf32>
    %136 = vector.shape_cast %135 : vector<1x8x1xf32> to vector<8x1xf32>
    %137 = vector.extract_strided_slice %72 {offsets = [0, 10], sizes = [8, 40], strides = [1, 1]} : vector<8x55xf32> to vector<8x40xf32>
    %138 = vector.broadcast %136 : vector<8x1xf32> to vector<8x40xf32>
    %139 = arith.mulf %138, %137 : vector<8x40xf32>
    %140 = arith.addf %128, %139 : vector<8x40xf32>
    %c11 = arith.constant 11 : index
    %c0_91 = arith.constant 0 : index
    %c0_92 = arith.constant 0 : index
    %141 = vector.load %arg7[%c11, %c0_91, %c0_92] : memref<16x8x1xf32, #tpu.memory_space<vmem>>, vector<1x8x1xf32>
    %142 = vector.shape_cast %141 : vector<1x8x1xf32> to vector<8x1xf32>
    %143 = vector.extract_strided_slice %72 {offsets = [0, 11], sizes = [8, 40], strides = [1, 1]} : vector<8x55xf32> to vector<8x40xf32>
    %144 = vector.broadcast %142 : vector<8x1xf32> to vector<8x40xf32>
    %145 = arith.mulf %144, %143 : vector<8x40xf32>
    %146 = arith.addf %134, %145 : vector<8x40xf32>
    %c12 = arith.constant 12 : index
    %c0_93 = arith.constant 0 : index
    %c0_94 = arith.constant 0 : index
    %147 = vector.load %arg7[%c12, %c0_93, %c0_94] : memref<16x8x1xf32, #tpu.memory_space<vmem>>, vector<1x8x1xf32>
    %148 = vector.shape_cast %147 : vector<1x8x1xf32> to vector<8x1xf32>
    %149 = vector.extract_strided_slice %72 {offsets = [0, 12], sizes = [8, 40], strides = [1, 1]} : vector<8x55xf32> to vector<8x40xf32>
    %150 = vector.broadcast %148 : vector<8x1xf32> to vector<8x40xf32>
    %151 = arith.mulf %150, %149 : vector<8x40xf32>
    %152 = arith.addf %140, %151 : vector<8x40xf32>
    %c13 = arith.constant 13 : index
    %c0_95 = arith.constant 0 : index
    %c0_96 = arith.constant 0 : index
    %153 = vector.load %arg7[%c13, %c0_95, %c0_96] : memref<16x8x1xf32, #tpu.memory_space<vmem>>, vector<1x8x1xf32>
    %154 = vector.shape_cast %153 : vector<1x8x1xf32> to vector<8x1xf32>
    %155 = vector.extract_strided_slice %72 {offsets = [0, 13], sizes = [8, 40], strides = [1, 1]} : vector<8x55xf32> to vector<8x40xf32>
    %156 = vector.broadcast %154 : vector<8x1xf32> to vector<8x40xf32>
    %157 = arith.mulf %156, %155 : vector<8x40xf32>
    %158 = arith.addf %146, %157 : vector<8x40xf32>
    %c14 = arith.constant 14 : index
    %c0_97 = arith.constant 0 : index
    %c0_98 = arith.constant 0 : index
    %159 = vector.load %arg7[%c14, %c0_97, %c0_98] : memref<16x8x1xf32, #tpu.memory_space<vmem>>, vector<1x8x1xf32>
    %160 = vector.shape_cast %159 : vector<1x8x1xf32> to vector<8x1xf32>
    %161 = vector.extract_strided_slice %72 {offsets = [0, 14], sizes = [8, 40], strides = [1, 1]} : vector<8x55xf32> to vector<8x40xf32>
    %162 = vector.broadcast %160 : vector<8x1xf32> to vector<8x40xf32>
    %163 = arith.mulf %162, %161 : vector<8x40xf32>
    %164 = arith.addf %152, %163 : vector<8x40xf32>
    %c15 = arith.constant 15 : index
    %c0_99 = arith.constant 0 : index
    %c0_100 = arith.constant 0 : index
    %165 = vector.load %arg7[%c15, %c0_99, %c0_100] : memref<16x8x1xf32, #tpu.memory_space<vmem>>, vector<1x8x1xf32>
    %166 = vector.shape_cast %165 : vector<1x8x1xf32> to vector<8x1xf32>
    %167 = vector.extract_strided_slice %72 {offsets = [0, 15], sizes = [8, 40], strides = [1, 1]} : vector<8x55xf32> to vector<8x40xf32>
    %168 = vector.broadcast %166 : vector<8x1xf32> to vector<8x40xf32>
    %169 = arith.mulf %168, %167 : vector<8x40xf32>
    %170 = arith.addf %158, %169 : vector<8x40xf32>
    %c0_101 = arith.constant 0 : index
    %c0_102 = arith.constant 0 : index
    %171 = vector.load %arg8[%c0_101, %c0_102] : memref<8x8xf32, #tpu.memory_space<vmem>>, vector<8x8xf32>
    %172 = arith.addf %164, %170 : vector<8x40xf32>
    %cst_103 = arith.constant dense<0.000000e+00> : vector<8x40xf32>
    %173 = tpu.matmul %171, %172, %cst_103 {dimension_numbers = #tpu.dot_dimension_numbers<[1], [0], [0], [1], [0, 0, 1, 1], [], []>} : vector<8x8xf32>, vector<8x40xf32>, vector<8x40xf32> -> vector<8x40xf32>
    %c0_104 = arith.constant 0 : index
    %c0_105 = arith.constant 0 : index
    %174 = vector.load %arg9[%c0_104, %c0_105] : memref<8x1xf32, #tpu.memory_space<vmem>>, vector<8x1xf32>
    %175 = vector.broadcast %174 : vector<8x1xf32> to vector<8x40xf32>
    %176 = arith.addf %173, %175 : vector<8x40xf32>
    %cst_106 = arith.constant 0.000000e+00 : f32
    %177 = vector.broadcast %cst_106 : f32 to vector<8x40xf32>
    %178 = arith.cmpf ogt, %176, %177 : vector<8x40xf32>
    %cst_107 = arith.constant 0.000000e+00 : f32
    %179 = vector.broadcast %cst_107 : f32 to vector<8x40xf32>
    %180 = arith.minimumf %176, %179 : vector<8x40xf32>
    %181 = math.exp %180 : vector<8x40xf32>
    %cst_108 = arith.constant 1.000000e+00 : f32
    %182 = vector.broadcast %cst_108 : f32 to vector<8x40xf32>
    %183 = arith.subf %181, %182 : vector<8x40xf32>
    %184 = arith.select %178, %176, %183 : vector<8x40xi1>, vector<8x40xf32>
    %cst_109 = arith.constant dense<0.000000e+00> : vector<8x8xf32>
    %185 = tpu.matmul %184, %2, %cst_109 {dimension_numbers = #tpu.dot_dimension_numbers<[1], [0], [0], [1], [0, 0, 1, 1], [], []>} : vector<8x40xf32>, vector<40x8xf32>, vector<8x8xf32> -> vector<8x8xf32>
    %cst_110 = arith.constant dense<0.000000e+00> : vector<8x40xf32>
    %186 = tpu.matmul %185, %3, %cst_110 {dimension_numbers = #tpu.dot_dimension_numbers<[1], [0], [0], [1], [0, 0, 1, 1], [], []>} : vector<8x8xf32>, vector<8x40xf32>, vector<8x40xf32> -> vector<8x40xf32>
    %cst_111 = arith.constant 0.000000e+00 : f32
    %187 = vector.broadcast %cst_111 : f32 to vector<8x15xf32>
    %c0_112 = arith.constant 0 : index
    %c0_113 = arith.constant 0 : index
    %188 = vector.load %arg21[%c0_112, %c0_113] : memref<8x55xf32, #tpu.memory_space<vmem>>, vector<8x15xf32>
    tpu.vector_store %arg21[%c0_112, %c0_113], %187 {strides = array<i32>} : memref<8x55xf32, #tpu.memory_space<vmem>>, vector<8x15xf32>,
    %c0_114 = arith.constant 0 : index
    %c15_115 = arith.constant 15 : index
    %189 = vector.load %arg21[%c0_114, %c15_115] : memref<8x55xf32, #tpu.memory_space<vmem>>, vector<8x40xf32>
    tpu.vector_store %arg21[%c0_114, %c15_115], %186 {strides = array<i32>} : memref<8x55xf32, #tpu.memory_space<vmem>>, vector<8x40xf32>,
    %c0_116 = arith.constant 0 : index
    %c0_117 = arith.constant 0 : index
    %190 = vector.load %arg21[%c0_116, %c0_117] : memref<8x55xf32, #tpu.memory_space<vmem>>, vector<8x55xf32>
    %cst_118 = arith.constant 0.000000e+00 : f32
    %191 = vector.broadcast %cst_118 : f32 to vector<8x40xf32>
    %cst_119 = arith.constant 0.000000e+00 : f32
    %192 = vector.broadcast %cst_119 : f32 to vector<8x40xf32>
    %c0_120 = arith.constant 0 : index
    %c0_121 = arith.constant 0 : index
    %c0_122 = arith.constant 0 : index
    %193 = vector.load %arg10[%c0_120, %c0_121, %c0_122] : memref<16x8x1xf32, #tpu.memory_space<vmem>>, vector<1x8x1xf32>
    %194 = vector.shape_cast %193 : vector<1x8x1xf32> to vector<8x1xf32>
    %195 = vector.extract_strided_slice %190 {offsets = [0, 0], sizes = [8, 40], strides = [1, 1]} : vector<8x55xf32> to vector<8x40xf32>
    %196 = vector.broadcast %194 : vector<8x1xf32> to vector<8x40xf32>
    %197 = arith.mulf %196, %195 : vector<8x40xf32>
    %198 = arith.addf %191, %197 : vector<8x40xf32>
    %c1_123 = arith.constant 1 : index
    %c0_124 = arith.constant 0 : index
    %c0_125 = arith.constant 0 : index
    %199 = vector.load %arg10[%c1_123, %c0_124, %c0_125] : memref<16x8x1xf32, #tpu.memory_space<vmem>>, vector<1x8x1xf32>
    %200 = vector.shape_cast %199 : vector<1x8x1xf32> to vector<8x1xf32>
    %201 = vector.extract_strided_slice %190 {offsets = [0, 1], sizes = [8, 40], strides = [1, 1]} : vector<8x55xf32> to vector<8x40xf32>
    %202 = vector.broadcast %200 : vector<8x1xf32> to vector<8x40xf32>
    %203 = arith.mulf %202, %201 : vector<8x40xf32>
    %204 = arith.addf %192, %203 : vector<8x40xf32>
    %c2_126 = arith.constant 2 : index
    %c0_127 = arith.constant 0 : index
    %c0_128 = arith.constant 0 : index
    %205 = vector.load %arg10[%c2_126, %c0_127, %c0_128] : memref<16x8x1xf32, #tpu.memory_space<vmem>>, vector<1x8x1xf32>
    %206 = vector.shape_cast %205 : vector<1x8x1xf32> to vector<8x1xf32>
    %207 = vector.extract_strided_slice %190 {offsets = [0, 2], sizes = [8, 40], strides = [1, 1]} : vector<8x55xf32> to vector<8x40xf32>
    %208 = vector.broadcast %206 : vector<8x1xf32> to vector<8x40xf32>
    %209 = arith.mulf %208, %207 : vector<8x40xf32>
    %210 = arith.addf %198, %209 : vector<8x40xf32>
    %c3_129 = arith.constant 3 : index
    %c0_130 = arith.constant 0 : index
    %c0_131 = arith.constant 0 : index
    %211 = vector.load %arg10[%c3_129, %c0_130, %c0_131] : memref<16x8x1xf32, #tpu.memory_space<vmem>>, vector<1x8x1xf32>
    %212 = vector.shape_cast %211 : vector<1x8x1xf32> to vector<8x1xf32>
    %213 = vector.extract_strided_slice %190 {offsets = [0, 3], sizes = [8, 40], strides = [1, 1]} : vector<8x55xf32> to vector<8x40xf32>
    %214 = vector.broadcast %212 : vector<8x1xf32> to vector<8x40xf32>
    %215 = arith.mulf %214, %213 : vector<8x40xf32>
    %216 = arith.addf %204, %215 : vector<8x40xf32>
    %c4_132 = arith.constant 4 : index
    %c0_133 = arith.constant 0 : index
    %c0_134 = arith.constant 0 : index
    %217 = vector.load %arg10[%c4_132, %c0_133, %c0_134] : memref<16x8x1xf32, #tpu.memory_space<vmem>>, vector<1x8x1xf32>
    %218 = vector.shape_cast %217 : vector<1x8x1xf32> to vector<8x1xf32>
    %219 = vector.extract_strided_slice %190 {offsets = [0, 4], sizes = [8, 40], strides = [1, 1]} : vector<8x55xf32> to vector<8x40xf32>
    %220 = vector.broadcast %218 : vector<8x1xf32> to vector<8x40xf32>
    %221 = arith.mulf %220, %219 : vector<8x40xf32>
    %222 = arith.addf %210, %221 : vector<8x40xf32>
    %c5_135 = arith.constant 5 : index
    %c0_136 = arith.constant 0 : index
    %c0_137 = arith.constant 0 : index
    %223 = vector.load %arg10[%c5_135, %c0_136, %c0_137] : memref<16x8x1xf32, #tpu.memory_space<vmem>>, vector<1x8x1xf32>
    %224 = vector.shape_cast %223 : vector<1x8x1xf32> to vector<8x1xf32>
    %225 = vector.extract_strided_slice %190 {offsets = [0, 5], sizes = [8, 40], strides = [1, 1]} : vector<8x55xf32> to vector<8x40xf32>
    %226 = vector.broadcast %224 : vector<8x1xf32> to vector<8x40xf32>
    %227 = arith.mulf %226, %225 : vector<8x40xf32>
    %228 = arith.addf %216, %227 : vector<8x40xf32>
    %c6_138 = arith.constant 6 : index
    %c0_139 = arith.constant 0 : index
    %c0_140 = arith.constant 0 : index
    %229 = vector.load %arg10[%c6_138, %c0_139, %c0_140] : memref<16x8x1xf32, #tpu.memory_space<vmem>>, vector<1x8x1xf32>
    %230 = vector.shape_cast %229 : vector<1x8x1xf32> to vector<8x1xf32>
    %231 = vector.extract_strided_slice %190 {offsets = [0, 6], sizes = [8, 40], strides = [1, 1]} : vector<8x55xf32> to vector<8x40xf32>
    %232 = vector.broadcast %230 : vector<8x1xf32> to vector<8x40xf32>
    %233 = arith.mulf %232, %231 : vector<8x40xf32>
    %234 = arith.addf %222, %233 : vector<8x40xf32>
    %c7_141 = arith.constant 7 : index
    %c0_142 = arith.constant 0 : index
    %c0_143 = arith.constant 0 : index
    %235 = vector.load %arg10[%c7_141, %c0_142, %c0_143] : memref<16x8x1xf32, #tpu.memory_space<vmem>>, vector<1x8x1xf32>
    %236 = vector.shape_cast %235 : vector<1x8x1xf32> to vector<8x1xf32>
    %237 = vector.extract_strided_slice %190 {offsets = [0, 7], sizes = [8, 40], strides = [1, 1]} : vector<8x55xf32> to vector<8x40xf32>
    %238 = vector.broadcast %236 : vector<8x1xf32> to vector<8x40xf32>
    %239 = arith.mulf %238, %237 : vector<8x40xf32>
    %240 = arith.addf %228, %239 : vector<8x40xf32>
    %c8_144 = arith.constant 8 : index
    %c0_145 = arith.constant 0 : index
    %c0_146 = arith.constant 0 : index
    %241 = vector.load %arg10[%c8_144, %c0_145, %c0_146] : memref<16x8x1xf32, #tpu.memory_space<vmem>>, vector<1x8x1xf32>
    %242 = vector.shape_cast %241 : vector<1x8x1xf32> to vector<8x1xf32>
    %243 = vector.extract_strided_slice %190 {offsets = [0, 8], sizes = [8, 40], strides = [1, 1]} : vector<8x55xf32> to vector<8x40xf32>
    %244 = vector.broadcast %242 : vector<8x1xf32> to vector<8x40xf32>
    %245 = arith.mulf %244, %243 : vector<8x40xf32>
    %246 = arith.addf %234, %245 : vector<8x40xf32>
    %c9_147 = arith.constant 9 : index
    %c0_148 = arith.constant 0 : index
    %c0_149 = arith.constant 0 : index
    %247 = vector.load %arg10[%c9_147, %c0_148, %c0_149] : memref<16x8x1xf32, #tpu.memory_space<vmem>>, vector<1x8x1xf32>
    %248 = vector.shape_cast %247 : vector<1x8x1xf32> to vector<8x1xf32>
    %249 = vector.extract_strided_slice %190 {offsets = [0, 9], sizes = [8, 40], strides = [1, 1]} : vector<8x55xf32> to vector<8x40xf32>
    %250 = vector.broadcast %248 : vector<8x1xf32> to vector<8x40xf32>
    %251 = arith.mulf %250, %249 : vector<8x40xf32>
    %252 = arith.addf %240, %251 : vector<8x40xf32>
    %c10_150 = arith.constant 10 : index
    %c0_151 = arith.constant 0 : index
    %c0_152 = arith.constant 0 : index
    %253 = vector.load %arg10[%c10_150, %c0_151, %c0_152] : memref<16x8x1xf32, #tpu.memory_space<vmem>>, vector<1x8x1xf32>
    %254 = vector.shape_cast %253 : vector<1x8x1xf32> to vector<8x1xf32>
    %255 = vector.extract_strided_slice %190 {offsets = [0, 10], sizes = [8, 40], strides = [1, 1]} : vector<8x55xf32> to vector<8x40xf32>
    %256 = vector.broadcast %254 : vector<8x1xf32> to vector<8x40xf32>
    %257 = arith.mulf %256, %255 : vector<8x40xf32>
    %258 = arith.addf %246, %257 : vector<8x40xf32>
    %c11_153 = arith.constant 11 : index
    %c0_154 = arith.constant 0 : index
    %c0_155 = arith.constant 0 : index
    %259 = vector.load %arg10[%c11_153, %c0_154, %c0_155] : memref<16x8x1xf32, #tpu.memory_space<vmem>>, vector<1x8x1xf32>
    %260 = vector.shape_cast %259 : vector<1x8x1xf32> to vector<8x1xf32>
    %261 = vector.extract_strided_slice %190 {offsets = [0, 11], sizes = [8, 40], strides = [1, 1]} : vector<8x55xf32> to vector<8x40xf32>
    %262 = vector.broadcast %260 : vector<8x1xf32> to vector<8x40xf32>
    %263 = arith.mulf %262, %261 : vector<8x40xf32>
    %264 = arith.addf %252, %263 : vector<8x40xf32>
    %c12_156 = arith.constant 12 : index
    %c0_157 = arith.constant 0 : index
    %c0_158 = arith.constant 0 : index
    %265 = vector.load %arg10[%c12_156, %c0_157, %c0_158] : memref<16x8x1xf32, #tpu.memory_space<vmem>>, vector<1x8x1xf32>
    %266 = vector.shape_cast %265 : vector<1x8x1xf32> to vector<8x1xf32>
    %267 = vector.extract_strided_slice %190 {offsets = [0, 12], sizes = [8, 40], strides = [1, 1]} : vector<8x55xf32> to vector<8x40xf32>
    %268 = vector.broadcast %266 : vector<8x1xf32> to vector<8x40xf32>
    %269 = arith.mulf %268, %267 : vector<8x40xf32>
    %270 = arith.addf %258, %269 : vector<8x40xf32>
    %c13_159 = arith.constant 13 : index
    %c0_160 = arith.constant 0 : index
    %c0_161 = arith.constant 0 : index
    %271 = vector.load %arg10[%c13_159, %c0_160, %c0_161] : memref<16x8x1xf32, #tpu.memory_space<vmem>>, vector<1x8x1xf32>
    %272 = vector.shape_cast %271 : vector<1x8x1xf32> to vector<8x1xf32>
    %273 = vector.extract_strided_slice %190 {offsets = [0, 13], sizes = [8, 40], strides = [1, 1]} : vector<8x55xf32> to vector<8x40xf32>
    %274 = vector.broadcast %272 : vector<8x1xf32> to vector<8x40xf32>
    %275 = arith.mulf %274, %273 : vector<8x40xf32>
    %276 = arith.addf %264, %275 : vector<8x40xf32>
    %c14_162 = arith.constant 14 : index
    %c0_163 = arith.constant 0 : index
    %c0_164 = arith.constant 0 : index
    %277 = vector.load %arg10[%c14_162, %c0_163, %c0_164] : memref<16x8x1xf32, #tpu.memory_space<vmem>>, vector<1x8x1xf32>
    %278 = vector.shape_cast %277 : vector<1x8x1xf32> to vector<8x1xf32>
    %279 = vector.extract_strided_slice %190 {offsets = [0, 14], sizes = [8, 40], strides = [1, 1]} : vector<8x55xf32> to vector<8x40xf32>
    %280 = vector.broadcast %278 : vector<8x1xf32> to vector<8x40xf32>
    %281 = arith.mulf %280, %279 : vector<8x40xf32>
    %282 = arith.addf %270, %281 : vector<8x40xf32>
    %c15_165 = arith.constant 15 : index
    %c0_166 = arith.constant 0 : index
    %c0_167 = arith.constant 0 : index
    %283 = vector.load %arg10[%c15_165, %c0_166, %c0_167] : memref<16x8x1xf32, #tpu.memory_space<vmem>>, vector<1x8x1xf32>
    %284 = vector.shape_cast %283 : vector<1x8x1xf32> to vector<8x1xf32>
    %285 = vector.extract_strided_slice %190 {offsets = [0, 15], sizes = [8, 40], strides = [1, 1]} : vector<8x55xf32> to vector<8x40xf32>
    %286 = vector.broadcast %284 : vector<8x1xf32> to vector<8x40xf32>
    %287 = arith.mulf %286, %285 : vector<8x40xf32>
    %288 = arith.addf %276, %287 : vector<8x40xf32>
    %c0_168 = arith.constant 0 : index
    %c0_169 = arith.constant 0 : index
    %289 = vector.load %arg11[%c0_168, %c0_169] : memref<8x8xf32, #tpu.memory_space<vmem>>, vector<8x8xf32>
    %290 = arith.addf %282, %288 : vector<8x40xf32>
    %cst_170 = arith.constant dense<0.000000e+00> : vector<8x40xf32>
    %291 = tpu.matmul %289, %290, %cst_170 {dimension_numbers = #tpu.dot_dimension_numbers<[1], [0], [0], [1], [0, 0, 1, 1], [], []>} : vector<8x8xf32>, vector<8x40xf32>, vector<8x40xf32> -> vector<8x40xf32>
    %c0_171 = arith.constant 0 : index
    %c0_172 = arith.constant 0 : index
    %292 = vector.load %arg12[%c0_171, %c0_172] : memref<8x1xf32, #tpu.memory_space<vmem>>, vector<8x1xf32>
    %293 = vector.broadcast %292 : vector<8x1xf32> to vector<8x40xf32>
    %294 = arith.addf %291, %293 : vector<8x40xf32>
    %cst_173 = arith.constant 0.000000e+00 : f32
    %295 = vector.broadcast %cst_173 : f32 to vector<8x40xf32>
    %296 = arith.cmpf ogt, %294, %295 : vector<8x40xf32>
    %cst_174 = arith.constant 0.000000e+00 : f32
    %297 = vector.broadcast %cst_174 : f32 to vector<8x40xf32>
    %298 = arith.minimumf %294, %297 : vector<8x40xf32>
    %299 = math.exp %298 : vector<8x40xf32>
    %cst_175 = arith.constant 1.000000e+00 : f32
    %300 = vector.broadcast %cst_175 : f32 to vector<8x40xf32>
    %301 = arith.subf %299, %300 : vector<8x40xf32>
    %302 = arith.select %296, %294, %301 : vector<8x40xi1>, vector<8x40xf32>
    %303 = vector.extract_strided_slice %302 {offsets = [0, 0], sizes = [8, 8], strides = [1, 1]} : vector<8x40xf32> to vector<8x8xf32>
    %cst_176 = arith.constant dense<0.000000e+00> : vector<8x40xf32>
    %304 = tpu.matmul %303, %3, %cst_176 {dimension_numbers = #tpu.dot_dimension_numbers<[1], [0], [0], [1], [0, 0, 1, 1], [], []>} : vector<8x8xf32>, vector<8x40xf32>, vector<8x40xf32> -> vector<8x40xf32>
    %305 = vector.extract_strided_slice %302 {offsets = [0, 8], sizes = [8, 8], strides = [1, 1]} : vector<8x40xf32> to vector<8x8xf32>
    %cst_177 = arith.constant dense<0.000000e+00> : vector<8x40xf32>
    %306 = tpu.matmul %305, %3, %cst_177 {dimension_numbers = #tpu.dot_dimension_numbers<[1], [0], [0], [1], [0, 0, 1, 1], [], []>} : vector<8x8xf32>, vector<8x40xf32>, vector<8x40xf32> -> vector<8x40xf32>
    %307 = vector.extract_strided_slice %302 {offsets = [0, 16], sizes = [8, 8], strides = [1, 1]} : vector<8x40xf32> to vector<8x8xf32>
    %cst_178 = arith.constant dense<0.000000e+00> : vector<8x40xf32>
    %308 = tpu.matmul %307, %3, %cst_178 {dimension_numbers = #tpu.dot_dimension_numbers<[1], [0], [0], [1], [0, 0, 1, 1], [], []>} : vector<8x8xf32>, vector<8x40xf32>, vector<8x40xf32> -> vector<8x40xf32>
    %309 = vector.extract_strided_slice %302 {offsets = [0, 24], sizes = [8, 8], strides = [1, 1]} : vector<8x40xf32> to vector<8x8xf32>
    %cst_179 = arith.constant dense<0.000000e+00> : vector<8x40xf32>
    %310 = tpu.matmul %309, %3, %cst_179 {dimension_numbers = #tpu.dot_dimension_numbers<[1], [0], [0], [1], [0, 0, 1, 1], [], []>} : vector<8x8xf32>, vector<8x40xf32>, vector<8x40xf32> -> vector<8x40xf32>
    %311 = vector.extract_strided_slice %302 {offsets = [0, 32], sizes = [8, 8], strides = [1, 1]} : vector<8x40xf32> to vector<8x8xf32>
    %cst_180 = arith.constant dense<0.000000e+00> : vector<8x40xf32>
    %312 = tpu.matmul %311, %3, %cst_180 {dimension_numbers = #tpu.dot_dimension_numbers<[1], [0], [0], [1], [0, 0, 1, 1], [], []>} : vector<8x8xf32>, vector<8x40xf32>, vector<8x40xf32> -> vector<8x40xf32>
    %313 = tpu.concatenate %304, %306, %308, %310, %312 in 1 : vector<8x40xf32>, vector<8x40xf32>, vector<8x40xf32>, vector<8x40xf32>, vector<8x40xf32> -> vector<8x200xf32>
    %c0_181 = arith.constant 0 : index
    %c0_182 = arith.constant 0 : index
    %314 = vector.load %arg13[%c0_181, %c0_182] : memref<76x8xf32, #tpu.memory_space<vmem>>, vector<76x8xf32>
    %cst_183 = arith.constant dense<0.000000e+00> : vector<76x200xf32>
    %315 = tpu.matmul %314, %313, %cst_183 {dimension_numbers = #tpu.dot_dimension_numbers<[1], [0], [0], [1], [0, 0, 1, 1], [], []>} : vector<76x8xf32>, vector<8x200xf32>, vector<76x200xf32> -> vector<76x200xf32>
    %c0_184 = arith.constant 0 : index
    %c0_185 = arith.constant 0 : index
    %316 = vector.load %arg14[%c0_184, %c0_185] : memref<76x1xf32, #tpu.memory_space<vmem>>, vector<76x1xf32>
    %317 = vector.broadcast %316 : vector<76x1xf32> to vector<76x200xf32>
    %318 = arith.addf %315, %317 : vector<76x200xf32>
    %cst_186 = arith.constant 0.000000e+00 : f32
    %319 = vector.broadcast %cst_186 : f32 to vector<76x200xf32>
    %320 = arith.cmpf ogt, %318, %319 : vector<76x200xf32>
    %cst_187 = arith.constant 0.000000e+00 : f32
    %321 = vector.broadcast %cst_187 : f32 to vector<76x200xf32>
    %322 = arith.minimumf %318, %321 : vector<76x200xf32>
    %323 = math.exp %322 : vector<76x200xf32>
    %cst_188 = arith.constant 1.000000e+00 : f32
    %324 = vector.broadcast %cst_188 : f32 to vector<76x200xf32>
    %325 = arith.subf %323, %324 : vector<76x200xf32>
    %326 = arith.select %320, %318, %325 : vector<76x200xi1>, vector<76x200xf32>
    %cst_189 = arith.constant 0.000000e+00 : f32
    %327 = vector.broadcast %cst_189 : f32 to vector<19x19xf32>
    %c0_190 = arith.constant 0 : index
    %c0_191 = arith.constant 0 : index
    %328 = vector.load %arg22[%c0_190, %c0_191] : memref<19x876xf32, #tpu.memory_space<vmem>>, vector<19x19xf32>
    tpu.vector_store %arg22[%c0_190, %c0_191], %327 {strides = array<i32>} : memref<19x876xf32, #tpu.memory_space<vmem>>, vector<19x19xf32>,
    %329 = vector.extract_strided_slice %326 {offsets = [0, 0], sizes = [19, 200], strides = [1, 1]} : vector<76x200xf32> to vector<19x200xf32>
    %c0_192 = arith.constant 0 : index
    %c19 = arith.constant 19 : index
    %330 = vector.load %arg22[%c0_192, %c19] : memref<19x876xf32, #tpu.memory_space<vmem>>, vector<19x200xf32>
    tpu.vector_store %arg22[%c0_192, %c19], %329 {strides = array<i32>} : memref<19x876xf32, #tpu.memory_space<vmem>>, vector<19x200xf32>,
    %cst_193 = arith.constant 0.000000e+00 : f32
    %331 = vector.broadcast %cst_193 : f32 to vector<19x19xf32>
    %c0_194 = arith.constant 0 : index
    %c219 = arith.constant 219 : index
    %332 = vector.load %arg22[%c0_194, %c219] : memref<19x876xf32, #tpu.memory_space<vmem>>, vector<19x19xf32>
    tpu.vector_store %arg22[%c0_194, %c219], %331 {strides = array<i32>} : memref<19x876xf32, #tpu.memory_space<vmem>>, vector<19x19xf32>,
    %333 = vector.extract_strided_slice %326 {offsets = [19, 0], sizes = [19, 200], strides = [1, 1]} : vector<76x200xf32> to vector<19x200xf32>
    %c0_195 = arith.constant 0 : index
    %c238 = arith.constant 238 : index
    %334 = vector.load %arg22[%c0_195, %c238] : memref<19x876xf32, #tpu.memory_space<vmem>>, vector<19x200xf32>
    tpu.vector_store %arg22[%c0_195, %c238], %333 {strides = array<i32>} : memref<19x876xf32, #tpu.memory_space<vmem>>, vector<19x200xf32>,
    %cst_196 = arith.constant 0.000000e+00 : f32
    %335 = vector.broadcast %cst_196 : f32 to vector<19x19xf32>
    %c0_197 = arith.constant 0 : index
    %c438 = arith.constant 438 : index
    %336 = vector.load %arg22[%c0_197, %c438] : memref<19x876xf32, #tpu.memory_space<vmem>>, vector<19x19xf32>
    tpu.vector_store %arg22[%c0_197, %c438], %335 {strides = array<i32>} : memref<19x876xf32, #tpu.memory_space<vmem>>, vector<19x19xf32>,
    %337 = vector.extract_strided_slice %326 {offsets = [38, 0], sizes = [19, 200], strides = [1, 1]} : vector<76x200xf32> to vector<19x200xf32>
    %c0_198 = arith.constant 0 : index
    %c457 = arith.constant 457 : index
    %338 = vector.load %arg22[%c0_198, %c457] : memref<19x876xf32, #tpu.memory_space<vmem>>, vector<19x200xf32>
    tpu.vector_store %arg22[%c0_198, %c457], %337 {strides = array<i32>} : memref<19x876xf32, #tpu.memory_space<vmem>>, vector<19x200xf32>,
    %cst_199 = arith.constant 0.000000e+00 : f32
    %339 = vector.broadcast %cst_199 : f32 to vector<19x19xf32>
    %c0_200 = arith.constant 0 : index
    %c657 = arith.constant 657 : index
    %340 = vector.load %arg22[%c0_200, %c657] : memref<19x876xf32, #tpu.memory_space<vmem>>, vector<19x19xf32>
    tpu.vector_store %arg22[%c0_200, %c657], %339 {strides = array<i32>} : memref<19x876xf32, #tpu.memory_space<vmem>>, vector<19x19xf32>,
    %341 = vector.extract_strided_slice %326 {offsets = [57, 0], sizes = [19, 200], strides = [1, 1]} : vector<76x200xf32> to vector<19x200xf32>
    %c0_201 = arith.constant 0 : index
    %c676 = arith.constant 676 : index
    %342 = vector.load %arg22[%c0_201, %c676] : memref<19x876xf32, #tpu.memory_space<vmem>>, vector<19x200xf32>
    tpu.vector_store %arg22[%c0_201, %c676], %341 {strides = array<i32>} : memref<19x876xf32, #tpu.memory_space<vmem>>, vector<19x200xf32>,
    %c0_202 = arith.constant 0 : index
    %c0_203 = arith.constant 0 : index
    %343 = vector.load %arg22[%c0_202, %c0_203] : memref<19x876xf32, #tpu.memory_space<vmem>>, vector<19x876xf32>
    %c0_204 = arith.constant 0 : index
    %c0_205 = arith.constant 0 : index
    %344 = vector.load %arg15[%c0_204, %c0_205] : memref<876x200xf32, #tpu.memory_space<vmem>>, vector<876x200xf32>
    %cst_206 = arith.constant dense<0.000000e+00> : vector<19x200xf32>
    %345 = tpu.matmul %343, %344, %cst_206 {dimension_numbers = #tpu.dot_dimension_numbers<[1], [0], [0], [1], [0, 0, 1, 1], [], []>} : vector<19x876xf32>, vector<876x200xf32>, vector<19x200xf32> -> vector<19x200xf32>
    %c0_207 = arith.constant 0 : index
    %346 = memref.load %arg2[%c0_207] : memref<1xf32, #tpu.memory_space<smem>>
    %347 = vector.broadcast %346 : f32 to vector<19x200xf32>
    %348 = arith.addf %345, %347 : vector<19x200xf32>
    %c0_208 = arith.constant 0 : index
    %c0_209 = arith.constant 0 : index
    %c0_210 = arith.constant 0 : index
    %c0_211 = arith.constant 0 : index
    %349 = vector.load %arg18[%c0_208, %c0_209, %c0_210, %c0_211] : memref<1x1x19x200xf32, #tpu.memory_space<vmem>>, vector<1x1x19x200xf32>
    %350 = vector.shape_cast %349 : vector<1x1x19x200xf32> to vector<19x200xf32>
    %351 = vector.shape_cast %348 : vector<19x200xf32> to vector<1x1x19x200xf32>
    tpu.vector_store %arg18[%c0_208, %c0_209, %c0_210, %c0_211], %351 {strides = array<i32>} : memref<1x1x19x200xf32, #tpu.memory_space<vmem>>, vector<1x1x19x200xf32>,
    return
  }
  func.func @transform_0(%arg0: i32) -> (i32, i32, i32, i32) {
    %c0_i32 = arith.constant 0 : i32
    %c0_i32_0 = arith.constant 0 : i32
    %c0_i32_1 = arith.constant 0 : i32
    %c0_i32_2 = arith.constant 0 : i32
    return %arg0, %c0_i32, %c0_i32_0, %c0_i32_1 : i32, i32, i32, i32
  }
  func.func @transform_1(%arg0: i32) -> i32 {
    %c0_i32 = arith.constant 0 : i32
    %c0_i32_0 = arith.constant 0 : i32
    return %c0_i32 : i32
  }
  func.func @transform_2(%arg0: i32) -> (i32, i32) {
    %c0_i32 = arith.constant 0 : i32
    %c0_i32_0 = arith.constant 0 : i32
    %c0_i32_1 = arith.constant 0 : i32
    return %c0_i32, %c0_i32_0 : i32, i32
  }
  func.func @transform_3(%arg0: i32) -> (i32, i32) {
    %c0_i32 = arith.constant 0 : i32
    %c0_i32_0 = arith.constant 0 : i32
    %c0_i32_1 = arith.constant 0 : i32
    return %c0_i32, %c0_i32_0 : i32, i32
  }
  func.func @transform_4(%arg0: i32) -> (i32, i32, i32) {
    %c0_i32 = arith.constant 0 : i32
    %c0_i32_0 = arith.constant 0 : i32
    %c0_i32_1 = arith.constant 0 : i32
    %c0_i32_2 = arith.constant 0 : i32
    return %c0_i32, %c0_i32_0, %c0_i32_1 : i32, i32, i32
  }
  func.func @transform_5(%arg0: i32) -> (i32, i32, i32) {
    %c0_i32 = arith.constant 0 : i32
    %c0_i32_0 = arith.constant 0 : i32
    %c0_i32_1 = arith.constant 0 : i32
    %c0_i32_2 = arith.constant 0 : i32
    return %c0_i32, %c0_i32_0, %c0_i32_1 : i32, i32, i32
  }
  func.func @transform_6(%arg0: i32) -> (i32, i32, i32) {
    %c0_i32 = arith.constant 0 : i32
    %c0_i32_0 = arith.constant 0 : i32
    %c0_i32_1 = arith.constant 0 : i32
    %c0_i32_2 = arith.constant 0 : i32
    return %c0_i32, %c0_i32_0, %c0_i32_1 : i32, i32, i32
  }
  func.func @transform_7(%arg0: i32) -> (i32, i32) {
    %c0_i32 = arith.constant 0 : i32
    %c0_i32_0 = arith.constant 0 : i32
    %c0_i32_1 = arith.constant 0 : i32
    return %c0_i32, %c0_i32_0 : i32, i32
  }
  func.func @transform_8(%arg0: i32) -> (i32, i32) {
    %c0_i32 = arith.constant 0 : i32
    %c0_i32_0 = arith.constant 0 : i32
    %c0_i32_1 = arith.constant 0 : i32
    return %c0_i32, %c0_i32_0 : i32, i32
  }
  func.func @transform_9(%arg0: i32) -> (i32, i32, i32) {
    %c0_i32 = arith.constant 0 : i32
    %c0_i32_0 = arith.constant 0 : i32
    %c0_i32_1 = arith.constant 0 : i32
    %c0_i32_2 = arith.constant 0 : i32
    return %c0_i32, %c0_i32_0, %c0_i32_1 : i32, i32, i32
  }
  func.func @transform_10(%arg0: i32) -> (i32, i32) {
    %c0_i32 = arith.constant 0 : i32
    %c0_i32_0 = arith.constant 0 : i32
    %c0_i32_1 = arith.constant 0 : i32
    return %c0_i32, %c0_i32_0 : i32, i32
  }
  func.func @transform_11(%arg0: i32) -> (i32, i32) {
    %c0_i32 = arith.constant 0 : i32
    %c0_i32_0 = arith.constant 0 : i32
    %c0_i32_1 = arith.constant 0 : i32
    return %c0_i32, %c0_i32_0 : i32, i32
  }
  func.func @transform_12(%arg0: i32) -> (i32, i32) {
    %c0_i32 = arith.constant 0 : i32
    %c0_i32_0 = arith.constant 0 : i32
    %c0_i32_1 = arith.constant 0 : i32
    return %c0_i32, %c0_i32_0 : i32, i32
  }
  func.func @transform_13(%arg0: i32) -> (i32, i32) {
    %c0_i32 = arith.constant 0 : i32
    %c0_i32_0 = arith.constant 0 : i32
    %c0_i32_1 = arith.constant 0 : i32
    return %c0_i32, %c0_i32_0 : i32, i32
  }
  func.func @transform_14(%arg0: i32) -> (i32, i32) {
    %c0_i32 = arith.constant 0 : i32
    %c0_i32_0 = arith.constant 0 : i32
    %c0_i32_1 = arith.constant 0 : i32
    return %c0_i32, %c0_i32_0 : i32, i32
  }
  func.func @transform_15(%arg0: i32) -> (i32, i32) {
    %c0_i32 = arith.constant 0 : i32
    %c0_i32_0 = arith.constant 0 : i32
    %c0_i32_1 = arith.constant 0 : i32
    return %c0_i32, %c0_i32_0 : i32, i32
  }
  func.func @transform_16(%arg0: i32) -> (i32, i32) {
    %c0_i32 = arith.constant 0 : i32
    %c0_i32_0 = arith.constant 0 : i32
    %c0_i32_1 = arith.constant 0 : i32
    return %c0_i32, %c0_i32_0 : i32, i32
  }
  func.func @transform_17(%arg0: i32) -> (i32, i32, i32, i32) {
    %c0_i32 = arith.constant 0 : i32
    %c0_i32_0 = arith.constant 0 : i32
    %c0_i32_1 = arith.constant 0 : i32
    %c0_i32_2 = arith.constant 0 : i32
    return %arg0, %c0_i32, %c0_i32_0, %c0_i32_1 : i32, i32, i32, i32
  }
}

</mosaic_0001>

<llo_original>
// kernel: mul.31
$region0: #{mul.31}
  #allocation2 [shape = 's32[1]{0}', space=sflag, size = 0x4, scoped, tag = 'scoped memory for mul.31']
  %s0 = inlined_call_operand.hbm [shape: f32[8], index: 0, kind: input, shape index: {}]
  %s1 = inlined_call_operand.vmem [shape: f32[8], index: 1, kind: input, shape index: {}]
  %s2 = inlined_call_operand.vmem [shape: f32[8], index: 2, kind: output, shape index: {}]
  $region1: #{mul.31} parent=0
    #allocation0 [shape = 'u8[512]{0}', space=vmem, size = 0x400, scoped, tag = 'operand span for operand 0']
    #allocation1 [shape = 's32[1]{0}', space=sflag, size = 0x4, scoped, tag = 'scoped memory for mul.31']
    %3 = vsyncpa [#allocation1], 0
    %5 = vsyncadd [#allocation1], 0
    %s7 = sshll.u32 %s0, 4
    %s8 = int_to_ptr.hbm [resolvable:$true] %s7
    %s9 = sshll.u32 [#allocation0], 4
    %s10 = int_to_ptr.vmem [resolvable:$true] %s9
    %12 = dma.hbm_to_vmem [thread:$0]  %s8, 16, %s10, [#allocation1]
    %14 = dma.done [#allocation1], 16
    %v15 = vld [vmem:[#allocation0] sm:$0x1]
    %v16 = vld [vmem:[%s1] sm:$0x1]
    %17 = xla_tuple %v15, %v16
    %18 = xla_tuple %17
    %v19 = vmul.f32 %v15, %v16
    %20 = xla_tuple %v19
    %21 = vst [vmem:[%s2] sm:$0x1] %v19
    %22 = vsyncpa [#allocation1], 1

// kernel: eegnet_autoencoder_forward.1
$region0: #{eegnet_autoencoder_forward.1}
  #allocation0 [shape = 'u32[]', space=smem, size = 0x4, offset = 0x4, fixed_abs, tag = 'smem constant byte address 0x4 - core index']
  #allocation1 [shape = 'u32[72,128]{1,0:T(1,128)}', space=vmem, size = 0x9000, scoped, tag = 'internal scratch']
  #allocation2 [shape = 'f32[8,219]{1,0:T(8,128)}', space=vmem, size = 0x2000, scoped, tag = 'scratch operand']
  #allocation3 [shape = 'f32[8,55]{1,0:T(8,128)}', space=vmem, size = 0x1000, scoped, tag = 'scratch operand']
  #allocation4 [shape = 'f32[8,55]{1,0:T(8,128)}', space=vmem, size = 0x1000, scoped, tag = 'scratch operand']
  #allocation5 [shape = 'f32[19,876]{1,0:T(8,128)}', space=vmem, size = 0x15000, scoped, tag = 'scratch operand']
  #allocation6 [shape = 'f32[1]{0:T(128)S(6)}', space=smem, size = 0x200, scoped, tag = 'scoped memory for eegnet_autoencoder_forward.1']
  %s0 = inlined_call_operand.vmem [shape: f32[2,1,19,200], index: 0, kind: input, shape index: {}]
  %s1 = inlined_call_operand.<no memory space> [shape: f32[1], index: 1, kind: input, shape index: {}]
  %s2 = inlined_call_operand.vmem [shape: f32[8,19], index: 2, kind: input, shape index: {}]
  %s3 = inlined_call_operand.vmem [shape: f32[8,1], index: 3, kind: input, shape index: {}]
  %s4 = inlined_call_operand.vmem [shape: f32[4,219,200], index: 4, kind: input, shape index: {}]
  %s5 = inlined_call_operand.vmem [shape: f32[4,8,1], index: 5, kind: input, shape index: {}]
  %s6 = inlined_call_operand.vmem [shape: f32[16,8,1], index: 6, kind: input, shape index: {}]
  %s7 = inlined_call_operand.vmem [shape: f32[8,8], index: 7, kind: input, shape index: {}]
  %s8 = inlined_call_operand.vmem [shape: f32[8,1], index: 8, kind: input, shape index: {}]
  %s9 = inlined_call_operand.vmem [shape: f32[16,8,1], index: 9, kind: input, shape index: {}]
  %s10 = inlined_call_operand.vmem [shape: f32[8,8], index: 10, kind: input, shape index: {}]
  %s11 = inlined_call_operand.vmem [shape: f32[8,1], index: 11, kind: input, shape index: {}]
  %s12 = inlined_call_operand.vmem [shape: f32[76,8], index: 12, kind: input, shape index: {}]
  %s13 = inlined_call_operand.vmem [shape: f32[76,1], index: 13, kind: input, shape index: {}]
  %s14 = inlined_call_operand.vmem [shape: f32[876,200], index: 14, kind: input, shape index: {}]
  %s15 = inlined_call_operand.vmem [shape: f32[40,8], index: 15, kind: input, shape index: {}]
  %s16 = inlined_call_operand.vmem [shape: f32[8,40], index: 16, kind: input, shape index: {}]
  %s17 = inlined_call_operand.vmem [shape: f32[2,1,19,200], index: 17, kind: output, shape index: {}]
  %s18 = sld [smem:[#allocation0]]
  $region101: #{eegnet_autoencoder_forward.1} parent=0
    _
  %s20 = ssub.s32 1, %s18
  %s21 = scalar_select 0, %s20, %s18
  %22 = sst [smem:[#allocation6]] %s1
  loop: start=0, step=1, limit=4
  $region2: #{eegnet_autoencoder_forward.1} parent=0 // loop_pre_header
    _
  $region3: #{eegnet_autoencoder_forward.1} parent=0 // loop_header
    %s24 = sphi 0, %s28
    %p25 = scmp.ge.s32.totalorder %s24, 4
    %s34 = sphi 0, %s36
    %s37 = sphi 0, %s34
    %s38 = sphi 0, %s37
    %s54 = sphi 0, %s38
    %s58 = sphi 0, %s58
    %s60 = sphi 0, %s58
    %s61 = sphi 0, %s60
    %s75 = sphi 0, %s61
    %s79 = sphi 0, %s79
    %s81 = sphi 0, %s79
    %s82 = sphi 0, %s81
    %s96 = sphi 0, %s82
    %s100 = sphi 0, %s100
    %s102 = sphi 0, %s100
    %s103 = sphi 0, %s102
    %s117 = sphi 0, %s103
    %s121 = sphi 0, %s121
    %s123 = sphi 0, %s121
    %s124 = sphi 0, %s123
    %s138 = sphi 0, %s124
    %s142 = sphi 0, %s142
    %s144 = sphi 0, %s142
    %s145 = sphi 0, %s144
    %s159 = sphi 0, %s145
    %s163 = sphi 0, %s163
    %s165 = sphi 0, %s163
    %s166 = sphi 0, %s165
    %s180 = sphi 0, %s166
    %s184 = sphi 0, %s184
    %s186 = sphi 0, %s184
    %s187 = sphi 0, %s186
    %s201 = sphi 0, %s187
    %s205 = sphi 0, %s205
    %s207 = sphi 0, %s205
    %s208 = sphi 0, %s207
    %s222 = sphi 0, %s208
    %s226 = sphi 0, %s226
    %s228 = sphi 0, %s226
    %s229 = sphi 0, %s228
    %s243 = sphi 0, %s229
    %s247 = sphi 0, %s247
    %s249 = sphi 0, %s247
    %s250 = sphi 0, %s249
    %s264 = sphi 0, %s250
    %s268 = sphi 0, %s268
    %s270 = sphi 0, %s268
    %s271 = sphi 0, %s270
    %s285 = sphi 0, %s271
    %s289 = sphi 0, %s289
    %s291 = sphi 0, %s289
    %s292 = sphi 0, %s291
    %s306 = sphi 0, %s292
    %s310 = sphi 0, %s310
    %s312 = sphi 0, %s310
    %s313 = sphi 0, %s312
    %s327 = sphi 0, %s313
    %s331 = sphi 0, %s331
    %s333 = sphi 0, %s331
    %s334 = sphi 0, %s333
    %s348 = sphi 0, %s334
    %s352 = sphi 0, %s352
    %s354 = sphi 0, %s352
    %s355 = sphi 0, %s354
    %s369 = sphi 0, %s355
    %s373 = sphi 0, %s373
    %s375 = sphi 0, %s373
    %s376 = sphi 0, %s375
    %s390 = sphi 0, %s376
    %s396 = sphi 0, %s398
    %s399 = sphi 0, %s396
    %s400 = sphi 0, %s399
    %s416 = sphi 0, %s400
  $region4: #{eegnet_autoencoder_forward.1} parent=0 // loop_header_branch
    %27 = sbr.rel (%p25) target = $region8
  $region5: #{eegnet_autoencoder_forward.1} parent=0 // loop_body
    %s29 = ssub.s32 %s24, 1
    %s30 = ssub.s32 %s24, 2
    %s31 = sadd.s32 %s24, 1
    %s32 = ssub.s32 %s24, %s31
    %p33 = scmp.eq.s32.totalorder %s32, 0
    %s35 = sadd.s32 %s34, 1
    %s36 = scalar_select %p33, %s34, %s35
    %p39 = pneg %p33
    %p40 = scmp.eq.s32.totalorder %s24, 1
    %p41 = por %p39, %p40
    %p42 = scmp.ne.s32.totalorder %s34, %s37
    %p43 = scmp.eq.s32.totalorder %s24, 0
    %p44 = por %p42, %p43
    %p45 = scmp.ne.s32.totalorder %s34, %s37
    %p46 = scmp.eq.s32.totalorder %s29, 1
    %p47 = por %p45, %p46
    %p48 = scmp.ne.s32.totalorder %s37, %s38
    %p49 = scmp.eq.s32.totalorder %s29, 0
    %p50 = por %p48, %p49
    %p51 = scmp.ne.s32.totalorder %s37, %s38
    %p52 = scmp.eq.s32.totalorder %s30, 1
    %p53 = por %p51, %p52
    %p55 = scmp.ne.s32.totalorder %s38, %s54
    %p56 = scmp.eq.s32.totalorder %s30, 0
    %p57 = por %p55, %p56
    %s59 = sadd.s32 %s58, 1
    %p62 = scmp.eq.s32.totalorder %s24, 1
    %p63 = scmp.ne.s32.totalorder %s58, %s60
    %p64 = scmp.eq.s32.totalorder %s24, 0
    %p65 = por %p63, %p64
    %p66 = scmp.ne.s32.totalorder %s58, %s60
    %p67 = scmp.eq.s32.totalorder %s29, 1
    %p68 = por %p66, %p67
    %p69 = scmp.ne.s32.totalorder %s60, %s61
    %p70 = scmp.eq.s32.totalorder %s29, 0
    %p71 = por %p69, %p70
    %p72 = scmp.ne.s32.totalorder %s60, %s61
    %p73 = scmp.eq.s32.totalorder %s30, 1
    %p74 = por %p72, %p73
    %p76 = scmp.ne.s32.totalorder %s61, %s75
    %p77 = scmp.eq.s32.totalorder %s30, 0
    %p78 = por %p76, %p77
    %s80 = sadd.s32 %s79, 1
    %p83 = scmp.eq.s32.totalorder %s24, 1
    %p84 = scmp.ne.s32.totalorder %s79, %s81
    %p85 = scmp.eq.s32.totalorder %s24, 0
    %p86 = por %p84, %p85
    %p87 = scmp.ne.s32.totalorder %s79, %s81
    %p88 = scmp.eq.s32.totalorder %s29, 1
    %p89 = por %p87, %p88
    %p90 = scmp.ne.s32.totalorder %s81, %s82
    %p91 = scmp.eq.s32.totalorder %s29, 0
    %p92 = por %p90, %p91
    %p93 = scmp.ne.s32.totalorder %s81, %s82
    %p94 = scmp.eq.s32.totalorder %s30, 1
    %p95 = por %p93, %p94
    %p97 = scmp.ne.s32.totalorder %s82, %s96
    %p98 = scmp.eq.s32.totalorder %s30, 0
    %p99 = por %p97, %p98
    %s101 = sadd.s32 %s100, 1
    %p104 = scmp.eq.s32.totalorder %s24, 1
    %p105 = scmp.ne.s32.totalorder %s100, %s102
    %p106 = scmp.eq.s32.totalorder %s24, 0
    %p107 = por %p105, %p106
    %p108 = scmp.ne.s32.totalorder %s100, %s102
    %p109 = scmp.eq.s32.totalorder %s29, 1
    %p110 = por %p108, %p109
    %p111 = scmp.ne.s32.totalorder %s102, %s103
    %p112 = scmp.eq.s32.totalorder %s29, 0
    %p113 = por %p111, %p112
    %p114 = scmp.ne.s32.totalorder %s102, %s103
    %p115 = scmp.eq.s32.totalorder %s30, 1
    %p116 = por %p114, %p115
    %p118 = scmp.ne.s32.totalorder %s103, %s117
    %p119 = scmp.eq.s32.totalorder %s30, 0
    %p120 = por %p118, %p119
    %s122 = sadd.s32 %s121, 1
    %p125 = scmp.eq.s32.totalorder %s24, 1
    %p126 = scmp.ne.s32.totalorder %s121, %s123
    %p127 = scmp.eq.s32.totalorder %s24, 0
    %p128 = por %p126, %p127
    %p129 = scmp.ne.s32.totalorder %s121, %s123
    %p130 = scmp.eq.s32.totalorder %s29, 1
    %p131 = por %p129, %p130
    %p132 = scmp.ne.s32.totalorder %s123, %s124
    %p133 = scmp.eq.s32.totalorder %s29, 0
    %p134 = por %p132, %p133
    %p135 = scmp.ne.s32.totalorder %s123, %s124
    %p136 = scmp.eq.s32.totalorder %s30, 1
    %p137 = por %p135, %p136
    %p139 = scmp.ne.s32.totalorder %s124, %s138
    %p140 = scmp.eq.s32.totalorder %s30, 0
    %p141 = por %p139, %p140
    %s143 = sadd.s32 %s142, 1
    %p146 = scmp.eq.s32.totalorder %s24, 1
    %p147 = scmp.ne.s32.totalorder %s142, %s144
    %p148 = scmp.eq.s32.totalorder %s24, 0
    %p149 = por %p147, %p148
    %p150 = scmp.ne.s32.totalorder %s142, %s144
    %p151 = scmp.eq.s32.totalorder %s29, 1
    %p152 = por %p150, %p151
    %p153 = scmp.ne.s32.totalorder %s144, %s145
    %p154 = scmp.eq.s32.totalorder %s29, 0
    %p155 = por %p153, %p154
    %p156 = scmp.ne.s32.totalorder %s144, %s145
    %p157 = scmp.eq.s32.totalorder %s30, 1
    %p158 = por %p156, %p157
    %p160 = scmp.ne.s32.totalorder %s145, %s159
    %p161 = scmp.eq.s32.totalorder %s30, 0
    %p162 = por %p160, %p161
    %s164 = sadd.s32 %s163, 1
    %p167 = scmp.eq.s32.totalorder %s24, 1
    %p168 = scmp.ne.s32.totalorder %s163, %s165
    %p169 = scmp.eq.s32.totalorder %s24, 0
    %p170 = por %p168, %p169
    %p171 = scmp.ne.s32.totalorder %s163, %s165
    %p172 = scmp.eq.s32.totalorder %s29, 1
    %p173 = por %p171, %p172
    %p174 = scmp.ne.s32.totalorder %s165, %s166
    %p175 = scmp.eq.s32.totalorder %s29, 0
    %p176 = por %p174, %p175
    %p177 = scmp.ne.s32.totalorder %s165, %s166
    %p178 = scmp.eq.s32.totalorder %s30, 1
    %p179 = por %p177, %p178
    %p181 = scmp.ne.s32.totalorder %s166, %s180
    %p182 = scmp.eq.s32.totalorder %s30, 0
    %p183 = por %p181, %p182
    %s185 = sadd.s32 %s184, 1
    %p188 = scmp.eq.s32.totalorder %s24, 1
    %p189 = scmp.ne.s32.totalorder %s184, %s186
    %p190 = scmp.eq.s32.totalorder %s24, 0
    %p191 = por %p189, %p190
    %p192 = scmp.ne.s32.totalorder %s184, %s186
    %p193 = scmp.eq.s32.totalorder %s29, 1
    %p194 = por %p192, %p193
    %p195 = scmp.ne.s32.totalorder %s186, %s187
    %p196 = scmp.eq.s32.totalorder %s29, 0
    %p197 = por %p195, %p196
    %p198 = scmp.ne.s32.totalorder %s186, %s187
    %p199 = scmp.eq.s32.totalorder %s30, 1
    %p200 = por %p198, %p199
    %p202 = scmp.ne.s32.totalorder %s187, %s201
    %p203 = scmp.eq.s32.totalorder %s30, 0
    %p204 = por %p202, %p203
    %s206 = sadd.s32 %s205, 1
    %p209 = scmp.eq.s32.totalorder %s24, 1
    %p210 = scmp.ne.s32.totalorder %s205, %s207
    %p211 = scmp.eq.s32.totalorder %s24, 0
    %p212 = por %p210, %p211
    %p213 = scmp.ne.s32.totalorder %s205, %s207
    %p214 = scmp.eq.s32.totalorder %s29, 1
    %p215 = por %p213, %p214
    %p216 = scmp.ne.s32.totalorder %s207, %s208
    %p217 = scmp.eq.s32.totalorder %s29, 0
    %p218 = por %p216, %p217
    %p219 = scmp.ne.s32.totalorder %s207, %s208
    %p220 = scmp.eq.s32.totalorder %s30, 1
    %p221 = por %p219, %p220
    %p223 = scmp.ne.s32.totalorder %s208, %s222
    %p224 = scmp.eq.s32.totalorder %s30, 0
    %p225 = por %p223, %p224
    %s227 = sadd.s32 %s226, 1
    %p230 = scmp.eq.s32.totalorder %s24, 1
    %p231 = scmp.ne.s32.totalorder %s226, %s228
    %p232 = scmp.eq.s32.totalorder %s24, 0
    %p233 = por %p231, %p232
    %p234 = scmp.ne.s32.totalorder %s226, %s228
    %p235 = scmp.eq.s32.totalorder %s29, 1
    %p236 = por %p234, %p235
    %p237 = scmp.ne.s32.totalorder %s228, %s229
    %p238 = scmp.eq.s32.totalorder %s29, 0
    %p239 = por %p237, %p238
    %p240 = scmp.ne.s32.totalorder %s228, %s229
    %p241 = scmp.eq.s32.totalorder %s30, 1
    %p242 = por %p240, %p241
    %p244 = scmp.ne.s32.totalorder %s229, %s243
    %p245 = scmp.eq.s32.totalorder %s30, 0
    %p246 = por %p244, %p245
    %s248 = sadd.s32 %s247, 1
    %p251 = scmp.eq.s32.totalorder %s24, 1
    %p252 = scmp.ne.s32.totalorder %s247, %s249
    %p253 = scmp.eq.s32.totalorder %s24, 0
    %p254 = por %p252, %p253
    %p255 = scmp.ne.s32.totalorder %s247, %s249
    %p256 = scmp.eq.s32.totalorder %s29, 1
    %p257 = por %p255, %p256
    %p258 = scmp.ne.s32.totalorder %s249, %s250
    %p259 = scmp.eq.s32.totalorder %s29, 0
    %p260 = por %p258, %p259
    %p261 = scmp.ne.s32.totalorder %s249, %s250
    %p262 = scmp.eq.s32.totalorder %s30, 1
    %p263 = por %p261, %p262
    %p265 = scmp.ne.s32.totalorder %s250, %s264
    %p266 = scmp.eq.s32.totalorder %s30, 0
    %p267 = por %p265, %p266
    %s269 = sadd.s32 %s268, 1
    %p272 = scmp.eq.s32.totalorder %s24, 1
    %p273 = scmp.ne.s32.totalorder %s268, %s270
    %p274 = scmp.eq.s32.totalorder %s24, 0
    %p275 = por %p273, %p274
    %p276 = scmp.ne.s32.totalorder %s268, %s270
    %p277 = scmp.eq.s32.totalorder %s29, 1
    %p278 = por %p276, %p277
    %p279 = scmp.ne.s32.totalorder %s270, %s271
    %p280 = scmp.eq.s32.totalorder %s29, 0
    %p281 = por %p279, %p280
    %p282 = scmp.ne.s32.totalorder %s270, %s271
    %p283 = scmp.eq.s32.totalorder %s30, 1
    %p284 = por %p282, %p283
    %p286 = scmp.ne.s32.totalorder %s271, %s285
    %p287 = scmp.eq.s32.totalorder %s30, 0
    %p288 = por %p286, %p287
    %s290 = sadd.s32 %s289, 1
    %p293 = scmp.eq.s32.totalorder %s24, 1
    %p294 = scmp.ne.s32.totalorder %s289, %s291
    %p295 = scmp.eq.s32.totalorder %s24, 0
    %p296 = por %p294, %p295
    %p297 = scmp.ne.s32.totalorder %s289, %s291
    %p298 = scmp.eq.s32.totalorder %s29, 1
    %p299 = por %p297, %p298
    %p300 = scmp.ne.s32.totalorder %s291, %s292
    %p301 = scmp.eq.s32.totalorder %s29, 0
    %p302 = por %p300, %p301
    %p303 = scmp.ne.s32.totalorder %s291, %s292
    %p304 = scmp.eq.s32.totalorder %s30, 1
    %p305 = por %p303, %p304
    %p307 = scmp.ne.s32.totalorder %s292, %s306
    %p308 = scmp.eq.s32.totalorder %s30, 0
    %p309 = por %p307, %p308
    %s311 = sadd.s32 %s310, 1
    %p314 = scmp.eq.s32.totalorder %s24, 1
    %p315 = scmp.ne.s32.totalorder %s310, %s312
    %p316 = scmp.eq.s32.totalorder %s24, 0
    %p317 = por %p315, %p316
    %p318 = scmp.ne.s32.totalorder %s310, %s312
    %p319 = scmp.eq.s32.totalorder %s29, 1
    %p320 = por %p318, %p319
    %p321 = scmp.ne.s32.totalorder %s312, %s313
    %p322 = scmp.eq.s32.totalorder %s29, 0
    %p323 = por %p321, %p322
    %p324 = scmp.ne.s32.totalorder %s312, %s313
    %p325 = scmp.eq.s32.totalorder %s30, 1
    %p326 = por %p324, %p325
    %p328 = scmp.ne.s32.totalorder %s313, %s327
    %p329 = scmp.eq.s32.totalorder %s30, 0
    %p330 = por %p328, %p329
    %s332 = sadd.s32 %s331, 1
    %p335 = scmp.eq.s32.totalorder %s24, 1
    %p336 = scmp.ne.s32.totalorder %s331, %s333
    %p337 = scmp.eq.s32.totalorder %s24, 0
    %p338 = por %p336, %p337
    %p339 = scmp.ne.s32.totalorder %s331, %s333
    %p340 = scmp.eq.s32.totalorder %s29, 1
    %p341 = por %p339, %p340
    %p342 = scmp.ne.s32.totalorder %s333, %s334
    %p343 = scmp.eq.s32.totalorder %s29, 0
    %p344 = por %p342, %p343
    %p345 = scmp.ne.s32.totalorder %s333, %s334
    %p346 = scmp.eq.s32.totalorder %s30, 1
    %p347 = por %p345, %p346
    %p349 = scmp.ne.s32.totalorder %s334, %s348
    %p350 = scmp.eq.s32.totalorder %s30, 0
    %p351 = por %p349, %p350
    %s353 = sadd.s32 %s352, 1
    %p356 = scmp.eq.s32.totalorder %s24, 1
    %p357 = scmp.ne.s32.totalorder %s352, %s354
    %p358 = scmp.eq.s32.totalorder %s24, 0
    %p359 = por %p357, %p358
    %p360 = scmp.ne.s32.totalorder %s352, %s354
    %p361 = scmp.eq.s32.totalorder %s29, 1
    %p362 = por %p360, %p361
    %p363 = scmp.ne.s32.totalorder %s354, %s355
    %p364 = scmp.eq.s32.totalorder %s29, 0
    %p365 = por %p363, %p364
    %p366 = scmp.ne.s32.totalorder %s354, %s355
    %p367 = scmp.eq.s32.totalorder %s30, 1
    %p368 = por %p366, %p367
    %p370 = scmp.ne.s32.totalorder %s355, %s369
    %p371 = scmp.eq.s32.totalorder %s30, 0
    %p372 = por %p370, %p371
    %s374 = sadd.s32 %s373, 1
    %p377 = scmp.eq.s32.totalorder %s24, 1
    %p378 = scmp.ne.s32.totalorder %s373, %s375
    %p379 = scmp.eq.s32.totalorder %s24, 0
    %p380 = por %p378, %p379
    %p381 = scmp.ne.s32.totalorder %s373, %s375
    %p382 = scmp.eq.s32.totalorder %s29, 1
    %p383 = por %p381, %p382
    %p384 = scmp.ne.s32.totalorder %s375, %s376
    %p385 = scmp.eq.s32.totalorder %s29, 0
    %p386 = por %p384, %p385
    %p387 = scmp.ne.s32.totalorder %s375, %s376
    %p388 = scmp.eq.s32.totalorder %s30, 1
    %p389 = por %p387, %p388
    %p391 = scmp.ne.s32.totalorder %s376, %s390
    %p392 = scmp.eq.s32.totalorder %s30, 0
    %p393 = por %p391, %p392
    %s394 = ssub.s32 %s24, %s31
    %p395 = scmp.eq.s32.totalorder %s394, 0
    %s397 = sadd.s32 %s396, 1
    %s398 = scalar_select %p395, %s396, %s397
    %p401 = pneg %p395
    %p402 = scmp.eq.s32.totalorder %s24, 1
    %p403 = por %p401, %p402
    %p404 = scmp.ne.s32.totalorder %s396, %s399
    %p405 = scmp.eq.s32.totalorder %s24, 0
    %p406 = por %p404, %p405
    %p407 = scmp.ne.s32.totalorder %s396, %s399
    %p408 = scmp.eq.s32.totalorder %s29, 1
    %p409 = por %p407, %p408
    %p410 = scmp.ne.s32.totalorder %s399, %s400
    %p411 = scmp.eq.s32.totalorder %s29, 0
    %p412 = por %p410, %p411
    %p413 = scmp.ne.s32.totalorder %s399, %s400
    %p414 = scmp.eq.s32.totalorder %s30, 1
    %p415 = por %p413, %p414
    %p417 = scmp.ne.s32.totalorder %s400, %s416
    %p418 = scmp.eq.s32.totalorder %s30, 0
    %p419 = por %p417, %p418
    %p420 = scmp.le.s32.totalorder 1, %s24
    %p421 = scmp.lt.s32.totalorder %s24, 3
    %p422 = pnand %p420, %p421
    %p423 = pneg %p422
    // Predicated region
    $region9: #{eegnet_autoencoder_forward.1} parent=5 // pred_check
      _
    $region10: #{eegnet_autoencoder_forward.1} parent=5 // pred_check_branch
      %425 = sbr.rel (%p422) target = $region12
    $region11: #{eegnet_autoencoder_forward.1} parent=5 // pred_region
      %s426 = ssub.s32 %s24, 1
      // Predicated region
      $region13: #{eegnet_autoencoder_forward.1} parent=11 // pred_check
        %p427 = pneg %p71
      $region14: #{eegnet_autoencoder_forward.1} parent=11 // pred_check_branch
        %429 = sbr.rel (%p427) target = $region16
      $region15: #{eegnet_autoencoder_forward.1} parent=11 // pred_region
        _
      $region16: #{eegnet_autoencoder_forward.1} parent=11 // pred_fallthru
        _
      // Predicated region
      $region17: #{eegnet_autoencoder_forward.1} parent=11 // pred_check
        %p430 = pneg %p92
      $region18: #{eegnet_autoencoder_forward.1} parent=11 // pred_check_branch
        %432 = sbr.rel (%p430) target = $region20
      $region19: #{eegnet_autoencoder_forward.1} parent=11 // pred_region
        _
      $region20: #{eegnet_autoencoder_forward.1} parent=11 // pred_fallthru
        _
      // Predicated region
      $region21: #{eegnet_autoencoder_forward.1} parent=11 // pred_check
        %p433 = pneg %p113
      $region22: #{eegnet_autoencoder_forward.1} parent=11 // pred_check_branch
        %435 = sbr.rel (%p433) target = $region24
      $region23: #{eegnet_autoencoder_forward.1} parent=11 // pred_region
        _
      $region24: #{eegnet_autoencoder_forward.1} parent=11 // pred_fallthru
        _
      // Predicated region
      $region25: #{eegnet_autoencoder_forward.1} parent=11 // pred_check
        %p436 = pneg %p134
      $region26: #{eegnet_autoencoder_forward.1} parent=11 // pred_check_branch
        %438 = sbr.rel (%p436) target = $region28
      $region27: #{eegnet_autoencoder_forward.1} parent=11 // pred_region
        _
      $region28: #{eegnet_autoencoder_forward.1} parent=11 // pred_fallthru
        _
      // Predicated region
      $region29: #{eegnet_autoencoder_forward.1} parent=11 // pred_check
        %p439 = pneg %p155
      $region30: #{eegnet_autoencoder_forward.1} parent=11 // pred_check_branch
        %441 = sbr.rel (%p439) target = $region32
      $region31: #{eegnet_autoencoder_forward.1} parent=11 // pred_region
        _
      $region32: #{eegnet_autoencoder_forward.1} parent=11 // pred_fallthru
        _
      // Predicated region
      $region33: #{eegnet_autoencoder_forward.1} parent=11 // pred_check
        %p442 = pneg %p176
      $region34: #{eegnet_autoencoder_forward.1} parent=11 // pred_check_branch
        %444 = sbr.rel (%p442) target = $region36
      $region35: #{eegnet_autoencoder_forward.1} parent=11 // pred_region
        _
      $region36: #{eegnet_autoencoder_forward.1} parent=11 // pred_fallthru
        _
      // Predicated region
      $region37: #{eegnet_autoencoder_forward.1} parent=11 // pred_check
        %p445 = pneg %p197
      $region38: #{eegnet_autoencoder_forward.1} parent=11 // pred_check_branch
        %447 = sbr.rel (%p445) target = $region40
      $region39: #{eegnet_autoencoder_forward.1} parent=11 // pred_region
        _
      $region40: #{eegnet_autoencoder_forward.1} parent=11 // pred_fallthru
        _
      // Predicated region
      $region41: #{eegnet_autoencoder_forward.1} parent=11 // pred_check
        %p448 = pneg %p218
      $region42: #{eegnet_autoencoder_forward.1} parent=11 // pred_check_branch
        %450 = sbr.rel (%p448) target = $region44
      $region43: #{eegnet_autoencoder_forward.1} parent=11 // pred_region
        _
      $region44: #{eegnet_autoencoder_forward.1} parent=11 // pred_fallthru
        _
      // Predicated region
      $region45: #{eegnet_autoencoder_forward.1} parent=11 // pred_check
        %p451 = pneg %p239
      $region46: #{eegnet_autoencoder_forward.1} parent=11 // pred_check_branch
        %453 = sbr.rel (%p451) target = $region48
      $region47: #{eegnet_autoencoder_forward.1} parent=11 // pred_region
        _
      $region48: #{eegnet_autoencoder_forward.1} parent=11 // pred_fallthru
        _
      // Predicated region
      $region49: #{eegnet_autoencoder_forward.1} parent=11 // pred_check
        %p454 = pneg %p260
      $region50: #{eegnet_autoencoder_forward.1} parent=11 // pred_check_branch
        %456 = sbr.rel (%p454) target = $region52
      $region51: #{eegnet_autoencoder_forward.1} parent=11 // pred_region
        _
      $region52: #{eegnet_autoencoder_forward.1} parent=11 // pred_fallthru
        _
      // Predicated region
      $region53: #{eegnet_autoencoder_forward.1} parent=11 // pred_check
        %p457 = pneg %p281
      $region54: #{eegnet_autoencoder_forward.1} parent=11 // pred_check_branch
        %459 = sbr.rel (%p457) target = $region56
      $region55: #{eegnet_autoencoder_forward.1} parent=11 // pred_region
        _
      $region56: #{eegnet_autoencoder_forward.1} parent=11 // pred_fallthru
        _
      // Predicated region
      $region57: #{eegnet_autoencoder_forward.1} parent=11 // pred_check
        %p460 = pneg %p302
      $region58: #{eegnet_autoencoder_forward.1} parent=11 // pred_check_branch
        %462 = sbr.rel (%p460) target = $region60
      $region59: #{eegnet_autoencoder_forward.1} parent=11 // pred_region
        _
      $region60: #{eegnet_autoencoder_forward.1} parent=11 // pred_fallthru
        _
      // Predicated region
      $region61: #{eegnet_autoencoder_forward.1} parent=11 // pred_check
        %p463 = pneg %p323
      $region62: #{eegnet_autoencoder_forward.1} parent=11 // pred_check_branch
        %465 = sbr.rel (%p463) target = $region64
      $region63: #{eegnet_autoencoder_forward.1} parent=11 // pred_region
        _
      $region64: #{eegnet_autoencoder_forward.1} parent=11 // pred_fallthru
        _
      // Predicated region
      $region65: #{eegnet_autoencoder_forward.1} parent=11 // pred_check
        %p466 = pneg %p344
      $region66: #{eegnet_autoencoder_forward.1} parent=11 // pred_check_branch
        %468 = sbr.rel (%p466) target = $region68
      $region67: #{eegnet_autoencoder_forward.1} parent=11 // pred_region
        _
      $region68: #{eegnet_autoencoder_forward.1} parent=11 // pred_fallthru
        _
      // Predicated region
      $region69: #{eegnet_autoencoder_forward.1} parent=11 // pred_check
        %p469 = pneg %p365
      $region70: #{eegnet_autoencoder_forward.1} parent=11 // pred_check_branch
        %471 = sbr.rel (%p469) target = $region72
      $region71: #{eegnet_autoencoder_forward.1} parent=11 // pred_region
        _
      $region72: #{eegnet_autoencoder_forward.1} parent=11 // pred_fallthru
        _
      // Predicated region
      $region73: #{eegnet_autoencoder_forward.1} parent=11 // pred_check
        %p472 = pneg %p386
      $region74: #{eegnet_autoencoder_forward.1} parent=11 // pred_check_branch
        %474 = sbr.rel (%p472) target = $region76
      $region75: #{eegnet_autoencoder_forward.1} parent=11 // pred_region
        _
      $region76: #{eegnet_autoencoder_forward.1} parent=11 // pred_fallthru
        _
    $region12: #{eegnet_autoencoder_forward.1} parent=5 // pred_fallthru
      _
    %p475 = scmp.lt.s32.totalorder %s24, 2
    // Predicated region
    $region77: #{eegnet_autoencoder_forward.1} parent=5 // pred_check
      %p476 = pneg %p475
    $region78: #{eegnet_autoencoder_forward.1} parent=5 // pred_check_branch
      %478 = sbr.rel (%p476) target = $region80
    $region79: #{eegnet_autoencoder_forward.1} parent=5 // pred_region
      // Predicated region
      $region81: #{eegnet_autoencoder_forward.1} parent=79 // pred_check
        %p479 = pneg %p44
      $region82: #{eegnet_autoencoder_forward.1} parent=79 // pred_check_branch
        %481 = sbr.rel (%p479) target = $region84
      $region83: #{eegnet_autoencoder_forward.1} parent=79 // pred_region
        %p482 = scmp.lt.s32.totalorder %s24, 1
        %s483 = scalar_select %p482, %s24, 1
        %s484 = smul.addr %s483, 6
        %s485 = smul.addr %s484, 8
        %s486 = scalar_lea.vmem %s0, %s485
      $region84: #{eegnet_autoencoder_forward.1} parent=79 // pred_fallthru
        _
    $region80: #{eegnet_autoencoder_forward.1} parent=5 // pred_fallthru
      _
    %p487 = scmp.le.s32.totalorder 1, %s24
    %p488 = scmp.lt.s32.totalorder %s24, 3
    %p489 = pnand %p487, %p488
    %p490 = pneg %p489
    // Predicated region
    $region85: #{eegnet_autoencoder_forward.1} parent=5 // pred_check
      _
    $region86: #{eegnet_autoencoder_forward.1} parent=5 // pred_check_branch
      %492 = sbr.rel (%p489) target = $region88
    $region87: #{eegnet_autoencoder_forward.1} parent=5 // pred_region
      %s493 = ssub.s32 %s24, 1
      %p494 = scmp.lt.s32.totalorder %s29, 1
      %s495 = scalar_select %p494, %s29, 1
      %s496 = smul.addr %s495, 6
      %s497 = smul.addr %s496, 8
      %s498 = scalar_lea.vmem %s0, %s497
      %p499 = pneg %p50
      %p500 = pneg %p47
      %p501 = pneg %p71
      %p502 = pneg %p68
      %p503 = pneg %p92
      %p504 = pneg %p89
      %p505 = pneg %p113
      %p506 = pneg %p110
      %p507 = pneg %p134
      %p508 = pneg %p131
      %p509 = pneg %p155
      %p510 = pneg %p152
      %p511 = pneg %p176
      %p512 = pneg %p173
      %p513 = pneg %p197
      %p514 = pneg %p194
      %p515 = pneg %p218
      %p516 = pneg %p215
      %p517 = pneg %p239
      %p518 = pneg %p236
      %p519 = pneg %p260
      %p520 = pneg %p257
      %p521 = pneg %p281
      %p522 = pneg %p278
      %p523 = pneg %p302
      %p524 = pneg %p299
      %p525 = pneg %p323
      %p526 = pneg %p320
      %p527 = pneg %p344
      %p528 = pneg %p341
      %p529 = pneg %p365
      %p530 = pneg %p362
      %p531 = pneg %p386
      %p532 = pneg %p383
      %p533 = pneg %p412
      %p534 = pneg %p409
      %p535 = scmp.lt.s32.totalorder %s29, 1
      %s536 = scalar_select %p535, %s29, 1
      %s537 = smul.addr %s536, 6
      %s538 = smul.addr %s537, 8
      %s539 = scalar_lea.vmem %s17, %s538
      %p540 = scmp.lt.s32.totalorder %s29, 1
      %s541 = scalar_select %p540, %s29, 1
      %s542 = smul.addr %s541, 6
      %s543 = smul.addr %s542, 8
      %s544 = scalar_lea.vmem %s0, %s543
      %p545 = scmp.lt.s32.totalorder %s29, 1
      %s546 = scalar_select %p545, %s29, 1
      %s547 = smul.addr %s546, 6
      %s548 = smul.addr %s547, 8
      %s549 = scalar_lea.vmem %s17, %s548
      %v550 = vld [vmem:[%s544] sm:$0xff]
      %v551 = vld [vmem:[%s544 + $0x8] sm:$0xff]
      %v552 = vld [vmem:[%s544 + $0x10] sm:$0xff]
      %v553 = vld [vmem:[%s544 + $0x18] sm:$0xff]
      %v554 = vld [vmem:[%s544 + $0x20] sm:$0x7]
      %v555 = vld [vmem:[%s544 + $0x28] sm:$0x7]
      %v556 = vld [vmem:[%s15] sm:$0xff]
      %v557 = vld [vmem:[%s15 + $0x8] sm:$0xff]
      %v558 = vld [vmem:[%s15 + $0x10] sm:$0xff]
      %v559 = vld [vmem:[%s15 + $0x18] sm:$0xff]
      %v560 = vld [vmem:[%s15 + $0x20] sm:$0xff]
      %v561 = vld [vmem:[%s16] sm:$0xff]
      %v562 = vld [vmem:[%s2] sm:$0xff]
      %vm563 = vcmask 154624
      %v565 = vsel %vm563, %v562, 0
      %vm567 = vcmask 1042432
      %v569 = vsel %vm567, %v554, 0
      %v572 = vsel %vm567, %v555, 0
      %574 = vmatpush.msra.mxu0 0.0
      %575 = vmatpush.msra.mxu0 0.0
      %576 = vmatpush.msra.mxu0 0.0
      %577 = vmatpush.msra.mxu0 0.0
      %578 = vmatpush.msra.mxu0 0.0
      %579 = vmatpush.msra.mxu0 0.0
      %580 = vmatpush.msra.mxu0 0.0
      %581 = vmatpush.msra.mxu0 0.0
      %582 = vmatpush.msra.mxu0 0.0
      %583 = vmatpush.msra.mxu0 0.0
      %584 = vmatpush.msra.mxu0 0.0
      %585 = vmatpush.msra.mxu0 0.0
      %586 = vmatpush.msra.mxu0 0.0
      %587 = vmatpush.msra.mxu0 %v569
      %588 = vmatpush.msra.mxu0 %v552
      %589 = vmatpush.msra.mxu0 %v550
      %590 = vmatmul.f32.gmra.mxu0 %v565
      %v591 = vpop.f32.mrf.mxu0
      %v592 = vadd.f32 0.0, %v591
      %593 = vdwg.mxu0
      %594 = vmatpush.msra.mxu0 0.0
      %595 = vmatpush.msra.mxu0 0.0
      %596 = vmatpush.msra.mxu0 0.0
      %597 = vmatpush.msra.mxu0 0.0
      %598 = vmatpush.msra.mxu0 0.0
      %599 = vmatpush.msra.mxu0 0.0
      %600 = vmatpush.msra.mxu0 0.0
      %601 = vmatpush.msra.mxu0 0.0
      %602 = vmatpush.msra.mxu0 0.0
      %603 = vmatpush.msra.mxu0 0.0
      %604 = vmatpush.msra.mxu0 0.0
      %605 = vmatpush.msra.mxu0 0.0
      %606 = vmatpush.msra.mxu0 0.0
      %607 = vmatpush.msra.mxu0 %v572
      %608 = vmatpush.msra.mxu0 %v553
      %609 = vmatpush.msra.mxu0 %v551
      %610 = vmatmul.f32.gmra.mxu0 %v565
      %v611 = vpop.f32.mrf.mxu0
      %v612 = vadd.f32 0.0, %v611
      %613 = vdwg.mxu0
      %vm614 = vcmask 72704
      %615 = vst.msk [vmem:[#allocation2] sm:$0xff] %vm614, 0.0
      %vm616 = vcmask 745096
      %617 = vst.msk [vmem:[#allocation2 + $0x8] sm:$0xff] %vm616, 0.0
      %620 = vrot.lane.b32.xlu0 %v592, 9
      %v621 = vpop.permute.xlu0 %620
      %622 = vrot.lane.b32.xlu0 %v612, 9
      %v623 = vpop.permute.xlu0 %622
      %v624 = vsel %vm614, %v621, %v623
      %vm627 = vcmask 1047624
      %628 = vst.msk [vmem:[#allocation2] sm:$0xff] %vm627, %v621
      %vm629 = vcmask 662528
      %630 = vst.msk [vmem:[#allocation2 + $0x8] sm:$0xff] %vm629, %v624
      %v631 = vld [vmem:[#allocation2] sm:$0xff]
      %v632 = vld [vmem:[#allocation2 + $0x8] sm:$0xff]
      %v633 = vld [vmem:[%s5] sm:$0xff]
      %v634 = vld [vmem:[%s4] sm:$0xff]
      %v635 = vld [vmem:[%s4 + $0x8] sm:$0xff]
      %v636 = vld [vmem:[%s4 + $0x10] sm:$0xff]
      %v637 = vld [vmem:[%s4 + $0x18] sm:$0xff]
      %v638 = vld [vmem:[%s4 + $0x20] sm:$0xff]
      %v639 = vld [vmem:[%s4 + $0x28] sm:$0xff]
      %v640 = vld [vmem:[%s4 + $0x30] sm:$0xff]
      %v641 = vld [vmem:[%s4 + $0x38] sm:$0xff]
      %v642 = vld [vmem:[%s4 + $0x40] sm:$0xff]
      %v643 = vld [vmem:[%s4 + $0x48] sm:$0xff]
      %v644 = vld [vmem:[%s4 + $0x50] sm:$0xff]
      %v645 = vld [vmem:[%s4 + $0x58] sm:$0xff]
      %v646 = vld [vmem:[%s4 + $0x60] sm:$0xff]
      %v647 = vld [vmem:[%s4 + $0x68] sm:$0xff]
      %v648 = vld [vmem:[%s4 + $0x70] sm:$0xff]
      %v649 = vld [vmem:[%s4 + $0x78] sm:$0xff]
      %v650 = vld [vmem:[%s4 + $0x80] sm:$0xff]
      %v651 = vld [vmem:[%s4 + $0x88] sm:$0xff]
      %v652 = vld [vmem:[%s4 + $0x90] sm:$0xff]
      %v653 = vld [vmem:[%s4 + $0x98] sm:$0xff]
      %v654 = vld [vmem:[%s4 + $0xa0] sm:$0xff]
      %v655 = vld [vmem:[%s4 + $0xa8] sm:$0xff]
      %v656 = vld [vmem:[%s4 + $0xb0] sm:$0xff]
      %v657 = vld [vmem:[%s4 + $0xb8] sm:$0xff]
      %v658 = vld [vmem:[%s4 + $0xc0] sm:$0xff]
      %v659 = vld [vmem:[%s4 + $0xc8] sm:$0xff]
      %v660 = vld [vmem:[%s4 + $0xd0] sm:$0xff]
      %v661 = vld [vmem:[%s4 + $0xd8] sm:$0xff]
      %v662 = vld [vmem:[%s4 + $0xe0] sm:$0xff]
      %v663 = vld [vmem:[%s4 + $0xe8] sm:$0xff]
      %v664 = vld [vmem:[%s4 + $0xf0] sm:$0xff]
      %v665 = vld [vmem:[%s4 + $0xf8] sm:$0xff]
      %v666 = vld [vmem:[%s4 + $0x100] sm:$0xff]
      %v667 = vld [vmem:[%s4 + $0x108] sm:$0xff]
      %v668 = vld [vmem:[%s4 + $0x110] sm:$0xff]
      %v669 = vld [vmem:[%s4 + $0x118] sm:$0xff]
      %v670 = vld [vmem:[%s4 + $0x120] sm:$0xff]
      %v671 = vld [vmem:[%s4 + $0x128] sm:$0xff]
      %v672 = vld [vmem:[%s4 + $0x130] sm:$0xff]
      %v673 = vld [vmem:[%s4 + $0x138] sm:$0xff]
      %v674 = vld [vmem:[%s4 + $0x140] sm:$0xff]
      %v675 = vld [vmem:[%s4 + $0x148] sm:$0xff]
      %v676 = vld [vmem:[%s4 + $0x150] sm:$0xff]
      %v677 = vld [vmem:[%s4 + $0x158] sm:$0xff]
      %v678 = vld [vmem:[%s4 + $0x160] sm:$0xff]
      %v679 = vld [vmem:[%s4 + $0x168] sm:$0xff]
      %v680 = vld [vmem:[%s4 + $0x170] sm:$0xff]
      %v681 = vld [vmem:[%s4 + $0x178] sm:$0xff]
      %v682 = vld [vmem:[%s4 + $0x180] sm:$0xff]
      %v683 = vld [vmem:[%s4 + $0x188] sm:$0xff]
      %v684 = vld [vmem:[%s4 + $0x190] sm:$0xff]
      %v685 = vld [vmem:[%s4 + $0x198] sm:$0xff]
      %v686 = vld [vmem:[%s4 + $0x1a0] sm:$0xff]
      %v687 = vld [vmem:[%s4 + $0x1a8] sm:$0xff]
      %v688 = vld [vmem:[%s4 + $0x1b0] sm:$0x7]
      %v689 = vld [vmem:[%s4 + $0x1b8] sm:$0x7]
      %vm690 = vcmask 744448
      %v692 = vsel %vm690, %v632, 0
      %v695 = vsel %vm567, %v688, 0
      %v698 = vsel %vm567, %v689, 0
      %700 = vmatpush.msra.mxu0 %v664
      %701 = vmatpush.msra.mxu0 %v662
      %702 = vmatpush.msra.mxu0 %v660
      %703 = vmatpush.msra.mxu0 %v658
      %704 = vmatpush.msra.mxu0 %v656
      %705 = vmatpush.msra.mxu0 %v654
      %706 = vmatpush.msra.mxu0 %v652
      %707 = vmatpush.msra.mxu0 %v650
      %708 = vmatpush.msra.mxu0 %v648
      %709 = vmatpush.msra.mxu0 %v646
      %710 = vmatpush.msra.mxu0 %v644
      %711 = vmatpush.msra.mxu0 %v642
      %712 = vmatpush.msra.mxu0 %v640
      %713 = vmatpush.msra.mxu0 %v638
      %714 = vmatpush.msra.mxu0 %v636
      %715 = vmatpush.msra.mxu0 %v634
      %716 = vmatmul.f32.gmra.mxu0 %v631
      %v717 = vpop.f32.mrf.mxu0
      %v718 = vadd.f32 0.0, %v717
      %719 = vdwg.mxu0
      %720 = vmatpush.msra.mxu0 0.0
      %721 = vmatpush.msra.mxu0 0.0
      %722 = vmatpush.msra.mxu0 0.0
      %723 = vmatpush.msra.mxu0 0.0
      %724 = vmatpush.msra.mxu0 %v695
      %725 = vmatpush.msra.mxu0 %v686
      %726 = vmatpush.msra.mxu0 %v684
      %727 = vmatpush.msra.mxu0 %v682
      %728 = vmatpush.msra.mxu0 %v680
      %729 = vmatpush.msra.mxu0 %v678
      %730 = vmatpush.msra.mxu0 %v676
      %731 = vmatpush.msra.mxu0 %v674
      %732 = vmatpush.msra.mxu0 %v672
      %733 = vmatpush.msra.mxu0 %v670
      %734 = vmatpush.msra.mxu0 %v668
      %735 = vmatpush.msra.mxu0 %v666
      %736 = vmatmul.f32.gmra.mxu0 %v692
      %v737 = vpop.f32.mrf.mxu0
      %v738 = vadd.f32 %v718, %v737
      %739 = vdwg.mxu0
      %740 = vmatpush.msra.mxu0 %v665
      %741 = vmatpush.msra.mxu0 %v663
      %742 = vmatpush.msra.mxu0 %v661
      %743 = vmatpush.msra.mxu0 %v659
      %744 = vmatpush.msra.mxu0 %v657
      %745 = vmatpush.msra.mxu0 %v655
      %746 = vmatpush.msra.mxu0 %v653
      %747 = vmatpush.msra.mxu0 %v651
      %748 = vmatpush.msra.mxu0 %v649
      %749 = vmatpush.msra.mxu0 %v647
      %750 = vmatpush.msra.mxu0 %v645
      %751 = vmatpush.msra.mxu0 %v643
      %752 = vmatpush.msra.mxu0 %v641
      %753 = vmatpush.msra.mxu0 %v639
      %754 = vmatpush.msra.mxu0 %v637
      %755 = vmatpush.msra.mxu0 %v635
      %756 = vmatmul.f32.gmra.mxu0 %v631
      %v757 = vpop.f32.mrf.mxu0
      %v758 = vadd.f32 0.0, %v757
      %759 = vdwg.mxu0
      %760 = vmatpush.msra.mxu0 0.0
      %761 = vmatpush.msra.mxu0 0.0
      %762 = vmatpush.msra.mxu0 0.0
      %763 = vmatpush.msra.mxu0 0.0
      %764 = vmatpush.msra.mxu0 %v698
      %765 = vmatpush.msra.mxu0 %v687
      %766 = vmatpush.msra.mxu0 %v685
      %767 = vmatpush.msra.mxu0 %v683
      %768 = vmatpush.msra.mxu0 %v681
      %769 = vmatpush.msra.mxu0 %v679
      %770 = vmatpush.msra.mxu0 %v677
      %771 = vmatpush.msra.mxu0 %v675
      %772 = vmatpush.msra.mxu0 %v673
      %773 = vmatpush.msra.mxu0 %v671
      %774 = vmatpush.msra.mxu0 %v669
      %775 = vmatpush.msra.mxu0 %v667
      %776 = vmatmul.f32.gmra.mxu0 %v692
      %v777 = vpop.f32.mrf.mxu0
      %v778 = vadd.f32 %v758, %v777
      %779 = vdwg.mxu0
      %781 = vset.pattern.permute.xlu0 0
      %782 = vperm.xlu0 %781, %v633
      %v783 = vpop.permute.xlu0 %782
      %v785 = vmul.f32 %v783, %v738
      %v786 = vmul.f32 %v783, %v778
      %v787 = vadd.f32 %v785, 0.0
      %v788 = vadd.f32 %v786, 0.0
      %s789 = scalar_lea.vmem %s5, 8
      %v790 = vld [vmem:[%s789] sm:$0xff]
      %s791 = scalar_lea.vmem %s4, 448
      %v792 = vld [vmem:[%s791] sm:$0xff]
      %v793 = vld [vmem:[%s791 + $0x8] sm:$0xff]
      %v794 = vld [vmem:[%s791 + $0x10] sm:$0xff]
      %v795 = vld [vmem:[%s791 + $0x18] sm:$0xff]
      %v796 = vld [vmem:[%s791 + $0x20] sm:$0xff]
      %v797 = vld [vmem:[%s791 + $0x28] sm:$0xff]
      %v798 = vld [vmem:[%s791 + $0x30] sm:$0xff]
      %v799 = vld [vmem:[%s791 + $0x38] sm:$0xff]
      %v800 = vld [vmem:[%s791 + $0x40] sm:$0xff]
      %v801 = vld [vmem:[%s791 + $0x48] sm:$0xff]
      %v802 = vld [vmem:[%s791 + $0x50] sm:$0xff]
      %v803 = vld [vmem:[%s791 + $0x58] sm:$0xff]
      %v804 = vld [vmem:[%s791 + $0x60] sm:$0xff]
      %v805 = vld [vmem:[%s791 + $0x68] sm:$0xff]
      %v806 = vld [vmem:[%s791 + $0x70] sm:$0xff]
      %v807 = vld [vmem:[%s791 + $0x78] sm:$0xff]
      %v808 = vld [vmem:[%s791 + $0x80] sm:$0xff]
      %v809 = vld [vmem:[%s791 + $0x88] sm:$0xff]
      %v810 = vld [vmem:[%s791 + $0x90] sm:$0xff]
      %v811 = vld [vmem:[%s791 + $0x98] sm:$0xff]
      %v812 = vld [vmem:[%s791 + $0xa0] sm:$0xff]
      %v813 = vld [vmem:[%s791 + $0xa8] sm:$0xff]
      %v814 = vld [vmem:[%s791 + $0xb0] sm:$0xff]
      %v815 = vld [vmem:[%s791 + $0xb8] sm:$0xff]
      %v816 = vld [vmem:[%s791 + $0xc0] sm:$0xff]
      %v817 = vld [vmem:[%s791 + $0xc8] sm:$0xff]
      %v818 = vld [vmem:[%s791 + $0xd0] sm:$0xff]
      %v819 = vld [vmem:[%s791 + $0xd8] sm:$0xff]
      %v820 = vld [vmem:[%s791 + $0xe0] sm:$0xff]
      %v821 = vld [vmem:[%s791 + $0xe8] sm:$0xff]
      %v822 = vld [vmem:[%s791 + $0xf0] sm:$0xff]
      %v823 = vld [vmem:[%s791 + $0xf8] sm:$0xff]
      %v824 = vld [vmem:[%s791 + $0x100] sm:$0xff]
      %v825 = vld [vmem:[%s791 + $0x108] sm:$0xff]
      %v826 = vld [vmem:[%s791 + $0x110] sm:$0xff]
      %v827 = vld [vmem:[%s791 + $0x118] sm:$0xff]
      %v828 = vld [vmem:[%s791 + $0x120] sm:$0xff]
      %v829 = vld [vmem:[%s791 + $0x128] sm:$0xff]
      %v830 = vld [vmem:[%s791 + $0x130] sm:$0xff]
      %v831 = vld [vmem:[%s791 + $0x138] sm:$0xff]
      %v832 = vld [vmem:[%s791 + $0x140] sm:$0xff]
      %v833 = vld [vmem:[%s791 + $0x148] sm:$0xff]
      %v834 = vld [vmem:[%s791 + $0x150] sm:$0xff]
      %v835 = vld [vmem:[%s791 + $0x158] sm:$0xff]
      %v836 = vld [vmem:[%s791 + $0x160] sm:$0xff]
      %v837 = vld [vmem:[%s791 + $0x168] sm:$0xff]
      %v838 = vld [vmem:[%s791 + $0x170] sm:$0xff]
      %v839 = vld [vmem:[%s791 + $0x178] sm:$0xff]
      %v840 = vld [vmem:[%s791 + $0x180] sm:$0xff]
      %v841 = vld [vmem:[%s791 + $0x188] sm:$0xff]
      %v842 = vld [vmem:[%s791 + $0x190] sm:$0xff]
      %v843 = vld [vmem:[%s791 + $0x198] sm:$0xff]
      %v844 = vld [vmem:[%s791 + $0x1a0] sm:$0xff]
      %v845 = vld [vmem:[%s791 + $0x1a8] sm:$0xff]
      %v846 = vld [vmem:[%s791 + $0x1b0] sm:$0x7]
      %v847 = vld [vmem:[%s791 + $0x1b8] sm:$0x7]
      %v849 = vsel %vm567, %v846, 0
      %v852 = vsel %vm567, %v847, 0
      %854 = vmatpush.msra.mxu0 %v822
      %855 = vmatpush.msra.mxu0 %v820
      %856 = vmatpush.msra.mxu0 %v818
      %857 = vmatpush.msra.mxu0 %v816
      %858 = vmatpush.msra.mxu0 %v814
      %859 = vmatpush.msra.mxu0 %v812
      %860 = vmatpush.msra.mxu0 %v810
      %861 = vmatpush.msra.mxu0 %v808
      %862 = vmatpush.msra.mxu0 %v806
      %863 = vmatpush.msra.mxu0 %v804
      %864 = vmatpush.msra.mxu0 %v802
      %865 = vmatpush.msra.mxu0 %v800
      %866 = vmatpush.msra.mxu0 %v798
      %867 = vmatpush.msra.mxu0 %v796
      %868 = vmatpush.msra.mxu0 %v794
      %869 = vmatpush.msra.mxu0 %v792
      %870 = vmatmul.f32.gmra.mxu0 %v631
      %v871 = vpop.f32.mrf.mxu0
      %v872 = vadd.f32 0.0, %v871
      %873 = vdwg.mxu0
      %874 = vmatpush.msra.mxu0 0.0
      %875 = vmatpush.msra.mxu0 0.0
      %876 = vmatpush.msra.mxu0 0.0
      %877 = vmatpush.msra.mxu0 0.0
      %878 = vmatpush.msra.mxu0 %v849
      %879 = vmatpush.msra.mxu0 %v844
      %880 = vmatpush.msra.mxu0 %v842
      %881 = vmatpush.msra.mxu0 %v840
      %882 = vmatpush.msra.mxu0 %v838
      %883 = vmatpush.msra.mxu0 %v836
      %884 = vmatpush.msra.mxu0 %v834
      %885 = vmatpush.msra.mxu0 %v832
      %886 = vmatpush.msra.mxu0 %v830
      %887 = vmatpush.msra.mxu0 %v828
      %888 = vmatpush.msra.mxu0 %v826
      %889 = vmatpush.msra.mxu0 %v824
      %890 = vmatmul.f32.gmra.mxu0 %v692
      %v891 = vpop.f32.mrf.mxu0
      %v892 = vadd.f32 %v872, %v891
      %893 = vdwg.mxu0
      %894 = vmatpush.msra.mxu0 %v823
      %895 = vmatpush.msra.mxu0 %v821
      %896 = vmatpush.msra.mxu0 %v819
      %897 = vmatpush.msra.mxu0 %v817
      %898 = vmatpush.msra.mxu0 %v815
      %899 = vmatpush.msra.mxu0 %v813
      %900 = vmatpush.msra.mxu0 %v811
      %901 = vmatpush.msra.mxu0 %v809
      %902 = vmatpush.msra.mxu0 %v807
      %903 = vmatpush.msra.mxu0 %v805
      %904 = vmatpush.msra.mxu0 %v803
      %905 = vmatpush.msra.mxu0 %v801
      %906 = vmatpush.msra.mxu0 %v799
      %907 = vmatpush.msra.mxu0 %v797
      %908 = vmatpush.msra.mxu0 %v795
      %909 = vmatpush.msra.mxu0 %v793
      %910 = vmatmul.f32.gmra.mxu0 %v631
      %v911 = vpop.f32.mrf.mxu0
      %v912 = vadd.f32 0.0, %v911
      %913 = vdwg.mxu0
      %914 = vmatpush.msra.mxu0 0.0
      %915 = vmatpush.msra.mxu0 0.0
      %916 = vmatpush.msra.mxu0 0.0
      %917 = vmatpush.msra.mxu0 0.0
      %918 = vmatpush.msra.mxu0 %v852
      %919 = vmatpush.msra.mxu0 %v845
      %920 = vmatpush.msra.mxu0 %v843
      %921 = vmatpush.msra.mxu0 %v841
      %922 = vmatpush.msra.mxu0 %v839
      %923 = vmatpush.msra.mxu0 %v837
      %924 = vmatpush.msra.mxu0 %v835
      %925 = vmatpush.msra.mxu0 %v833
      %926 = vmatpush.msra.mxu0 %v831
      %927 = vmatpush.msra.mxu0 %v829
      %928 = vmatpush.msra.mxu0 %v827
      %929 = vmatpush.msra.mxu0 %v825
      %930 = vmatmul.f32.gmra.mxu0 %v692
      %v931 = vpop.f32.mrf.mxu0
      %v932 = vadd.f32 %v912, %v931
      %933 = vdwg.mxu0
      %935 = vset.pattern.permute.xlu0 0
      %936 = vperm.xlu0 %935, %v790
      %v937 = vpop.permute.xlu0 %936
      %v939 = vmul.f32 %v937, %v892
      %v940 = vmul.f32 %v937, %v932
      %v941 = vadd.f32 %v787, %v939
      %v942 = vadd.f32 %v788, %v940
      %s943 = scalar_lea.vmem %s5, 16
      %v944 = vld [vmem:[%s943] sm:$0xff]
      %s945 = scalar_lea.vmem %s4, 896
      %v946 = vld [vmem:[%s945] sm:$0xff]
      %v947 = vld [vmem:[%s945 + $0x8] sm:$0xff]
      %v948 = vld [vmem:[%s945 + $0x10] sm:$0xff]
      %v949 = vld [vmem:[%s945 + $0x18] sm:$0xff]
      %v950 = vld [vmem:[%s945 + $0x20] sm:$0xff]
      %v951 = vld [vmem:[%s945 + $0x28] sm:$0xff]
      %v952 = vld [vmem:[%s945 + $0x30] sm:$0xff]
      %v953 = vld [vmem:[%s945 + $0x38] sm:$0xff]
      %v954 = vld [vmem:[%s945 + $0x40] sm:$0xff]
      %v955 = vld [vmem:[%s945 + $0x48] sm:$0xff]
      %v956 = vld [vmem:[%s945 + $0x50] sm:$0xff]
      %v957 = vld [vmem:[%s945 + $0x58] sm:$0xff]
      %v958 = vld [vmem:[%s945 + $0x60] sm:$0xff]
      %v959 = vld [vmem:[%s945 + $0x68] sm:$0xff]
      %v960 = vld [vmem:[%s945 + $0x70] sm:$0xff]
      %v961 = vld [vmem:[%s945 + $0x78] sm:$0xff]
      %v962 = vld [vmem:[%s945 + $0x80] sm:$0xff]
      %v963 = vld [vmem:[%s945 + $0x88] sm:$0xff]
      %v964 = vld [vmem:[%s945 + $0x90] sm:$0xff]
      %v965 = vld [vmem:[%s945 + $0x98] sm:$0xff]
      %v966 = vld [vmem:[%s945 + $0xa0] sm:$0xff]
      %v967 = vld [vmem:[%s945 + $0xa8] sm:$0xff]
      %v968 = vld [vmem:[%s945 + $0xb0] sm:$0xff]
      %v969 = vld [vmem:[%s945 + $0xb8] sm:$0xff]
      %v970 = vld [vmem:[%s945 + $0xc0] sm:$0xff]
      %v971 = vld [vmem:[%s945 + $0xc8] sm:$0xff]
      %v972 = vld [vmem:[%s945 + $0xd0] sm:$0xff]
      %v973 = vld [vmem:[%s945 + $0xd8] sm:$0xff]
      %v974 = vld [vmem:[%s945 + $0xe0] sm:$0xff]
      %v975 = vld [vmem:[%s945 + $0xe8] sm:$0xff]
      %v976 = vld [vmem:[%s945 + $0xf0] sm:$0xff]
      %v977 = vld [vmem:[%s945 + $0xf8] sm:$0xff]
      %v978 = vld [vmem:[%s945 + $0x100] sm:$0xff]
      %v979 = vld [vmem:[%s945 + $0x108] sm:$0xff]
      %v980 = vld [vmem:[%s945 + $0x110] sm:$0xff]
      %v981 = vld [vmem:[%s945 + $0x118] sm:$0xff]
      %v982 = vld [vmem:[%s945 + $0x120] sm:$0xff]
      %v983 = vld [vmem:[%s945 + $0x128] sm:$0xff]
      %v984 = vld [vmem:[%s945 + $0x130] sm:$0xff]
      %v985 = vld [vmem:[%s945 + $0x138] sm:$0xff]
      %v986 = vld [vmem:[%s945 + $0x140] sm:$0xff]
      %v987 = vld [vmem:[%s945 + $0x148] sm:$0xff]
      %v988 = vld [vmem:[%s945 + $0x150] sm:$0xff]
      %v989 = vld [vmem:[%s945 + $0x158] sm:$0xff]
      %v990 = vld [vmem:[%s945 + $0x160] sm:$0xff]
      %v991 = vld [vmem:[%s945 + $0x168] sm:$0xff]
      %v992 = vld [vmem:[%s945 + $0x170] sm:$0xff]
      %v993 = vld [vmem:[%s945 + $0x178] sm:$0xff]
      %v994 = vld [vmem:[%s945 + $0x180] sm:$0xff]
      %v995 = vld [vmem:[%s945 + $0x188] sm:$0xff]
      %v996 = vld [vmem:[%s945 + $0x190] sm:$0xff]
      %v997 = vld [vmem:[%s945 + $0x198] sm:$0xff]
      %v998 = vld [vmem:[%s945 + $0x1a0] sm:$0xff]
      %v999 = vld [vmem:[%s945 + $0x1a8] sm:$0xff]
      %v1000 = vld [vmem:[%s945 + $0x1b0] sm:$0x7]
      %v1001 = vld [vmem:[%s945 + $0x1b8] sm:$0x7]
      %v1003 = vsel %vm567, %v1000, 0
      %v1006 = vsel %vm567, %v1001, 0
      %1008 = vmatpush.msra.mxu0 %v976
      %1009 = vmatpush.msra.mxu0 %v974
      %1010 = vmatpush.msra.mxu0 %v972
      %1011 = vmatpush.msra.mxu0 %v970
      %1012 = vmatpush.msra.mxu0 %v968
      %1013 = vmatpush.msra.mxu0 %v966
      %1014 = vmatpush.msra.mxu0 %v964
      %1015 = vmatpush.msra.mxu0 %v962
      %1016 = vmatpush.msra.mxu0 %v960
      %1017 = vmatpush.msra.mxu0 %v958
      %1018 = vmatpush.msra.mxu0 %v956
      %1019 = vmatpush.msra.mxu0 %v954
      %1020 = vmatpush.msra.mxu0 %v952
      %1021 = vmatpush.msra.mxu0 %v950
      %1022 = vmatpush.msra.mxu0 %v948
      %1023 = vmatpush.msra.mxu0 %v946
      %1024 = vmatmul.f32.gmra.mxu0 %v631
      %v1025 = vpop.f32.mrf.mxu0
      %v1026 = vadd.f32 0.0, %v1025
      %1027 = vdwg.mxu0
      %1028 = vmatpush.msra.mxu0 0.0
      %1029 = vmatpush.msra.mxu0 0.0
      %1030 = vmatpush.msra.mxu0 0.0
      %1031 = vmatpush.msra.mxu0 0.0
      %1032 = vmatpush.msra.mxu0 %v1003
      %1033 = vmatpush.msra.mxu0 %v998
      %1034 = vmatpush.msra.mxu0 %v996
      %1035 = vmatpush.msra.mxu0 %v994
      %1036 = vmatpush.msra.mxu0 %v992
      %1037 = vmatpush.msra.mxu0 %v990
      %1038 = vmatpush.msra.mxu0 %v988
      %1039 = vmatpush.msra.mxu0 %v986
      %1040 = vmatpush.msra.mxu0 %v984
      %1041 = vmatpush.msra.mxu0 %v982
      %1042 = vmatpush.msra.mxu0 %v980
      %1043 = vmatpush.msra.mxu0 %v978
      %1044 = vmatmul.f32.gmra.mxu0 %v692
      %v1045 = vpop.f32.mrf.mxu0
      %v1046 = vadd.f32 %v1026, %v1045
      %1047 = vdwg.mxu0
      %1048 = vmatpush.msra.mxu0 %v977
      %1049 = vmatpush.msra.mxu0 %v975
      %1050 = vmatpush.msra.mxu0 %v973
      %1051 = vmatpush.msra.mxu0 %v971
      %1052 = vmatpush.msra.mxu0 %v969
      %1053 = vmatpush.msra.mxu0 %v967
      %1054 = vmatpush.msra.mxu0 %v965
      %1055 = vmatpush.msra.mxu0 %v963
      %1056 = vmatpush.msra.mxu0 %v961
      %1057 = vmatpush.msra.mxu0 %v959
      %1058 = vmatpush.msra.mxu0 %v957
      %1059 = vmatpush.msra.mxu0 %v955
      %1060 = vmatpush.msra.mxu0 %v953
      %1061 = vmatpush.msra.mxu0 %v951
      %1062 = vmatpush.msra.mxu0 %v949
      %1063 = vmatpush.msra.mxu0 %v947
      %1064 = vmatmul.f32.gmra.mxu0 %v631
      %v1065 = vpop.f32.mrf.mxu0
      %v1066 = vadd.f32 0.0, %v1065
      %1067 = vdwg.mxu0
      %1068 = vmatpush.msra.mxu0 0.0
      %1069 = vmatpush.msra.mxu0 0.0
      %1070 = vmatpush.msra.mxu0 0.0
      %1071 = vmatpush.msra.mxu0 0.0
      %1072 = vmatpush.msra.mxu0 %v1006
      %1073 = vmatpush.msra.mxu0 %v999
      %1074 = vmatpush.msra.mxu0 %v997
      %1075 = vmatpush.msra.mxu0 %v995
      %1076 = vmatpush.msra.mxu0 %v993
      %1077 = vmatpush.msra.mxu0 %v991
      %1078 = vmatpush.msra.mxu0 %v989
      %1079 = vmatpush.msra.mxu0 %v987
      %1080 = vmatpush.msra.mxu0 %v985
      %1081 = vmatpush.msra.mxu0 %v983
      %1082 = vmatpush.msra.mxu0 %v981
      %1083 = vmatpush.msra.mxu0 %v979
      %1084 = vmatmul.f32.gmra.mxu0 %v692
      %v1085 = vpop.f32.mrf.mxu0
      %v1086 = vadd.f32 %v1066, %v1085
      %1087 = vdwg.mxu0
      %1089 = vset.pattern.permute.xlu0 0
      %1090 = vperm.xlu0 %1089, %v944
      %v1091 = vpop.permute.xlu0 %1090
      %v1093 = vmul.f32 %v1091, %v1046
      %v1094 = vmul.f32 %v1091, %v1086
      %v1095 = vadd.f32 %v941, %v1093
      %v1096 = vadd.f32 %v942, %v1094
      %s1097 = scalar_lea.vmem %s5, 24
      %v1098 = vld [vmem:[%s1097] sm:$0xff]
      %s1099 = scalar_lea.vmem %s4, 1344
      %v1100 = vld [vmem:[%s1099] sm:$0xff]
      %v1101 = vld [vmem:[%s1099 + $0x8] sm:$0xff]
      %v1102 = vld [vmem:[%s1099 + $0x10] sm:$0xff]
      %v1103 = vld [vmem:[%s1099 + $0x18] sm:$0xff]
      %v1104 = vld [vmem:[%s1099 + $0x20] sm:$0xff]
      %v1105 = vld [vmem:[%s1099 + $0x28] sm:$0xff]
      %v1106 = vld [vmem:[%s1099 + $0x30] sm:$0xff]
      %v1107 = vld [vmem:[%s1099 + $0x38] sm:$0xff]
      %v1108 = vld [vmem:[%s1099 + $0x40] sm:$0xff]
      %v1109 = vld [vmem:[%s1099 + $0x48] sm:$0xff]
      %v1110 = vld [vmem:[%s1099 + $0x50] sm:$0xff]
      %v1111 = vld [vmem:[%s1099 + $0x58] sm:$0xff]
      %v1112 = vld [vmem:[%s1099 + $0x60] sm:$0xff]
      %v1113 = vld [vmem:[%s1099 + $0x68] sm:$0xff]
      %v1114 = vld [vmem:[%s1099 + $0x70] sm:$0xff]
      %v1115 = vld [vmem:[%s1099 + $0x78] sm:$0xff]
      %v1116 = vld [vmem:[%s1099 + $0x80] sm:$0xff]
      %v1117 = vld [vmem:[%s1099 + $0x88] sm:$0xff]
      %v1118 = vld [vmem:[%s1099 + $0x90] sm:$0xff]
      %v1119 = vld [vmem:[%s1099 + $0x98] sm:$0xff]
      %v1120 = vld [vmem:[%s1099 + $0xa0] sm:$0xff]
      %v1121 = vld [vmem:[%s1099 + $0xa8] sm:$0xff]
      %v1122 = vld [vmem:[%s1099 + $0xb0] sm:$0xff]
      %v1123 = vld [vmem:[%s1099 + $0xb8] sm:$0xff]
      %v1124 = vld [vmem:[%s1099 + $0xc0] sm:$0xff]
      %v1125 = vld [vmem:[%s1099 + $0xc8] sm:$0xff]
      %v1126 = vld [vmem:[%s1099 + $0xd0] sm:$0xff]
      %v1127 = vld [vmem:[%s1099 + $0xd8] sm:$0xff]
      %v1128 = vld [vmem:[%s1099 + $0xe0] sm:$0xff]
      %v1129 = vld [vmem:[%s1099 + $0xe8] sm:$0xff]
      %v1130 = vld [vmem:[%s1099 + $0xf0] sm:$0xff]
      %v1131 = vld [vmem:[%s1099 + $0xf8] sm:$0xff]
      %v1132 = vld [vmem:[%s1099 + $0x100] sm:$0xff]
      %v1133 = vld [vmem:[%s1099 + $0x108] sm:$0xff]
      %v1134 = vld [vmem:[%s1099 + $0x110] sm:$0xff]
      %v1135 = vld [vmem:[%s1099 + $0x118] sm:$0xff]
      %v1136 = vld [vmem:[%s1099 + $0x120] sm:$0xff]
      %v1137 = vld [vmem:[%s1099 + $0x128] sm:$0xff]
      %v1138 = vld [vmem:[%s1099 + $0x130] sm:$0xff]
      %v1139 = vld [vmem:[%s1099 + $0x138] sm:$0xff]
      %v1140 = vld [vmem:[%s1099 + $0x140] sm:$0xff]
      %v1141 = vld [vmem:[%s1099 + $0x148] sm:$0xff]
      %v1142 = vld [vmem:[%s1099 + $0x150] sm:$0xff]
      %v1143 = vld [vmem:[%s1099 + $0x158] sm:$0xff]
      %v1144 = vld [vmem:[%s1099 + $0x160] sm:$0xff]
      %v1145 = vld [vmem:[%s1099 + $0x168] sm:$0xff]
      %v1146 = vld [vmem:[%s1099 + $0x170] sm:$0xff]
      %v1147 = vld [vmem:[%s1099 + $0x178] sm:$0xff]
      %v1148 = vld [vmem:[%s1099 + $0x180] sm:$0xff]
      %v1149 = vld [vmem:[%s1099 + $0x188] sm:$0xff]
      %v1150 = vld [vmem:[%s1099 + $0x190] sm:$0xff]
      %v1151 = vld [vmem:[%s1099 + $0x198] sm:$0xff]
      %v1152 = vld [vmem:[%s1099 + $0x1a0] sm:$0xff]
      %v1153 = vld [vmem:[%s1099 + $0x1a8] sm:$0xff]
      %v1154 = vld [vmem:[%s1099 + $0x1b0] sm:$0x7]
      %v1155 = vld [vmem:[%s1099 + $0x1b8] sm:$0x7]
      %v1157 = vsel %vm567, %v1154, 0
      %v1160 = vsel %vm567, %v1155, 0
      %1162 = vmatpush.msra.mxu0 %v1130
      %1163 = vmatpush.msra.mxu0 %v1128
      %1164 = vmatpush.msra.mxu0 %v1126
      %1165 = vmatpush.msra.mxu0 %v1124
      %1166 = vmatpush.msra.mxu0 %v1122
      %1167 = vmatpush.msra.mxu0 %v1120
      %1168 = vmatpush.msra.mxu0 %v1118
      %1169 = vmatpush.msra.mxu0 %v1116
      %1170 = vmatpush.msra.mxu0 %v1114
      %1171 = vmatpush.msra.mxu0 %v1112
      %1172 = vmatpush.msra.mxu0 %v1110
      %1173 = vmatpush.msra.mxu0 %v1108
      %1174 = vmatpush.msra.mxu0 %v1106
      %1175 = vmatpush.msra.mxu0 %v1104
      %1176 = vmatpush.msra.mxu0 %v1102
      %1177 = vmatpush.msra.mxu0 %v1100
      %1178 = vmatmul.f32.gmra.mxu0 %v631
      %v1179 = vpop.f32.mrf.mxu0
      %v1180 = vadd.f32 0.0, %v1179
      %1181 = vdwg.mxu0
      %1182 = vmatpush.msra.mxu0 0.0
      %1183 = vmatpush.msra.mxu0 0.0
      %1184 = vmatpush.msra.mxu0 0.0
      %1185 = vmatpush.msra.mxu0 0.0
      %1186 = vmatpush.msra.mxu0 %v1157
      %1187 = vmatpush.msra.mxu0 %v1152
      %1188 = vmatpush.msra.mxu0 %v1150
      %1189 = vmatpush.msra.mxu0 %v1148
      %1190 = vmatpush.msra.mxu0 %v1146
      %1191 = vmatpush.msra.mxu0 %v1144
      %1192 = vmatpush.msra.mxu0 %v1142
      %1193 = vmatpush.msra.mxu0 %v1140
      %1194 = vmatpush.msra.mxu0 %v1138
      %1195 = vmatpush.msra.mxu0 %v1136
      %1196 = vmatpush.msra.mxu0 %v1134
      %1197 = vmatpush.msra.mxu0 %v1132
      %1198 = vmatmul.f32.gmra.mxu0 %v692
      %v1199 = vpop.f32.mrf.mxu0
      %v1200 = vadd.f32 %v1180, %v1199
      %1201 = vdwg.mxu0
      %1202 = vmatpush.msra.mxu0 %v1131
      %1203 = vmatpush.msra.mxu0 %v1129
      %1204 = vmatpush.msra.mxu0 %v1127
      %1205 = vmatpush.msra.mxu0 %v1125
      %1206 = vmatpush.msra.mxu0 %v1123
      %1207 = vmatpush.msra.mxu0 %v1121
      %1208 = vmatpush.msra.mxu0 %v1119
      %1209 = vmatpush.msra.mxu0 %v1117
      %1210 = vmatpush.msra.mxu0 %v1115
      %1211 = vmatpush.msra.mxu0 %v1113
      %1212 = vmatpush.msra.mxu0 %v1111
      %1213 = vmatpush.msra.mxu0 %v1109
      %1214 = vmatpush.msra.mxu0 %v1107
      %1215 = vmatpush.msra.mxu0 %v1105
      %1216 = vmatpush.msra.mxu0 %v1103
      %1217 = vmatpush.msra.mxu0 %v1101
      %1218 = vmatmul.f32.gmra.mxu0 %v631
      %v1219 = vpop.f32.mrf.mxu0
      %v1220 = vadd.f32 0.0, %v1219
      %1221 = vdwg.mxu0
      %1222 = vmatpush.msra.mxu0 0.0
      %1223 = vmatpush.msra.mxu0 0.0
      %1224 = vmatpush.msra.mxu0 0.0
      %1225 = vmatpush.msra.mxu0 0.0
      %1226 = vmatpush.msra.mxu0 %v1160
      %1227 = vmatpush.msra.mxu0 %v1153
      %1228 = vmatpush.msra.mxu0 %v1151
      %1229 = vmatpush.msra.mxu0 %v1149
      %1230 = vmatpush.msra.mxu0 %v1147
      %1231 = vmatpush.msra.mxu0 %v1145
      %1232 = vmatpush.msra.mxu0 %v1143
      %1233 = vmatpush.msra.mxu0 %v1141
      %1234 = vmatpush.msra.mxu0 %v1139
      %1235 = vmatpush.msra.mxu0 %v1137
      %1236 = vmatpush.msra.mxu0 %v1135
      %1237 = vmatpush.msra.mxu0 %v1133
      %1238 = vmatmul.f32.gmra.mxu0 %v692
      %v1239 = vpop.f32.mrf.mxu0
      %v1240 = vadd.f32 %v1220, %v1239
      %1241 = vdwg.mxu0
      %1243 = vset.pattern.permute.xlu0 0
      %1244 = vperm.xlu0 %1243, %v1098
      %v1245 = vpop.permute.xlu0 %1244
      %v1247 = vmul.f32 %v1245, %v1200
      %v1248 = vmul.f32 %v1245, %v1240
      %v1249 = vadd.f32 %v1095, %v1247
      %v1250 = vadd.f32 %v1096, %v1248
      %v1251 = vld [vmem:[%s3] sm:$0xff]
      %1253 = vset.pattern.permute.xlu0 0
      %1254 = vperm.xlu0 %1253, %v1251
      %v1255 = vpop.permute.xlu0 %1254
      %v1257 = vadd.f32 %v1249, %v1255
      %v1258 = vadd.f32 %v1250, %v1255
      %vm1259 = vcmp.gt.f32.partialorder %v1257, 0.0
      %vm1260 = vcmp.gt.f32.partialorder %v1258, 0.0
      %v1261 = vmin.f32 %v1257, 0.0
      %v1262 = vmin.f32 %v1258, 0.0
      %v1263 = vmul.f32 %v1261, 1.442695
      %v1264 = vpow.pop %v1263
      %v1265 = vmul.f32 %v1262, 1.442695
      %v1266 = vpow.pop %v1265
      %v1267 = vsub.f32 %v1264, 1.0
      %v1268 = vsub.f32 %v1266, 1.0
      %v1269 = vsel %vm1259, %v1257, %v1267
      %v1270 = vsel %vm1260, %v1258, %v1268
      %vm1271 = vcmask 326656
      %v1273 = vsel %vm1271, %v1269, 0
      %1275 = vmatpush.msra.mxu0 0.0
      %1276 = vmatpush.msra.mxu0 0.0
      %1277 = vmatpush.msra.mxu0 0.0
      %1278 = vmatpush.msra.mxu0 0.0
      %1279 = vmatpush.msra.mxu0 0.0
      %1280 = vmatpush.msra.mxu0 0.0
      %1281 = vmatpush.msra.mxu0 0.0
      %1282 = vmatpush.msra.mxu0 0.0
      %1283 = vmatpush.msra.mxu0 0.0
      %1284 = vmatpush.msra.mxu0 0.0
      %1285 = vmatpush.msra.mxu0 0.0
      %1286 = vmatpush.msra.mxu0 %v560
      %1287 = vmatpush.msra.mxu0 %v559
      %1288 = vmatpush.msra.mxu0 %v558
      %1289 = vmatpush.msra.mxu0 %v557
      %1290 = vmatpush.msra.mxu0 %v556
      %1291 = vmatmul.f32.gmra.mxu0 %v1273
      %v1292 = vpop.f32.mrf.mxu0
      %v1293 = vadd.f32 0.0, %v1292
      %1294 = vdwg.mxu0
      %1295 = vrot.lane.b32.xlu0 %v1269, 88
      %v1296 = vpop.permute.xlu0 %1295
      %v1297 = vsel %vm1271, %v1296, 0
      %1299 = vmatpush.msra.mxu0 0.0
      %1300 = vmatpush.msra.mxu0 0.0
      %1301 = vmatpush.msra.mxu0 0.0
      %1302 = vmatpush.msra.mxu0 0.0
      %1303 = vmatpush.msra.mxu0 0.0
      %1304 = vmatpush.msra.mxu0 0.0
      %1305 = vmatpush.msra.mxu0 0.0
      %1306 = vmatpush.msra.mxu0 0.0
      %1307 = vmatpush.msra.mxu0 0.0
      %1308 = vmatpush.msra.mxu0 0.0
      %1309 = vmatpush.msra.mxu0 0.0
      %1310 = vmatpush.msra.mxu0 %v560
      %1311 = vmatpush.msra.mxu0 %v559
      %1312 = vmatpush.msra.mxu0 %v558
      %1313 = vmatpush.msra.mxu0 %v557
      %1314 = vmatpush.msra.mxu0 %v556
      %1315 = vmatmul.f32.gmra.mxu0 %v1297
      %v1316 = vpop.f32.mrf.mxu0
      %v1317 = vadd.f32 0.0, %v1316
      %1318 = vdwg.mxu0
      %1319 = vrot.lane.b32.xlu0 %v1269, 48
      %v1320 = vpop.permute.xlu0 %1319
      %v1321 = vsel %vm1271, %v1320, 0
      %1323 = vmatpush.msra.mxu0 0.0
      %1324 = vmatpush.msra.mxu0 0.0
      %1325 = vmatpush.msra.mxu0 0.0
      %1326 = vmatpush.msra.mxu0 0.0
      %1327 = vmatpush.msra.mxu0 0.0
      %1328 = vmatpush.msra.mxu0 0.0
      %1329 = vmatpush.msra.mxu0 0.0
      %1330 = vmatpush.msra.mxu0 0.0
      %1331 = vmatpush.msra.mxu0 0.0
      %1332 = vmatpush.msra.mxu0 0.0
      %1333 = vmatpush.msra.mxu0 0.0
      %1334 = vmatpush.msra.mxu0 %v560
      %1335 = vmatpush.msra.mxu0 %v559
      %1336 = vmatpush.msra.mxu0 %v558
      %1337 = vmatpush.msra.mxu0 %v557
      %1338 = vmatpush.msra.mxu0 %v556
      %1339 = vmatmul.f32.gmra.mxu0 %v1321
      %v1340 = vpop.f32.mrf.mxu0
      %v1341 = vadd.f32 0.0, %v1340
      %1342 = vdwg.mxu0
      %1344 = vrot.lane.b32.xlu0 %v1269, 8
      %v1345 = vpop.permute.xlu0 %1344
      %1346 = vrot.lane.b32.xlu0 %v1270, 8
      %v1347 = vpop.permute.xlu0 %1346
      %vm1348 = vcmask 64512
      %v1349 = vsel %vm1348, %v1345, %v1347
      %v1350 = vsel %vm1271, %v1349, 0
      %1352 = vmatpush.msra.mxu0 0.0
      %1353 = vmatpush.msra.mxu0 0.0
      %1354 = vmatpush.msra.mxu0 0.0
      %1355 = vmatpush.msra.mxu0 0.0
      %1356 = vmatpush.msra.mxu0 0.0
      %1357 = vmatpush.msra.mxu0 0.0
      %1358 = vmatpush.msra.mxu0 0.0
      %1359 = vmatpush.msra.mxu0 0.0
      %1360 = vmatpush.msra.mxu0 0.0
      %1361 = vmatpush.msra.mxu0 0.0
      %1362 = vmatpush.msra.mxu0 0.0
      %1363 = vmatpush.msra.mxu0 %v560
      %1364 = vmatpush.msra.mxu0 %v559
      %1365 = vmatpush.msra.mxu0 %v558
      %1366 = vmatpush.msra.mxu0 %v557
      %1367 = vmatpush.msra.mxu0 %v556
      %1368 = vmatmul.f32.gmra.mxu0 %v1350
      %v1369 = vpop.f32.mrf.mxu0
      %v1370 = vadd.f32 0.0, %v1369
      %1371 = vdwg.mxu0
      %1372 = vrot.lane.b32.xlu0 %v1270, 96
      %v1373 = vpop.permute.xlu0 %1372
      %v1374 = vsel %vm1271, %v1373, 0
      %1376 = vmatpush.msra.mxu0 0.0
      %1377 = vmatpush.msra.mxu0 0.0
      %1378 = vmatpush.msra.mxu0 0.0
      %1379 = vmatpush.msra.mxu0 0.0
      %1380 = vmatpush.msra.mxu0 0.0
      %1381 = vmatpush.msra.mxu0 0.0
      %1382 = vmatpush.msra.mxu0 0.0
      %1383 = vmatpush.msra.mxu0 0.0
      %1384 = vmatpush.msra.mxu0 0.0
      %1385 = vmatpush.msra.mxu0 0.0
      %1386 = vmatpush.msra.mxu0 0.0
      %1387 = vmatpush.msra.mxu0 %v560
      %1388 = vmatpush.msra.mxu0 %v559
      %1389 = vmatpush.msra.mxu0 %v558
      %1390 = vmatpush.msra.mxu0 %v557
      %1391 = vmatpush.msra.mxu0 %v556
      %1392 = vmatmul.f32.gmra.mxu0 %v1374
      %v1393 = vpop.f32.mrf.mxu0
      %v1394 = vadd.f32 0.0, %v1393
      %1395 = vdwg.mxu0
      %1397 = vrot.lane.b32.xlu0 %v1317, 8
      %v1398 = vpop.permute.xlu0 %1397
      %1401 = vrot.lane.b32.xlu0 %v1341, 16
      %v1402 = vpop.permute.xlu0 %1401
      %1405 = vrot.lane.b32.xlu0 %v1370, 24
      %v1406 = vpop.permute.xlu0 %1405
      %1409 = vrot.lane.b32.xlu0 %v1394, 32
      %v1410 = vpop.permute.xlu0 %1409
      %v1412 = vsel %vm1348, %v1293, %v1398
      %vm1413 = vcmask 130048
      %v1414 = vsel %vm1413, %v1412, %v1402
      %vm1415 = vcmask 195584
      %v1416 = vsel %vm1415, %v1414, %v1406
      %vm1417 = vcmask 261120
      %v1418 = vsel %vm1417, %v1416, %v1410
      %vm1419 = vcmask 56320
      %1420 = vst.msk [vmem:[#allocation3] sm:$0xff] %vm1419, 0.0
      %vm1421 = vcmask 449912
      %1422 = vst.msk [vmem:[#allocation3] sm:$0xff] %vm1421, 0.0
      %1424 = vrot.lane.b32.xlu0 %v1418, 7
      %v1425 = vpop.permute.xlu0 %1424
      %vm1427 = vcmask 384056
      %1428 = vst.msk [vmem:[#allocation3] sm:$0xff] %vm1427, %v1425
      %v1429 = vld [vmem:[#allocation3] sm:$0xff]
      %v1430 = vld [vmem:[%s6] sm:$0xff]
      %1432 = vset.pattern.permute.xlu0 0
      %1433 = vperm.xlu0 %1432, %v1430
      %v1434 = vpop.permute.xlu0 %1433
      %v1436 = vmul.f32 %v1434, %v1429
      %v1437 = vadd.f32 %v1436, 0.0
      %s1438 = scalar_lea.vmem %s6, 8
      %v1439 = vld [vmem:[%s1438] sm:$0xff]
      %1441 = vset.pattern.permute.xlu0 0
      %1442 = vperm.xlu0 %1441, %v1439
      %v1443 = vpop.permute.xlu0 %1442
      %v1445 = vmul.f32 %v1443, %v1429
      %v1446 = vadd.f32 %v1445, 0.0
      %s1447 = scalar_lea.vmem %s6, 16
      %v1448 = vld [vmem:[%s1447] sm:$0xff]
      %1450 = vset.pattern.permute.xlu0 0
      %1451 = vperm.xlu0 %1450, %v1448
      %v1452 = vpop.permute.xlu0 %1451
      %v1454 = vmul.f32 %v1452, %v1429
      %1456 = vrot.lane.b32.xlu0 %v1454, 126
      %v1457 = vpop.permute.xlu0 %1456
      %v1459 = vadd.f32 %v1437, %v1457
      %s1460 = scalar_lea.vmem %s6, 24
      %v1461 = vld [vmem:[%s1460] sm:$0xff]
      %1463 = vset.pattern.permute.xlu0 0
      %1464 = vperm.xlu0 %1463, %v1461
      %v1465 = vpop.permute.xlu0 %1464
      %v1467 = vmul.f32 %v1465, %v1429
      %1469 = vrot.lane.b32.xlu0 %v1467, 126
      %v1470 = vpop.permute.xlu0 %1469
      %v1472 = vadd.f32 %v1446, %v1470
      %s1473 = scalar_lea.vmem %s6, 32
      %v1474 = vld [vmem:[%s1473] sm:$0xff]
      %1476 = vset.pattern.permute.xlu0 0
      %1477 = vperm.xlu0 %1476, %v1474
      %v1478 = vpop.permute.xlu0 %1477
      %v1480 = vmul.f32 %v1478, %v1429
      %1482 = vrot.lane.b32.xlu0 %v1480, 124
      %v1483 = vpop.permute.xlu0 %1482
      %v1485 = vadd.f32 %v1459, %v1483
      %s1486 = scalar_lea.vmem %s6, 40
      %v1487 = vld [vmem:[%s1486] sm:$0xff]
      %1489 = vset.pattern.permute.xlu0 0
      %1490 = vperm.xlu0 %1489, %v1487
      %v1491 = vpop.permute.xlu0 %1490
      %v1493 = vmul.f32 %v1491, %v1429
      %1495 = vrot.lane.b32.xlu0 %v1493, 124
      %v1496 = vpop.permute.xlu0 %1495
      %v1498 = vadd.f32 %v1472, %v1496
      %s1499 = scalar_lea.vmem %s6, 48
      %v1500 = vld [vmem:[%s1499] sm:$0xff]
      %1502 = vset.pattern.permute.xlu0 0
      %1503 = vperm.xlu0 %1502, %v1500
      %v1504 = vpop.permute.xlu0 %1503
      %v1506 = vmul.f32 %v1504, %v1429
      %1508 = vrot.lane.b32.xlu0 %v1506, 122
      %v1509 = vpop.permute.xlu0 %1508
      %v1511 = vadd.f32 %v1485, %v1509
      %s1512 = scalar_lea.vmem %s6, 56
      %v1513 = vld [vmem:[%s1512] sm:$0xff]
      %1515 = vset.pattern.permute.xlu0 0
      %1516 = vperm.xlu0 %1515, %v1513
      %v1517 = vpop.permute.xlu0 %1516
      %v1519 = vmul.f32 %v1517, %v1429
      %1521 = vrot.lane.b32.xlu0 %v1519, 122
      %v1522 = vpop.permute.xlu0 %1521
      %v1524 = vadd.f32 %v1498, %v1522
      %s1525 = scalar_lea.vmem %s6, 64
      %v1526 = vld [vmem:[%s1525] sm:$0xff]
      %1528 = vset.pattern.permute.xlu0 0
      %1529 = vperm.xlu0 %1528, %v1526
      %v1530 = vpop.permute.xlu0 %1529
      %v1532 = vmul.f32 %v1530, %v1429
      %1534 = vrot.lane.b32.xlu0 %v1532, 120
      %v1535 = vpop.permute.xlu0 %1534
      %v1537 = vadd.f32 %v1511, %v1535
      %s1538 = scalar_lea.vmem %s6, 72
      %v1539 = vld [vmem:[%s1538] sm:$0xff]
      %1541 = vset.pattern.permute.xlu0 0
      %1542 = vperm.xlu0 %1541, %v1539
      %v1543 = vpop.permute.xlu0 %1542
      %v1545 = vmul.f32 %v1543, %v1429
      %1547 = vrot.lane.b32.xlu0 %v1545, 120
      %v1548 = vpop.permute.xlu0 %1547
      %v1550 = vadd.f32 %v1524, %v1548
      %s1551 = scalar_lea.vmem %s6, 80
      %v1552 = vld [vmem:[%s1551] sm:$0xff]
      %1554 = vset.pattern.permute.xlu0 0
      %1555 = vperm.xlu0 %1554, %v1552
      %v1556 = vpop.permute.xlu0 %1555
      %v1558 = vmul.f32 %v1556, %v1429
      %1560 = vrot.lane.b32.xlu0 %v1558, 118
      %v1561 = vpop.permute.xlu0 %1560
      %v1563 = vadd.f32 %v1537, %v1561
      %s1564 = scalar_lea.vmem %s6, 88
      %v1565 = vld [vmem:[%s1564] sm:$0xff]
      %1567 = vset.pattern.permute.xlu0 0
      %1568 = vperm.xlu0 %1567, %v1565
      %v1569 = vpop.permute.xlu0 %1568
      %v1571 = vmul.f32 %v1569, %v1429
      %1573 = vrot.lane.b32.xlu0 %v1571, 118
      %v1574 = vpop.permute.xlu0 %1573
      %v1576 = vadd.f32 %v1550, %v1574
      %s1577 = scalar_lea.vmem %s6, 96
      %v1578 = vld [vmem:[%s1577] sm:$0xff]
      %1580 = vset.pattern.permute.xlu0 0
      %1581 = vperm.xlu0 %1580, %v1578
      %v1582 = vpop.permute.xlu0 %1581
      %v1584 = vmul.f32 %v1582, %v1429
      %1586 = vrot.lane.b32.xlu0 %v1584, 116
      %v1587 = vpop.permute.xlu0 %1586
      %v1589 = vadd.f32 %v1563, %v1587
      %s1590 = scalar_lea.vmem %s6, 104
      %v1591 = vld [vmem:[%s1590] sm:$0xff]
      %1593 = vset.pattern.permute.xlu0 0
      %1594 = vperm.xlu0 %1593, %v1591
      %v1595 = vpop.permute.xlu0 %1594
      %v1597 = vmul.f32 %v1595, %v1429
      %1599 = vrot.lane.b32.xlu0 %v1597, 116
      %v1600 = vpop.permute.xlu0 %1599
      %v1602 = vadd.f32 %v1576, %v1600
      %s1603 = scalar_lea.vmem %s6, 112
      %v1604 = vld [vmem:[%s1603] sm:$0xff]
      %1606 = vset.pattern.permute.xlu0 0
      %1607 = vperm.xlu0 %1606, %v1604
      %v1608 = vpop.permute.xlu0 %1607
      %v1610 = vmul.f32 %v1608, %v1429
      %1612 = vrot.lane.b32.xlu0 %v1610, 114
      %v1613 = vpop.permute.xlu0 %1612
      %v1615 = vadd.f32 %v1589, %v1613
      %s1616 = scalar_lea.vmem %s6, 120
      %v1617 = vld [vmem:[%s1616] sm:$0xff]
      %1619 = vset.pattern.permute.xlu0 0
      %1620 = vperm.xlu0 %1619, %v1617
      %v1621 = vpop.permute.xlu0 %1620
      %v1623 = vmul.f32 %v1621, %v1429
      %1625 = vrot.lane.b32.xlu0 %v1623, 114
      %v1626 = vpop.permute.xlu0 %1625
      %v1628 = vadd.f32 %v1602, %v1626
      %v1629 = vld [vmem:[%s7] sm:$0xff]
      %1631 = vrot.lane.b32.xlu0 %v1628, 127
      %v1632 = vpop.permute.xlu0 %1631
      %v1634 = vadd.f32 %v1615, %v1632
      %v1635 = vld [vmem:[%s8] sm:$0xff]
      %1637 = vset.pattern.permute.xlu0 0
      %1638 = vperm.xlu0 %1637, %v1635
      %v1639 = vpop.permute.xlu0 %1638
      %v1642 = vsel %vm1348, %v1629, 0
      %1644 = vmatpush.msra.mxu0 0.0
      %1645 = vmatpush.msra.mxu0 0.0
      %1646 = vmatpush.msra.mxu0 0.0
      %1647 = vmatpush.msra.mxu0 0.0
      %1648 = vmatpush.msra.mxu0 0.0
      %1649 = vmatpush.msra.mxu0 0.0
      %1650 = vmatpush.msra.mxu0 0.0
      %1651 = vmatpush.msra.mxu0 0.0
      %1652 = vmatpush.msra.mxu0 0.0
      %1653 = vmatpush.msra.mxu0 0.0
      %1654 = vmatpush.msra.mxu0 0.0
      %1655 = vmatpush.msra.mxu0 0.0
      %1656 = vmatpush.msra.mxu0 0.0
      %1657 = vmatpush.msra.mxu0 0.0
      %1658 = vmatpush.msra.mxu0 0.0
      %1659 = vmatpush.msra.mxu0 %v1634
      %1660 = vmatmul.f32.gmra.mxu0 %v1642
      %v1661 = vpop.f32.mrf.mxu0
      %v1662 = vadd.f32 %v1639, %v1661
      %1663 = vdwg.mxu0
      %vm1664 = vcmp.gt.f32.partialorder %v1662, 0.0
      %v1665 = vmin.f32 %v1662, 0.0
      %v1666 = vmul.f32 %v1665, 1.442695
      %v1667 = vpow.pop %v1666
      %v1668 = vsub.f32 %v1667, 1.0
      %v1669 = vsel %vm1664, %v1662, %v1668
      %v1671 = vsel %vm1271, %v1669, 0
      %1673 = vmatpush.msra.mxu0 0.0
      %1674 = vmatpush.msra.mxu0 0.0
      %1675 = vmatpush.msra.mxu0 0.0
      %1676 = vmatpush.msra.mxu0 0.0
      %1677 = vmatpush.msra.mxu0 0.0
      %1678 = vmatpush.msra.mxu0 0.0
      %1679 = vmatpush.msra.mxu0 0.0
      %1680 = vmatpush.msra.mxu0 0.0
      %1681 = vmatpush.msra.mxu0 0.0
      %1682 = vmatpush.msra.mxu0 0.0
      %1683 = vmatpush.msra.mxu0 0.0
      %1684 = vmatpush.msra.mxu0 %v560
      %1685 = vmatpush.msra.mxu0 %v559
      %1686 = vmatpush.msra.mxu0 %v558
      %1687 = vmatpush.msra.mxu0 %v557
      %1688 = vmatpush.msra.mxu0 %v556
      %1689 = vmatmul.f32.gmra.mxu0 %v1671
      %v1690 = vpop.f32.mrf.mxu0
      %v1691 = vadd.f32 0.0, %v1690
      %1692 = vdwg.mxu0
      %v1694 = vsel %vm1348, %v1691, 0
      %1696 = vmatpush.msra.mxu0 0.0
      %1697 = vmatpush.msra.mxu0 0.0
      %1698 = vmatpush.msra.mxu0 0.0
      %1699 = vmatpush.msra.mxu0 0.0
      %1700 = vmatpush.msra.mxu0 0.0
      %1701 = vmatpush.msra.mxu0 0.0
      %1702 = vmatpush.msra.mxu0 0.0
      %1703 = vmatpush.msra.mxu0 0.0
      %1704 = vmatpush.msra.mxu0 0.0
      %1705 = vmatpush.msra.mxu0 0.0
      %1706 = vmatpush.msra.mxu0 0.0
      %1707 = vmatpush.msra.mxu0 0.0
      %1708 = vmatpush.msra.mxu0 0.0
      %1709 = vmatpush.msra.mxu0 0.0
      %1710 = vmatpush.msra.mxu0 0.0
      %1711 = vmatpush.msra.mxu0 %v561
      %1712 = vmatmul.f32.gmra.mxu0 %v1694
      %v1713 = vpop.f32.mrf.mxu0
      %v1714 = vadd.f32 0.0, %v1713
      %1715 = vdwg.mxu0
      %vm1716 = vcmask 121856
      %1717 = vst.msk [vmem:[#allocation4] sm:$0xff] %vm1716, 0.0
      %1719 = vrot.lane.b32.xlu0 %v1714, 15
      %v1720 = vpop.permute.xlu0 %1719
      %vm1722 = vcmask 449656
      %1723 = vst.msk [vmem:[#allocation4] sm:$0xff] %vm1722, %v1720
      %v1724 = vld [vmem:[#allocation4] sm:$0xff]
      %v1725 = vld [vmem:[%s9] sm:$0xff]
      %1727 = vset.pattern.permute.xlu0 0
      %1728 = vperm.xlu0 %1727, %v1725
      %v1729 = vpop.permute.xlu0 %1728
      %v1731 = vmul.f32 %v1729, %v1724
      %v1732 = vadd.f32 %v1731, 0.0
      %s1733 = scalar_lea.vmem %s9, 8
      %v1734 = vld [vmem:[%s1733] sm:$0xff]
      %1736 = vset.pattern.permute.xlu0 0
      %1737 = vperm.xlu0 %1736, %v1734
      %v1738 = vpop.permute.xlu0 %1737
      %v1740 = vmul.f32 %v1738, %v1724
      %v1741 = vadd.f32 %v1740, 0.0
      %s1742 = scalar_lea.vmem %s9, 16
      %v1743 = vld [vmem:[%s1742] sm:$0xff]
      %1745 = vset.pattern.permute.xlu0 0
      %1746 = vperm.xlu0 %1745, %v1743
      %v1747 = vpop.permute.xlu0 %1746
      %v1749 = vmul.f32 %v1747, %v1724
      %1751 = vrot.lane.b32.xlu0 %v1749, 126
      %v1752 = vpop.permute.xlu0 %1751
      %v1754 = vadd.f32 %v1732, %v1752
      %s1755 = scalar_lea.vmem %s9, 24
      %v1756 = vld [vmem:[%s1755] sm:$0xff]
      %1758 = vset.pattern.permute.xlu0 0
      %1759 = vperm.xlu0 %1758, %v1756
      %v1760 = vpop.permute.xlu0 %1759
      %v1762 = vmul.f32 %v1760, %v1724
      %1764 = vrot.lane.b32.xlu0 %v1762, 126
      %v1765 = vpop.permute.xlu0 %1764
      %v1767 = vadd.f32 %v1741, %v1765
      %s1768 = scalar_lea.vmem %s9, 32
      %v1769 = vld [vmem:[%s1768] sm:$0xff]
      %1771 = vset.pattern.permute.xlu0 0
      %1772 = vperm.xlu0 %1771, %v1769
      %v1773 = vpop.permute.xlu0 %1772
      %v1775 = vmul.f32 %v1773, %v1724
      %1777 = vrot.lane.b32.xlu0 %v1775, 124
      %v1778 = vpop.permute.xlu0 %1777
      %v1780 = vadd.f32 %v1754, %v1778
      %s1781 = scalar_lea.vmem %s9, 40
      %v1782 = vld [vmem:[%s1781] sm:$0xff]
      %1784 = vset.pattern.permute.xlu0 0
      %1785 = vperm.xlu0 %1784, %v1782
      %v1786 = vpop.permute.xlu0 %1785
      %v1788 = vmul.f32 %v1786, %v1724
      %1790 = vrot.lane.b32.xlu0 %v1788, 124
      %v1791 = vpop.permute.xlu0 %1790
      %v1793 = vadd.f32 %v1767, %v1791
      %s1794 = scalar_lea.vmem %s9, 48
      %v1795 = vld [vmem:[%s1794] sm:$0xff]
      %1797 = vset.pattern.permute.xlu0 0
      %1798 = vperm.xlu0 %1797, %v1795
      %v1799 = vpop.permute.xlu0 %1798
      %v1801 = vmul.f32 %v1799, %v1724
      %1803 = vrot.lane.b32.xlu0 %v1801, 122
      %v1804 = vpop.permute.xlu0 %1803
      %v1806 = vadd.f32 %v1780, %v1804
      %s1807 = scalar_lea.vmem %s9, 56
      %v1808 = vld [vmem:[%s1807] sm:$0xff]
      %1810 = vset.pattern.permute.xlu0 0
      %1811 = vperm.xlu0 %1810, %v1808
      %v1812 = vpop.permute.xlu0 %1811
      %v1814 = vmul.f32 %v1812, %v1724
      %1816 = vrot.lane.b32.xlu0 %v1814, 122
      %v1817 = vpop.permute.xlu0 %1816
      %v1819 = vadd.f32 %v1793, %v1817
      %s1820 = scalar_lea.vmem %s9, 64
      %v1821 = vld [vmem:[%s1820] sm:$0xff]
      %1823 = vset.pattern.permute.xlu0 0
      %1824 = vperm.xlu0 %1823, %v1821
      %v1825 = vpop.permute.xlu0 %1824
      %v1827 = vmul.f32 %v1825, %v1724
      %1829 = vrot.lane.b32.xlu0 %v1827, 120
      %v1830 = vpop.permute.xlu0 %1829
      %v1832 = vadd.f32 %v1806, %v1830
      %s1833 = scalar_lea.vmem %s9, 72
      %v1834 = vld [vmem:[%s1833] sm:$0xff]
      %1836 = vset.pattern.permute.xlu0 0
      %1837 = vperm.xlu0 %1836, %v1834
      %v1838 = vpop.permute.xlu0 %1837
      %v1840 = vmul.f32 %v1838, %v1724
      %1842 = vrot.lane.b32.xlu0 %v1840, 120
      %v1843 = vpop.permute.xlu0 %1842
      %v1845 = vadd.f32 %v1819, %v1843
      %s1846 = scalar_lea.vmem %s9, 80
      %v1847 = vld [vmem:[%s1846] sm:$0xff]
      %1849 = vset.pattern.permute.xlu0 0
      %1850 = vperm.xlu0 %1849, %v1847
      %v1851 = vpop.permute.xlu0 %1850
      %v1853 = vmul.f32 %v1851, %v1724
      %1855 = vrot.lane.b32.xlu0 %v1853, 118
      %v1856 = vpop.permute.xlu0 %1855
      %v1858 = vadd.f32 %v1832, %v1856
      %s1859 = scalar_lea.vmem %s9, 88
      %v1860 = vld [vmem:[%s1859] sm:$0xff]
      %1862 = vset.pattern.permute.xlu0 0
      %1863 = vperm.xlu0 %1862, %v1860
      %v1864 = vpop.permute.xlu0 %1863
      %v1866 = vmul.f32 %v1864, %v1724
      %1868 = vrot.lane.b32.xlu0 %v1866, 118
      %v1869 = vpop.permute.xlu0 %1868
      %v1871 = vadd.f32 %v1845, %v1869
      %s1872 = scalar_lea.vmem %s9, 96
      %v1873 = vld [vmem:[%s1872] sm:$0xff]
      %1875 = vset.pattern.permute.xlu0 0
      %1876 = vperm.xlu0 %1875, %v1873
      %v1877 = vpop.permute.xlu0 %1876
      %v1879 = vmul.f32 %v1877, %v1724
      %1881 = vrot.lane.b32.xlu0 %v1879, 116
      %v1882 = vpop.permute.xlu0 %1881
      %v1884 = vadd.f32 %v1858, %v1882
      %s1885 = scalar_lea.vmem %s9, 104
      %v1886 = vld [vmem:[%s1885] sm:$0xff]
      %1888 = vset.pattern.permute.xlu0 0
      %1889 = vperm.xlu0 %1888, %v1886
      %v1890 = vpop.permute.xlu0 %1889
      %v1892 = vmul.f32 %v1890, %v1724
      %1894 = vrot.lane.b32.xlu0 %v1892, 116
      %v1895 = vpop.permute.xlu0 %1894
      %v1897 = vadd.f32 %v1871, %v1895
      %s1898 = scalar_lea.vmem %s9, 112
      %v1899 = vld [vmem:[%s1898] sm:$0xff]
      %1901 = vset.pattern.permute.xlu0 0
      %1902 = vperm.xlu0 %1901, %v1899
      %v1903 = vpop.permute.xlu0 %1902
      %v1905 = vmul.f32 %v1903, %v1724
      %1907 = vrot.lane.b32.xlu0 %v1905, 114
      %v1908 = vpop.permute.xlu0 %1907
      %v1910 = vadd.f32 %v1884, %v1908
      %s1911 = scalar_lea.vmem %s9, 120
      %v1912 = vld [vmem:[%s1911] sm:$0xff]
      %1914 = vset.pattern.permute.xlu0 0
      %1915 = vperm.xlu0 %1914, %v1912
      %v1916 = vpop.permute.xlu0 %1915
      %v1918 = vmul.f32 %v1916, %v1724
      %1920 = vrot.lane.b32.xlu0 %v1918, 114
      %v1921 = vpop.permute.xlu0 %1920
      %v1923 = vadd.f32 %v1897, %v1921
      %v1924 = vld [vmem:[%s10] sm:$0xff]
      %1926 = vrot.lane.b32.xlu0 %v1923, 127
      %v1927 = vpop.permute.xlu0 %1926
      %v1929 = vadd.f32 %v1910, %v1927
      %v1930 = vld [vmem:[%s11] sm:$0xff]
      %1932 = vset.pattern.permute.xlu0 0
      %1933 = vperm.xlu0 %1932, %v1930
      %v1934 = vpop.permute.xlu0 %1933
      %v1937 = vsel %vm1348, %v1924, 0
      %1939 = vmatpush.msra.mxu0 0.0
      %1940 = vmatpush.msra.mxu0 0.0
      %1941 = vmatpush.msra.mxu0 0.0
      %1942 = vmatpush.msra.mxu0 0.0
      %1943 = vmatpush.msra.mxu0 0.0
      %1944 = vmatpush.msra.mxu0 0.0
      %1945 = vmatpush.msra.mxu0 0.0
      %1946 = vmatpush.msra.mxu0 0.0
      %1947 = vmatpush.msra.mxu0 0.0
      %1948 = vmatpush.msra.mxu0 0.0
      %1949 = vmatpush.msra.mxu0 0.0
      %1950 = vmatpush.msra.mxu0 0.0
      %1951 = vmatpush.msra.mxu0 0.0
      %1952 = vmatpush.msra.mxu0 0.0
      %1953 = vmatpush.msra.mxu0 0.0
      %1954 = vmatpush.msra.mxu0 %v1929
      %1955 = vmatmul.f32.gmra.mxu0 %v1937
      %v1956 = vpop.f32.mrf.mxu0
      %v1957 = vadd.f32 %v1934, %v1956
      %1958 = vdwg.mxu0
      %vm1959 = vcmp.gt.f32.partialorder %v1957, 0.0
      %v1960 = vmin.f32 %v1957, 0.0
      %v1961 = vmul.f32 %v1960, 1.442695
      %v1962 = vpow.pop %v1961
      %v1963 = vsub.f32 %v1962, 1.0
      %v1964 = vsel %vm1959, %v1957, %v1963
      %v1966 = vsel %vm1348, %v1964, 0
      %1968 = vmatpush.msra.mxu0 0.0
      %1969 = vmatpush.msra.mxu0 0.0
      %1970 = vmatpush.msra.mxu0 0.0
      %1971 = vmatpush.msra.mxu0 0.0
      %1972 = vmatpush.msra.mxu0 0.0
      %1973 = vmatpush.msra.mxu0 0.0
      %1974 = vmatpush.msra.mxu0 0.0
      %1975 = vmatpush.msra.mxu0 0.0
      %1976 = vmatpush.msra.mxu0 0.0
      %1977 = vmatpush.msra.mxu0 0.0
      %1978 = vmatpush.msra.mxu0 0.0
      %1979 = vmatpush.msra.mxu0 0.0
      %1980 = vmatpush.msra.mxu0 0.0
      %1981 = vmatpush.msra.mxu0 0.0
      %1982 = vmatpush.msra.mxu0 0.0
      %1983 = vmatpush.msra.mxu0 %v561
      %1984 = vmatmul.f32.gmra.mxu0 %v1966
      %v1985 = vpop.f32.mrf.mxu0
      %v1986 = vadd.f32 0.0, %v1985
      %1987 = vdwg.mxu0
      %1988 = vrot.lane.b32.xlu0 %v1964, 120
      %v1989 = vpop.permute.xlu0 %1988
      %v1990 = vsel %vm1348, %v1989, 0
      %1992 = vmatpush.msra.mxu0 0.0
      %1993 = vmatpush.msra.mxu0 0.0
      %1994 = vmatpush.msra.mxu0 0.0
      %1995 = vmatpush.msra.mxu0 0.0
      %1996 = vmatpush.msra.mxu0 0.0
      %1997 = vmatpush.msra.mxu0 0.0
      %1998 = vmatpush.msra.mxu0 0.0
      %1999 = vmatpush.msra.mxu0 0.0
      %2000 = vmatpush.msra.mxu0 0.0
      %2001 = vmatpush.msra.mxu0 0.0
      %2002 = vmatpush.msra.mxu0 0.0
      %2003 = vmatpush.msra.mxu0 0.0
      %2004 = vmatpush.msra.mxu0 0.0
      %2005 = vmatpush.msra.mxu0 0.0
      %2006 = vmatpush.msra.mxu0 0.0
      %2007 = vmatpush.msra.mxu0 %v561
      %2008 = vmatmul.f32.gmra.mxu0 %v1990
      %v2009 = vpop.f32.mrf.mxu0
      %v2010 = vadd.f32 0.0, %v2009
      %2011 = vdwg.mxu0
      %2012 = vrot.lane.b32.xlu0 %v1964, 112
      %v2013 = vpop.permute.xlu0 %2012
      %v2014 = vsel %vm1348, %v2013, 0
      %2016 = vmatpush.msra.mxu0 0.0
      %2017 = vmatpush.msra.mxu0 0.0
      %2018 = vmatpush.msra.mxu0 0.0
      %2019 = vmatpush.msra.mxu0 0.0
      %2020 = vmatpush.msra.mxu0 0.0
      %2021 = vmatpush.msra.mxu0 0.0
      %2022 = vmatpush.msra.mxu0 0.0
      %2023 = vmatpush.msra.mxu0 0.0
      %2024 = vmatpush.msra.mxu0 0.0
      %2025 = vmatpush.msra.mxu0 0.0
      %2026 = vmatpush.msra.mxu0 0.0
      %2027 = vmatpush.msra.mxu0 0.0
      %2028 = vmatpush.msra.mxu0 0.0
      %2029 = vmatpush.msra.mxu0 0.0
      %2030 = vmatpush.msra.mxu0 0.0
      %2031 = vmatpush.msra.mxu0 %v561
      %2032 = vmatmul.f32.gmra.mxu0 %v2014
      %v2033 = vpop.f32.mrf.mxu0
      %v2034 = vadd.f32 0.0, %v2033
      %2035 = vdwg.mxu0
      %2036 = vrot.lane.b32.xlu0 %v1964, 104
      %v2037 = vpop.permute.xlu0 %2036
      %v2038 = vsel %vm1348, %v2037, 0
      %2040 = vmatpush.msra.mxu0 0.0
      %2041 = vmatpush.msra.mxu0 0.0
      %2042 = vmatpush.msra.mxu0 0.0
      %2043 = vmatpush.msra.mxu0 0.0
      %2044 = vmatpush.msra.mxu0 0.0
      %2045 = vmatpush.msra.mxu0 0.0
      %2046 = vmatpush.msra.mxu0 0.0
      %2047 = vmatpush.msra.mxu0 0.0
      %2048 = vmatpush.msra.mxu0 0.0
      %2049 = vmatpush.msra.mxu0 0.0
      %2050 = vmatpush.msra.mxu0 0.0
      %2051 = vmatpush.msra.mxu0 0.0
      %2052 = vmatpush.msra.mxu0 0.0
      %2053 = vmatpush.msra.mxu0 0.0
      %2054 = vmatpush.msra.mxu0 0.0
      %2055 = vmatpush.msra.mxu0 %v561
      %2056 = vmatmul.f32.gmra.mxu0 %v2038
      %v2057 = vpop.f32.mrf.mxu0
      %v2058 = vadd.f32 0.0, %v2057
      %2059 = vdwg.mxu0
      %2060 = vrot.lane.b32.xlu0 %v1964, 96
      %v2061 = vpop.permute.xlu0 %2060
      %v2062 = vsel %vm1348, %v2061, 0
      %2064 = vmatpush.msra.mxu0 0.0
      %2065 = vmatpush.msra.mxu0 0.0
      %2066 = vmatpush.msra.mxu0 0.0
      %2067 = vmatpush.msra.mxu0 0.0
      %2068 = vmatpush.msra.mxu0 0.0
      %2069 = vmatpush.msra.mxu0 0.0
      %2070 = vmatpush.msra.mxu0 0.0
      %2071 = vmatpush.msra.mxu0 0.0
      %2072 = vmatpush.msra.mxu0 0.0
      %2073 = vmatpush.msra.mxu0 0.0
      %2074 = vmatpush.msra.mxu0 0.0
      %2075 = vmatpush.msra.mxu0 0.0
      %2076 = vmatpush.msra.mxu0 0.0
      %2077 = vmatpush.msra.mxu0 0.0
      %2078 = vmatpush.msra.mxu0 0.0
      %2079 = vmatpush.msra.mxu0 %v561
      %2080 = vmatmul.f32.gmra.mxu0 %v2062
      %v2081 = vpop.f32.mrf.mxu0
      %v2082 = vadd.f32 0.0, %v2081
      %2083 = vdwg.mxu0
      %2085 = vrot.lane.b32.xlu0 %v2010, 40
      %v2086 = vpop.permute.xlu0 %2085
      %2089 = vrot.lane.b32.xlu0 %v2034, 80
      %v2090 = vpop.permute.xlu0 %2089
      %2093 = vrot.lane.b32.xlu0 %v2058, 120
      %v2094 = vpop.permute.xlu0 %2093
      %2097 = vrot.lane.b32.xlu0 %v2082, 32
      %v2098 = vpop.permute.xlu0 %2097
      %v2100 = vsel %vm1271, %v1986, %v2086
      %vm2101 = vcmask 654336
      %v2102 = vsel %vm2101, %v2100, %v2090
      %vm2103 = vcmask 982016
      %v2104 = vsel %vm2103, %v2102, %v2094
      %v2105 = vsel %vm1417, %v2094, %v2098
      %v2106 = vld [vmem:[%s12] sm:$0xff]
      %v2107 = vld [vmem:[%s12 + $0x8] sm:$0xff]
      %v2108 = vld [vmem:[%s12 + $0x10] sm:$0xff]
      %v2109 = vld [vmem:[%s12 + $0x18] sm:$0xff]
      %v2110 = vld [vmem:[%s12 + $0x20] sm:$0xff]
      %v2111 = vld [vmem:[%s12 + $0x28] sm:$0xff]
      %v2112 = vld [vmem:[%s12 + $0x30] sm:$0xff]
      %v2113 = vld [vmem:[%s12 + $0x38] sm:$0xff]
      %v2114 = vld [vmem:[%s12 + $0x40] sm:$0xff]
      %v2115 = vld [vmem:[%s12 + $0x48] sm:$0xf]
      %v2116 = vld [vmem:[%s13] sm:$0xff]
      %v2117 = vld [vmem:[%s13 + $0x8] sm:$0xff]
      %v2118 = vld [vmem:[%s13 + $0x10] sm:$0xff]
      %v2119 = vld [vmem:[%s13 + $0x18] sm:$0xff]
      %v2120 = vld [vmem:[%s13 + $0x20] sm:$0xff]
      %v2121 = vld [vmem:[%s13 + $0x28] sm:$0xff]
      %v2122 = vld [vmem:[%s13 + $0x30] sm:$0xff]
      %v2123 = vld [vmem:[%s13 + $0x38] sm:$0xff]
      %v2124 = vld [vmem:[%s13 + $0x40] sm:$0xff]
      %v2125 = vld [vmem:[%s13 + $0x48] sm:$0xf]
      %2127 = vset.pattern.permute.xlu0 0
      %2128 = vperm.xlu0 %2127, %v2116
      %v2129 = vpop.permute.xlu0 %2128
      %2132 = vset.pattern.permute.xlu0 0
      %2133 = vperm.xlu0 %2132, %v2117
      %v2134 = vpop.permute.xlu0 %2133
      %2137 = vset.pattern.permute.xlu0 0
      %2138 = vperm.xlu0 %2137, %v2118
      %v2139 = vpop.permute.xlu0 %2138
      %2142 = vset.pattern.permute.xlu0 0
      %2143 = vperm.xlu0 %2142, %v2119
      %v2144 = vpop.permute.xlu0 %2143
      %2147 = vset.pattern.permute.xlu0 0
      %2148 = vperm.xlu0 %2147, %v2120
      %v2149 = vpop.permute.xlu0 %2148
      %2152 = vset.pattern.permute.xlu0 0
      %2153 = vperm.xlu0 %2152, %v2121
      %v2154 = vpop.permute.xlu0 %2153
      %2157 = vset.pattern.permute.xlu0 0
      %2158 = vperm.xlu0 %2157, %v2122
      %v2159 = vpop.permute.xlu0 %2158
      %2162 = vset.pattern.permute.xlu0 0
      %2163 = vperm.xlu0 %2162, %v2123
      %v2164 = vpop.permute.xlu0 %2163
      %2167 = vset.pattern.permute.xlu0 0
      %2168 = vperm.xlu0 %2167, %v2124
      %v2169 = vpop.permute.xlu0 %2168
      %2172 = vset.pattern.permute.xlu0 0
      %2173 = vperm.xlu0 %2172, %v2125
      %v2174 = vpop.permute.xlu0 %2173
      %v2177 = vsel %vm1348, %v2106, 0
      %v2180 = vsel %vm1348, %v2107, 0
      %v2183 = vsel %vm1348, %v2108, 0
      %v2186 = vsel %vm1348, %v2109, 0
      %v2189 = vsel %vm1348, %v2110, 0
      %v2192 = vsel %vm1348, %v2111, 0
      %v2195 = vsel %vm1348, %v2112, 0
      %v2198 = vsel %vm1348, %v2113, 0
      %v2201 = vsel %vm1348, %v2114, 0
      %v2204 = vsel %vm1348, %v2115, 0
      %2206 = vmatpush.msra.mxu0 0.0
      %2207 = vmatpush.msra.mxu0 0.0
      %2208 = vmatpush.msra.mxu0 0.0
      %2209 = vmatpush.msra.mxu0 0.0
      %2210 = vmatpush.msra.mxu0 0.0
      %2211 = vmatpush.msra.mxu0 0.0
      %2212 = vmatpush.msra.mxu0 0.0
      %2213 = vmatpush.msra.mxu0 0.0
      %2214 = vmatpush.msra.mxu0 0.0
      %2215 = vmatpush.msra.mxu0 0.0
      %2216 = vmatpush.msra.mxu0 0.0
      %2217 = vmatpush.msra.mxu0 0.0
      %2218 = vmatpush.msra.mxu0 0.0
      %2219 = vmatpush.msra.mxu0 0.0
      %2220 = vmatpush.msra.mxu0 0.0
      %2221 = vmatpush.msra.mxu0 %v2104
      %2222 = vmatmul.f32.gmra.mxu0 %v2177
      %v2223 = vpop.f32.mrf.mxu0
      %v2224 = vadd.f32 %v2129, %v2223
      %2225 = vmatmul.f32.gmra.mxu0 %v2180
      %v2226 = vpop.f32.mrf.mxu0
      %v2227 = vadd.f32 %v2134, %v2226
      %2228 = vmatmul.f32.gmra.mxu0 %v2183
      %v2229 = vpop.f32.mrf.mxu0
      %v2230 = vadd.f32 %v2139, %v2229
      %2231 = vmatmul.f32.gmra.mxu0 %v2186
      %v2232 = vpop.f32.mrf.mxu0
      %v2233 = vadd.f32 %v2144, %v2232
      %2234 = vmatmul.f32.gmra.mxu0 %v2189
      %v2235 = vpop.f32.mrf.mxu0
      %v2236 = vadd.f32 %v2149, %v2235
      %2237 = vmatmul.f32.gmra.mxu0 %v2192
      %v2238 = vpop.f32.mrf.mxu0
      %v2239 = vadd.f32 %v2154, %v2238
      %2240 = vmatmul.f32.gmra.mxu0 %v2195
      %v2241 = vpop.f32.mrf.mxu0
      %v2242 = vadd.f32 %v2159, %v2241
      %2243 = vmatmul.f32.gmra.mxu0 %v2198
      %v2244 = vpop.f32.mrf.mxu0
      %v2245 = vadd.f32 %v2164, %v2244
      %2246 = vmatmul.f32.gmra.mxu0 %v2201
      %v2247 = vpop.f32.mrf.mxu0
      %v2248 = vadd.f32 %v2169, %v2247
      %2249 = vmatmul.f32.gmra.mxu0 %v2204
      %v2250 = vpop.f32.mrf.mxu0
      %v2251 = vadd.f32 %v2174, %v2250
      %2252 = vdwg.mxu0
      %2253 = vmatpush.msra.mxu0 0.0
      %2254 = vmatpush.msra.mxu0 0.0
      %2255 = vmatpush.msra.mxu0 0.0
      %2256 = vmatpush.msra.mxu0 0.0
      %2257 = vmatpush.msra.mxu0 0.0
      %2258 = vmatpush.msra.mxu0 0.0
      %2259 = vmatpush.msra.mxu0 0.0
      %2260 = vmatpush.msra.mxu0 0.0
      %2261 = vmatpush.msra.mxu0 0.0
      %2262 = vmatpush.msra.mxu0 0.0
      %2263 = vmatpush.msra.mxu0 0.0
      %2264 = vmatpush.msra.mxu0 0.0
      %2265 = vmatpush.msra.mxu0 0.0
      %2266 = vmatpush.msra.mxu0 0.0
      %2267 = vmatpush.msra.mxu0 0.0
      %2268 = vmatpush.msra.mxu0 %v2105
      %2269 = vmatmul.f32.gmra.mxu0 %v2177
      %v2270 = vpop.f32.mrf.mxu0
      %v2271 = vadd.f32 %v2129, %v2270
      %2272 = vmatmul.f32.gmra.mxu0 %v2180
      %v2273 = vpop.f32.mrf.mxu0
      %v2274 = vadd.f32 %v2134, %v2273
      %2275 = vmatmul.f32.gmra.mxu0 %v2183
      %v2276 = vpop.f32.mrf.mxu0
      %v2277 = vadd.f32 %v2139, %v2276
      %2278 = vmatmul.f32.gmra.mxu0 %v2186
      %v2279 = vpop.f32.mrf.mxu0
      %v2280 = vadd.f32 %v2144, %v2279
      %2281 = vmatmul.f32.gmra.mxu0 %v2189
      %v2282 = vpop.f32.mrf.mxu0
      %v2283 = vadd.f32 %v2149, %v2282
      %2284 = vmatmul.f32.gmra.mxu0 %v2192
      %v2285 = vpop.f32.mrf.mxu0
      %v2286 = vadd.f32 %v2154, %v2285
      %2287 = vmatmul.f32.gmra.mxu0 %v2195
      %v2288 = vpop.f32.mrf.mxu0
      %v2289 = vadd.f32 %v2159, %v2288
      %2290 = vmatmul.f32.gmra.mxu0 %v2198
      %v2291 = vpop.f32.mrf.mxu0
      %v2292 = vadd.f32 %v2164, %v2291
      %2293 = vmatmul.f32.gmra.mxu0 %v2201
      %v2294 = vpop.f32.mrf.mxu0
      %v2295 = vadd.f32 %v2169, %v2294
      %2296 = vmatmul.f32.gmra.mxu0 %v2204
      %v2297 = vpop.f32.mrf.mxu0
      %v2298 = vadd.f32 %v2174, %v2297
      %2299 = vdwg.mxu0
      %vm2300 = vcmp.gt.f32.partialorder %v2224, 0.0
      %vm2301 = vcmp.gt.f32.partialorder %v2271, 0.0
      %vm2302 = vcmp.gt.f32.partialorder %v2227, 0.0
      %vm2303 = vcmp.gt.f32.partialorder %v2274, 0.0
      %vm2304 = vcmp.gt.f32.partialorder %v2230, 0.0
      %vm2305 = vcmp.gt.f32.partialorder %v2277, 0.0
      %vm2306 = vcmp.gt.f32.partialorder %v2233, 0.0
      %vm2307 = vcmp.gt.f32.partialorder %v2280, 0.0
      %vm2308 = vcmp.gt.f32.partialorder %v2236, 0.0
      %vm2309 = vcmp.gt.f32.partialorder %v2283, 0.0
      %vm2310 = vcmp.gt.f32.partialorder %v2239, 0.0
      %vm2311 = vcmp.gt.f32.partialorder %v2286, 0.0
      %vm2312 = vcmp.gt.f32.partialorder %v2242, 0.0
      %vm2313 = vcmp.gt.f32.partialorder %v2289, 0.0
      %vm2314 = vcmp.gt.f32.partialorder %v2245, 0.0
      %vm2315 = vcmp.gt.f32.partialorder %v2292, 0.0
      %vm2316 = vcmp.gt.f32.partialorder %v2248, 0.0
      %vm2317 = vcmp.gt.f32.partialorder %v2295, 0.0
      %vm2318 = vcmp.gt.f32.partialorder %v2251, 0.0
      %vm2319 = vcmp.gt.f32.partialorder %v2298, 0.0
      %v2320 = vmin.f32 %v2224, 0.0
      %v2321 = vmin.f32 %v2271, 0.0
      %v2322 = vmin.f32 %v2227, 0.0
      %v2323 = vmin.f32 %v2274, 0.0
      %v2324 = vmin.f32 %v2230, 0.0
      %v2325 = vmin.f32 %v2277, 0.0
      %v2326 = vmin.f32 %v2233, 0.0
      %v2327 = vmin.f32 %v2280, 0.0
      %v2328 = vmin.f32 %v2236, 0.0
      %v2329 = vmin.f32 %v2283, 0.0
      %v2330 = vmin.f32 %v2239, 0.0
      %v2331 = vmin.f32 %v2286, 0.0
      %v2332 = vmin.f32 %v2242, 0.0
      %v2333 = vmin.f32 %v2289, 0.0
      %v2334 = vmin.f32 %v2245, 0.0
      %v2335 = vmin.f32 %v2292, 0.0
      %v2336 = vmin.f32 %v2248, 0.0
      %v2337 = vmin.f32 %v2295, 0.0
      %v2338 = vmin.f32 %v2251, 0.0
      %v2339 = vmin.f32 %v2298, 0.0
      %v2340 = vmul.f32 %v2320, 1.442695
      %v2341 = vpow.pop %v2340
      %v2342 = vmul.f32 %v2321, 1.442695
      %v2343 = vpow.pop %v2342
      %v2344 = vmul.f32 %v2322, 1.442695
      %v2345 = vpow.pop %v2344
      %v2346 = vmul.f32 %v2323, 1.442695
      %v2347 = vpow.pop %v2346
      %v2348 = vmul.f32 %v2324, 1.442695
      %v2349 = vpow.pop %v2348
      %v2350 = vmul.f32 %v2325, 1.442695
      %v2351 = vpow.pop %v2350
      %v2352 = vmul.f32 %v2326, 1.442695
      %v2353 = vpow.pop %v2352
      %v2354 = vmul.f32 %v2327, 1.442695
      %v2355 = vpow.pop %v2354
      %v2356 = vmul.f32 %v2328, 1.442695
      %v2357 = vpow.pop %v2356
      %v2358 = vmul.f32 %v2329, 1.442695
      %v2359 = vpow.pop %v2358
      %v2360 = vmul.f32 %v2330, 1.442695
      %v2361 = vpow.pop %v2360
      %v2362 = vmul.f32 %v2331, 1.442695
      %v2363 = vpow.pop %v2362
      %v2364 = vmul.f32 %v2332, 1.442695
      %v2365 = vpow.pop %v2364
      %v2366 = vmul.f32 %v2333, 1.442695
      %v2367 = vpow.pop %v2366
      %v2368 = vmul.f32 %v2334, 1.442695
      %v2369 = vpow.pop %v2368
      %v2370 = vmul.f32 %v2335, 1.442695
      %v2371 = vpow.pop %v2370
      %v2372 = vmul.f32 %v2336, 1.442695
      %v2373 = vpow.pop %v2372
      %v2374 = vmul.f32 %v2337, 1.442695
      %v2375 = vpow.pop %v2374
      %v2376 = vmul.f32 %v2338, 1.442695
      %v2377 = vpow.pop %v2376
      %v2378 = vmul.f32 %v2339, 1.442695
      %v2379 = vpow.pop %v2378
      %v2380 = vsub.f32 %v2341, 1.0
      %v2381 = vsub.f32 %v2343, 1.0
      %v2382 = vsub.f32 %v2345, 1.0
      %v2383 = vsub.f32 %v2347, 1.0
      %v2384 = vsub.f32 %v2349, 1.0
      %v2385 = vsub.f32 %v2351, 1.0
      %v2386 = vsub.f32 %v2353, 1.0
      %v2387 = vsub.f32 %v2355, 1.0
      %v2388 = vsub.f32 %v2357, 1.0
      %v2389 = vsub.f32 %v2359, 1.0
      %v2390 = vsub.f32 %v2361, 1.0
      %v2391 = vsub.f32 %v2363, 1.0
      %v2392 = vsub.f32 %v2365, 1.0
      %v2393 = vsub.f32 %v2367, 1.0
      %v2394 = vsub.f32 %v2369, 1.0
      %v2395 = vsub.f32 %v2371, 1.0
      %v2396 = vsub.f32 %v2373, 1.0
      %v2397 = vsub.f32 %v2375, 1.0
      %v2398 = vsub.f32 %v2377, 1.0
      %v2399 = vsub.f32 %v2379, 1.0
      %v2400 = vsel %vm2300, %v2224, %v2380
      %v2401 = vsel %vm2301, %v2271, %v2381
      %v2402 = vsel %vm2302, %v2227, %v2382
      %v2403 = vsel %vm2303, %v2274, %v2383
      %v2404 = vsel %vm2304, %v2230, %v2384
      %v2405 = vsel %vm2305, %v2277, %v2385
      %v2406 = vsel %vm2306, %v2233, %v2386
      %v2407 = vsel %vm2307, %v2280, %v2387
      %v2408 = vsel %vm2308, %v2236, %v2388
      %v2409 = vsel %vm2309, %v2283, %v2389
      %v2410 = vsel %vm2310, %v2239, %v2390
      %v2411 = vsel %vm2311, %v2286, %v2391
      %v2412 = vsel %vm2312, %v2242, %v2392
      %v2413 = vsel %vm2313, %v2289, %v2393
      %v2414 = vsel %vm2314, %v2245, %v2394
      %v2415 = vsel %vm2315, %v2292, %v2395
      %v2416 = vsel %vm2316, %v2248, %v2396
      %v2417 = vsel %vm2317, %v2295, %v2397
      %v2418 = vsel %vm2318, %v2251, %v2398
      %v2419 = vsel %vm2319, %v2298, %v2399
      %2420 = vst.msk [vmem:[#allocation5] sm:$0xff] %vm563, 0.0
      %2421 = vst.msk [vmem:[#allocation5 + $0x38] sm:$0xff] %vm563, 0.0
      %vm2422 = vcmask 149504
      %2423 = vst.msk [vmem:[#allocation5 + $0x70] sm:$0x7] %vm2422, 0.0
      %2430 = vrot.lane.b32.xlu0 %v2400, 19
      %v2431 = vpop.permute.xlu0 %2430
      %2432 = vrot.lane.b32.xlu0 %v2401, 19
      %v2433 = vpop.permute.xlu0 %2432
      %2434 = vrot.lane.b32.xlu0 %v2402, 19
      %v2435 = vpop.permute.xlu0 %2434
      %2436 = vrot.lane.b32.xlu0 %v2403, 19
      %v2437 = vpop.permute.xlu0 %2436
      %2438 = vrot.lane.b32.xlu0 %v2404, 19
      %v2439 = vpop.permute.xlu0 %2438
      %2440 = vrot.lane.b32.xlu0 %v2405, 19
      %v2441 = vpop.permute.xlu0 %2440
      %v2442 = vsel %vm563, %v2431, %v2433
      %v2443 = vsel %vm563, %v2435, %v2437
      %v2444 = vsel %vm563, %v2439, %v2441
      %vm2451 = vcmask 1047704
      %2452 = vst.msk [vmem:[#allocation5] sm:$0xff] %vm2451, %v2431
      %2453 = vst.msk [vmem:[#allocation5 + $0x8] sm:$0xff] %vm690, %v2442
      %2454 = vst.msk [vmem:[#allocation5 + $0x38] sm:$0xff] %vm2451, %v2435
      %2455 = vst.msk [vmem:[#allocation5 + $0x40] sm:$0xff] %vm690, %v2443
      %vm2456 = vcmask 1042584
      %2457 = vst.msk [vmem:[#allocation5 + $0x70] sm:$0x7] %vm2456, %v2439
      %vm2458 = vcmask 739328
      %2459 = vst.msk [vmem:[#allocation5 + $0x78] sm:$0x7] %vm2458, %v2444
      %vm2460 = vcmask 900824
      %2461 = vst.msk [vmem:[#allocation5 + $0x8] sm:$0xff] %vm2460, 0.0
      %2462 = vst.msk [vmem:[#allocation5 + $0x40] sm:$0xff] %vm2460, 0.0
      %vm2463 = vcmask 895704
      %2464 = vst.msk [vmem:[#allocation5 + $0x78] sm:$0x7] %vm2463, 0.0
      %vm2469 = vcmask 1044480
      %v2470 = vrot.slane %v2404, 3
      %v2471 = vrot.slane %v2406, 3
      %v2472 = vsel %vm2469, %v2470, %v2471
      %v2473 = vrot.slane %v2405, 3
      %v2474 = vrot.slane %v2407, 3
      %v2475 = vsel %vm2469, %v2473, %v2474
      %v2476 = vrot.slane %v2408, 3
      %v2477 = vsel %vm2469, %v2471, %v2476
      %v2478 = vrot.slane %v2409, 3
      %v2479 = vsel %vm2469, %v2474, %v2478
      %2480 = vrot.lane.b32.xlu0 %v2472, 110
      %v2481 = vpop.permute.xlu0 %2480
      %2482 = vrot.lane.b32.xlu0 %v2475, 110
      %v2483 = vpop.permute.xlu0 %2482
      %2484 = vrot.lane.b32.xlu0 %v2477, 110
      %v2485 = vpop.permute.xlu0 %2484
      %2486 = vrot.lane.b32.xlu0 %v2479, 110
      %v2487 = vpop.permute.xlu0 %2486
      %2488 = vrot.lane.b32.xlu0 %v2476, 110
      %v2489 = vpop.permute.xlu0 %2488
      %2490 = vrot.lane.b32.xlu0 %v2478, 110
      %v2491 = vpop.permute.xlu0 %2490
      %vm2492 = vcmask 900096
      %v2493 = vsel %vm2492, %v2481, %v2483
      %v2494 = vsel %vm2492, %v2485, %v2487
      %v2495 = vsel %vm2492, %v2489, %v2491
      %vm2505 = vcmask 1048432
      %2506 = vst.msk [vmem:[#allocation5 + $0x8] sm:$0xff] %vm2505, %v2481
      %2507 = vst [vmem:[#allocation5 + $0x10] sm:$0xff] %v2493
      %vm2508 = vcmask 441344
      %2509 = vst.msk [vmem:[#allocation5 + $0x18] sm:$0xff] %vm2508, %v2483
      %2510 = vst.msk [vmem:[#allocation5 + $0x40] sm:$0xff] %vm2505, %v2485
      %2511 = vst [vmem:[#allocation5 + $0x48] sm:$0xff] %v2494
      %2512 = vst.msk [vmem:[#allocation5 + $0x50] sm:$0xff] %vm2508, %v2487
      %vm2513 = vcmask 1043312
      %2514 = vst.msk [vmem:[#allocation5 + $0x78] sm:$0x7] %vm2513, %v2489
      %2515 = vst [vmem:[#allocation5 + $0x80] sm:$0x7] %v2495
      %vm2516 = vcmask 436224
      %2517 = vst.msk [vmem:[#allocation5 + $0x88] sm:$0x7] %vm2516, %v2491
      %vm2518 = vcmask 597424
      %2519 = vst.msk [vmem:[#allocation5 + $0x18] sm:$0xff] %vm2518, 0.0
      %2520 = vst.msk [vmem:[#allocation5 + $0x50] sm:$0xff] %vm2518, 0.0
      %vm2521 = vcmask 592304
      %2522 = vst.msk [vmem:[#allocation5 + $0x88] sm:$0x7] %vm2521, 0.0
      %vm2529 = vcmask 1041408
      %v2530 = vrot.slane %v2408, 6
      %v2531 = vrot.slane %v2410, 6
      %v2532 = vsel %vm2529, %v2530, %v2531
      %v2533 = vrot.slane %v2409, 6
      %v2534 = vrot.slane %v2411, 6
      %v2535 = vsel %vm2529, %v2533, %v2534
      %v2536 = vrot.slane %v2412, 6
      %v2537 = vsel %vm2529, %v2531, %v2536
      %v2538 = vrot.slane %v2413, 6
      %v2539 = vsel %vm2529, %v2534, %v2538
      %v2540 = vrot.slane %v2414, 6
      %v2541 = vsel %vm2529, %v2536, %v2540
      %v2542 = vrot.slane %v2415, 6
      %v2543 = vsel %vm2529, %v2538, %v2542
      %2544 = vrot.lane.b32.xlu0 %v2532, 73
      %v2545 = vpop.permute.xlu0 %2544
      %2546 = vrot.lane.b32.xlu0 %v2535, 73
      %v2547 = vpop.permute.xlu0 %2546
      %2548 = vrot.lane.b32.xlu0 %v2537, 73
      %v2549 = vpop.permute.xlu0 %2548
      %2550 = vrot.lane.b32.xlu0 %v2539, 73
      %v2551 = vpop.permute.xlu0 %2550
      %2552 = vrot.lane.b32.xlu0 %v2541, 73
      %v2553 = vpop.permute.xlu0 %2552
      %2554 = vrot.lane.b32.xlu0 %v2543, 73
      %v2555 = vpop.permute.xlu0 %2554
      %vm2556 = vcmask 596992
      %v2557 = vsel %vm2556, %v2545, %v2547
      %v2558 = vsel %vm2556, %v2549, %v2551
      %v2559 = vsel %vm2556, %v2553, %v2555
      %vm2569 = vcmask 1048136
      %2570 = vst.msk [vmem:[#allocation5 + $0x18] sm:$0xff] %vm2569, %v2545
      %2571 = vst [vmem:[#allocation5 + $0x20] sm:$0xff] %v2557
      %vm2572 = vcmask 138240
      %2573 = vst.msk [vmem:[#allocation5 + $0x28] sm:$0xff] %vm2572, %v2547
      %2574 = vst.msk [vmem:[#allocation5 + $0x50] sm:$0xff] %vm2569, %v2549
      %2575 = vst [vmem:[#allocation5 + $0x58] sm:$0xff] %v2558
      %2576 = vst.msk [vmem:[#allocation5 + $0x60] sm:$0xff] %vm2572, %v2551
      %vm2577 = vcmask 1043016
      %2578 = vst.msk [vmem:[#allocation5 + $0x88] sm:$0x7] %vm2577, %v2553
      %2579 = vst [vmem:[#allocation5 + $0x90] sm:$0x7] %v2559
      %vm2580 = vcmask 133120
      %2581 = vst.msk [vmem:[#allocation5 + $0x98] sm:$0x7] %vm2580, %v2555
      %vm2582 = vcmask 294024
      %2583 = vst.msk [vmem:[#allocation5 + $0x28] sm:$0xff] %vm2582, 0.0
      %2584 = vst.msk [vmem:[#allocation5 + $0x60] sm:$0xff] %vm2582, 0.0
      %vm2585 = vcmask 288904
      %2586 = vst.msk [vmem:[#allocation5 + $0x98] sm:$0x7] %vm2585, 0.0
      %vm2591 = vcmask 1046528
      %v2592 = vrot.slane %v2414, 1
      %v2593 = vrot.slane %v2416, 1
      %v2594 = vsel %vm2591, %v2592, %v2593
      %v2595 = vrot.slane %v2415, 1
      %v2596 = vrot.slane %v2417, 1
      %v2597 = vsel %vm2591, %v2595, %v2596
      %v2598 = vrot.slane %v2418, 1
      %v2599 = vsel %vm2591, %v2593, %v2598
      %v2600 = vrot.slane %v2419, 1
      %v2601 = vsel %vm2591, %v2596, %v2600
      %2602 = vrot.lane.b32.xlu0 %v2594, 36
      %v2603 = vpop.permute.xlu0 %2602
      %2604 = vrot.lane.b32.xlu0 %v2597, 36
      %v2605 = vpop.permute.xlu0 %2604
      %2606 = vrot.lane.b32.xlu0 %v2599, 36
      %v2607 = vpop.permute.xlu0 %2606
      %2608 = vrot.lane.b32.xlu0 %v2601, 36
      %v2609 = vpop.permute.xlu0 %2608
      %2610 = vrot.lane.b32.xlu0 %v2598, 36
      %v2611 = vpop.permute.xlu0 %2610
      %2612 = vrot.lane.b32.xlu0 %v2600, 36
      %v2613 = vpop.permute.xlu0 %2612
      %vm2614 = vcmask 293888
      %v2615 = vsel %vm2614, %v2603, %v2605
      %v2616 = vsel %vm2614, %v2607, %v2609
      %v2617 = vsel %vm2614, %v2611, %v2613
      %vm2624 = vcmask 1047840
      %2625 = vst.msk [vmem:[#allocation5 + $0x28] sm:$0xff] %vm2624, %v2603
      %vm2626 = vcmask 883712
      %2627 = vst.msk [vmem:[#allocation5 + $0x30] sm:$0xff] %vm2626, %v2615
      %2628 = vst.msk [vmem:[#allocation5 + $0x60] sm:$0xff] %vm2624, %v2607
      %2629 = vst.msk [vmem:[#allocation5 + $0x68] sm:$0xff] %vm2626, %v2616
      %vm2630 = vcmask 1042720
      %2631 = vst.msk [vmem:[#allocation5 + $0x98] sm:$0x7] %vm2630, %v2611
      %vm2632 = vcmask 878592
      %2633 = vst.msk [vmem:[#allocation5 + $0xa0] sm:$0x7] %vm2632, %v2617
      %v2634 = vld [vmem:[#allocation5] sm:$0xff]
      %v2635 = vld [vmem:[#allocation5 + $0x8] sm:$0xff]
      %v2636 = vld [vmem:[#allocation5 + $0x10] sm:$0xff]
      %v2637 = vld [vmem:[#allocation5 + $0x18] sm:$0xff]
      %v2638 = vld [vmem:[#allocation5 + $0x20] sm:$0xff]
      %v2639 = vld [vmem:[#allocation5 + $0x28] sm:$0xff]
      %v2640 = vld [vmem:[#allocation5 + $0x30] sm:$0xff]
      %v2641 = vld [vmem:[#allocation5 + $0x38] sm:$0xff]
      %v2642 = vld [vmem:[#allocation5 + $0x40] sm:$0xff]
      %v2643 = vld [vmem:[#allocation5 + $0x48] sm:$0xff]
      %v2644 = vld [vmem:[#allocation5 + $0x50] sm:$0xff]
      %v2645 = vld [vmem:[#allocation5 + $0x58] sm:$0xff]
      %v2646 = vld [vmem:[#allocation5 + $0x60] sm:$0xff]
      %v2647 = vld [vmem:[#allocation5 + $0x68] sm:$0xff]
      %v2648 = vld [vmem:[#allocation5 + $0x70] sm:$0x7]
      %v2649 = vld [vmem:[#allocation5 + $0x78] sm:$0x7]
      %v2650 = vld [vmem:[#allocation5 + $0x80] sm:$0x7]
      %v2651 = vld [vmem:[#allocation5 + $0x88] sm:$0x7]
      %v2652 = vld [vmem:[#allocation5 + $0x90] sm:$0x7]
      %v2653 = vld [vmem:[#allocation5 + $0x98] sm:$0x7]
      %v2654 = vld [vmem:[#allocation5 + $0xa0] sm:$0x7]
      %v2655 = vld [vmem:[%s14] sm:$0xff]
      %v2656 = vld [vmem:[%s14 + $0x8] sm:$0xff]
      %v2657 = vld [vmem:[%s14 + $0x10] sm:$0xff]
      %v2658 = vld [vmem:[%s14 + $0x18] sm:$0xff]
      %v2659 = vld [vmem:[%s14 + $0x20] sm:$0xff]
      %v2660 = vld [vmem:[%s14 + $0x28] sm:$0xff]
      %v2661 = vld [vmem:[%s14 + $0x30] sm:$0xff]
      %v2662 = vld [vmem:[%s14 + $0x38] sm:$0xff]
      %v2663 = vld [vmem:[%s14 + $0x40] sm:$0xff]
      %v2664 = vld [vmem:[%s14 + $0x48] sm:$0xff]
      %v2665 = vld [vmem:[%s14 + $0x50] sm:$0xff]
      %v2666 = vld [vmem:[%s14 + $0x58] sm:$0xff]
      %v2667 = vld [vmem:[%s14 + $0x60] sm:$0xff]
      %v2668 = vld [vmem:[%s14 + $0x68] sm:$0xff]
      %v2669 = vld [vmem:[%s14 + $0x70] sm:$0xff]
      %v2670 = vld [vmem:[%s14 + $0x78] sm:$0xff]
      %v2671 = vld [vmem:[%s14 + $0x80] sm:$0xff]
      %v2672 = vld [vmem:[%s14 + $0x88] sm:$0xff]
      %v2673 = vld [vmem:[%s14 + $0x90] sm:$0xff]
      %v2674 = vld [vmem:[%s14 + $0x98] sm:$0xff]
      %v2675 = vld [vmem:[%s14 + $0xa0] sm:$0xff]
      %v2676 = vld [vmem:[%s14 + $0xa8] sm:$0xff]
      %v2677 = vld [vmem:[%s14 + $0xb0] sm:$0xff]
      %v2678 = vld [vmem:[%s14 + $0xb8] sm:$0xff]
      %v2679 = vld [vmem:[%s14 + $0xc0] sm:$0xff]
      %v2680 = vld [vmem:[%s14 + $0xc8] sm:$0xff]
      %v2681 = vld [vmem:[%s14 + $0xd0] sm:$0xff]
      %v2682 = vld [vmem:[%s14 + $0xd8] sm:$0xff]
      %v2683 = vld [vmem:[%s14 + $0xe0] sm:$0xff]
      %v2684 = vld [vmem:[%s14 + $0xe8] sm:$0xff]
      %v2685 = vld [vmem:[%s14 + $0xf0] sm:$0xff]
      %v2686 = vld [vmem:[%s14 + $0xf8] sm:$0xff]
      %v2687 = vld [vmem:[%s14 + $0x100] sm:$0xff]
      %v2688 = vld [vmem:[%s14 + $0x108] sm:$0xff]
      %v2689 = vld [vmem:[%s14 + $0x110] sm:$0xff]
      %v2690 = vld [vmem:[%s14 + $0x118] sm:$0xff]
      %v2691 = vld [vmem:[%s14 + $0x120] sm:$0xff]
      %v2692 = vld [vmem:[%s14 + $0x128] sm:$0xff]
      %v2693 = vld [vmem:[%s14 + $0x130] sm:$0xff]
      %v2694 = vld [vmem:[%s14 + $0x138] sm:$0xff]
      %v2695 = vld [vmem:[%s14 + $0x140] sm:$0xff]
      %v2696 = vld [vmem:[%s14 + $0x148] sm:$0xff]
      %v2697 = vld [vmem:[%s14 + $0x150] sm:$0xff]
      %v2698 = vld [vmem:[%s14 + $0x158] sm:$0xff]
      %v2699 = vld [vmem:[%s14 + $0x160] sm:$0xff]
      %v2700 = vld [vmem:[%s14 + $0x168] sm:$0xff]
      %v2701 = vld [vmem:[%s14 + $0x170] sm:$0xff]
      %v2702 = vld [vmem:[%s14 + $0x178] sm:$0xff]
      %v2703 = vld [vmem:[%s14 + $0x180] sm:$0xff]
      %v2704 = vld [vmem:[%s14 + $0x188] sm:$0xff]
      %v2705 = vld [vmem:[%s14 + $0x190] sm:$0xff]
      %v2706 = vld [vmem:[%s14 + $0x198] sm:$0xff]
      %v2707 = vld [vmem:[%s14 + $0x1a0] sm:$0xff]
      %v2708 = vld [vmem:[%s14 + $0x1a8] sm:$0xff]
      %v2709 = vld [vmem:[%s14 + $0x1b0] sm:$0xff]
      %v2710 = vld [vmem:[%s14 + $0x1b8] sm:$0xff]
      %v2711 = vld [vmem:[%s14 + $0x1c0] sm:$0xff]
      %v2712 = vld [vmem:[%s14 + $0x1c8] sm:$0xff]
      %v2713 = vld [vmem:[%s14 + $0x1d0] sm:$0xff]
      %v2714 = vld [vmem:[%s14 + $0x1d8] sm:$0xff]
      %v2715 = vld [vmem:[%s14 + $0x1e0] sm:$0xff]
      %v2716 = vld [vmem:[%s14 + $0x1e8] sm:$0xff]
      %v2717 = vld [vmem:[%s14 + $0x1f0] sm:$0xff]
      %v2718 = vld [vmem:[%s14 + $0x1f8] sm:$0xff]
      %v2719 = vld [vmem:[%s14 + $0x200] sm:$0xff]
      %v2720 = vld [vmem:[%s14 + $0x208] sm:$0xff]
      %v2721 = vld [vmem:[%s14 + $0x210] sm:$0xff]
      %v2722 = vld [vmem:[%s14 + $0x218] sm:$0xff]
      %v2723 = vld [vmem:[%s14 + $0x220] sm:$0xff]
      %v2724 = vld [vmem:[%s14 + $0x228] sm:$0xff]
      %v2725 = vld [vmem:[%s14 + $0x230] sm:$0xff]
      %v2726 = vld [vmem:[%s14 + $0x238] sm:$0xff]
      %v2727 = vld [vmem:[%s14 + $0x240] sm:$0xff]
      %v2728 = vld [vmem:[%s14 + $0x248] sm:$0xff]
      %v2729 = vld [vmem:[%s14 + $0x250] sm:$0xff]
      %v2730 = vld [vmem:[%s14 + $0x258] sm:$0xff]
      %v2731 = vld [vmem:[%s14 + $0x260] sm:$0xff]
      %v2732 = vld [vmem:[%s14 + $0x268] sm:$0xff]
      %v2733 = vld [vmem:[%s14 + $0x270] sm:$0xff]
      %v2734 = vld [vmem:[%s14 + $0x278] sm:$0xff]
      %v2735 = vld [vmem:[%s14 + $0x280] sm:$0xff]
      %v2736 = vld [vmem:[%s14 + $0x288] sm:$0xff]
      %v2737 = vld [vmem:[%s14 + $0x290] sm:$0xff]
      %v2738 = vld [vmem:[%s14 + $0x298] sm:$0xff]
      %v2739 = vld [vmem:[%s14 + $0x2a0] sm:$0xff]
      %v2740 = vld [vmem:[%s14 + $0x2a8] sm:$0xff]
      %v2741 = vld [vmem:[%s14 + $0x2b0] sm:$0xff]
      %v2742 = vld [vmem:[%s14 + $0x2b8] sm:$0xff]
      %v2743 = vld [vmem:[%s14 + $0x2c0] sm:$0xff]
      %v2744 = vld [vmem:[%s14 + $0x2c8] sm:$0xff]
      %v2745 = vld [vmem:[%s14 + $0x2d0] sm:$0xff]
      %v2746 = vld [vmem:[%s14 + $0x2d8] sm:$0xff]
      %v2747 = vld [vmem:[%s14 + $0x2e0] sm:$0xff]
      %v2748 = vld [vmem:[%s14 + $0x2e8] sm:$0xff]
      %v2749 = vld [vmem:[%s14 + $0x2f0] sm:$0xff]
      %v2750 = vld [vmem:[%s14 + $0x2f8] sm:$0xff]
      %v2751 = vld [vmem:[%s14 + $0x300] sm:$0xff]
      %v2752 = vld [vmem:[%s14 + $0x308] sm:$0xff]
      %v2753 = vld [vmem:[%s14 + $0x310] sm:$0xff]
      %v2754 = vld [vmem:[%s14 + $0x318] sm:$0xff]
      %v2755 = vld [vmem:[%s14 + $0x320] sm:$0xff]
      %v2756 = vld [vmem:[%s14 + $0x328] sm:$0xff]
      %v2757 = vld [vmem:[%s14 + $0x330] sm:$0xff]
      %v2758 = vld [vmem:[%s14 + $0x338] sm:$0xff]
      %v2759 = vld [vmem:[%s14 + $0x340] sm:$0xff]
      %v2760 = vld [vmem:[%s14 + $0x348] sm:$0xff]
      %v2761 = vld [vmem:[%s14 + $0x350] sm:$0xff]
      %v2762 = vld [vmem:[%s14 + $0x358] sm:$0xff]
      %v2763 = vld [vmem:[%s14 + $0x360] sm:$0xff]
      %v2764 = vld [vmem:[%s14 + $0x368] sm:$0xff]
      %v2765 = vld [vmem:[%s14 + $0x370] sm:$0xff]
      %v2766 = vld [vmem:[%s14 + $0x378] sm:$0xff]
      %v2767 = vld [vmem:[%s14 + $0x380] sm:$0xff]
      %v2768 = vld [vmem:[%s14 + $0x388] sm:$0xff]
      %v2769 = vld [vmem:[%s14 + $0x390] sm:$0xff]
      %v2770 = vld [vmem:[%s14 + $0x398] sm:$0xff]
      %v2771 = vld [vmem:[%s14 + $0x3a0] sm:$0xff]
      %v2772 = vld [vmem:[%s14 + $0x3a8] sm:$0xff]
      %v2773 = vld [vmem:[%s14 + $0x3b0] sm:$0xff]
      %v2774 = vld [vmem:[%s14 + $0x3b8] sm:$0xff]
      %v2775 = vld [vmem:[%s14 + $0x3c0] sm:$0xff]
      %v2776 = vld [vmem:[%s14 + $0x3c8] sm:$0xff]
      %v2777 = vld [vmem:[%s14 + $0x3d0] sm:$0xff]
      %v2778 = vld [vmem:[%s14 + $0x3d8] sm:$0xff]
      %v2779 = vld [vmem:[%s14 + $0x3e0] sm:$0xff]
      %v2780 = vld [vmem:[%s14 + $0x3e8] sm:$0xff]
      %v2781 = vld [vmem:[%s14 + $0x3f0] sm:$0xff]
      %v2782 = vld [vmem:[%s14 + $0x3f8] sm:$0xff]
      %v2783 = vld [vmem:[%s14 + $0x400] sm:$0xff]
      %v2784 = vld [vmem:[%s14 + $0x408] sm:$0xff]
      %v2785 = vld [vmem:[%s14 + $0x410] sm:$0xff]
      %v2786 = vld [vmem:[%s14 + $0x418] sm:$0xff]
      %v2787 = vld [vmem:[%s14 + $0x420] sm:$0xff]
      %v2788 = vld [vmem:[%s14 + $0x428] sm:$0xff]
      %v2789 = vld [vmem:[%s14 + $0x430] sm:$0xff]
      %v2790 = vld [vmem:[%s14 + $0x438] sm:$0xff]
      %v2791 = vld [vmem:[%s14 + $0x440] sm:$0xff]
      %v2792 = vld [vmem:[%s14 + $0x448] sm:$0xff]
      %v2793 = vld [vmem:[%s14 + $0x450] sm:$0xff]
      %v2794 = vld [vmem:[%s14 + $0x458] sm:$0xff]
      %v2795 = vld [vmem:[%s14 + $0x460] sm:$0xff]
      %v2796 = vld [vmem:[%s14 + $0x468] sm:$0xff]
      %v2797 = vld [vmem:[%s14 + $0x470] sm:$0xff]
      %v2798 = vld [vmem:[%s14 + $0x478] sm:$0xff]
      %v2799 = vld [vmem:[%s14 + $0x480] sm:$0xff]
      %v2800 = vld [vmem:[%s14 + $0x488] sm:$0xff]
      %v2801 = vld [vmem:[%s14 + $0x490] sm:$0xff]
      %v2802 = vld [vmem:[%s14 + $0x498] sm:$0xff]
      %v2803 = vld [vmem:[%s14 + $0x4a0] sm:$0xff]
      %v2804 = vld [vmem:[%s14 + $0x4a8] sm:$0xff]
      %v2805 = vld [vmem:[%s14 + $0x4b0] sm:$0xff]
      %v2806 = vld [vmem:[%s14 + $0x4b8] sm:$0xff]
      %v2807 = vld [vmem:[%s14 + $0x4c0] sm:$0xff]
      %v2808 = vld [vmem:[%s14 + $0x4c8] sm:$0xff]
      %v2809 = vld [vmem:[%s14 + $0x4d0] sm:$0xff]
      %v2810 = vld [vmem:[%s14 + $0x4d8] sm:$0xff]
      %v2811 = vld [vmem:[%s14 + $0x4e0] sm:$0xff]
      %v2812 = vld [vmem:[%s14 + $0x4e8] sm:$0xff]
      %v2813 = vld [vmem:[%s14 + $0x4f0] sm:$0xff]
      %v2814 = vld [vmem:[%s14 + $0x4f8] sm:$0xff]
      %v2815 = vld [vmem:[%s14 + $0x500] sm:$0xff]
      %v2816 = vld [vmem:[%s14 + $0x508] sm:$0xff]
      %v2817 = vld [vmem:[%s14 + $0x510] sm:$0xff]
      %v2818 = vld [vmem:[%s14 + $0x518] sm:$0xff]
      %v2819 = vld [vmem:[%s14 + $0x520] sm:$0xff]
      %v2820 = vld [vmem:[%s14 + $0x528] sm:$0xff]
      %v2821 = vld [vmem:[%s14 + $0x530] sm:$0xff]
      %v2822 = vld [vmem:[%s14 + $0x538] sm:$0xff]
      %v2823 = vld [vmem:[%s14 + $0x540] sm:$0xff]
      %v2824 = vld [vmem:[%s14 + $0x548] sm:$0xff]
      %v2825 = vld [vmem:[%s14 + $0x550] sm:$0xff]
      %v2826 = vld [vmem:[%s14 + $0x558] sm:$0xff]
      %v2827 = vld [vmem:[%s14 + $0x560] sm:$0xff]
      %v2828 = vld [vmem:[%s14 + $0x568] sm:$0xff]
      %v2829 = vld [vmem:[%s14 + $0x570] sm:$0xff]
      %v2830 = vld [vmem:[%s14 + $0x578] sm:$0xff]
      %v2831 = vld [vmem:[%s14 + $0x580] sm:$0xff]
      %v2832 = vld [vmem:[%s14 + $0x588] sm:$0xff]
      %v2833 = vld [vmem:[%s14 + $0x590] sm:$0xff]
      %v2834 = vld [vmem:[%s14 + $0x598] sm:$0xff]
      %v2835 = vld [vmem:[%s14 + $0x5a0] sm:$0xff]
      %v2836 = vld [vmem:[%s14 + $0x5a8] sm:$0xff]
      %v2837 = vld [vmem:[%s14 + $0x5b0] sm:$0xff]
      %v2838 = vld [vmem:[%s14 + $0x5b8] sm:$0xff]
      %v2839 = vld [vmem:[%s14 + $0x5c0] sm:$0xff]
      %v2840 = vld [vmem:[%s14 + $0x5c8] sm:$0xff]
      %v2841 = vld [vmem:[%s14 + $0x5d0] sm:$0xff]
      %v2842 = vld [vmem:[%s14 + $0x5d8] sm:$0xff]
      %v2843 = vld [vmem:[%s14 + $0x5e0] sm:$0xff]
      %v2844 = vld [vmem:[%s14 + $0x5e8] sm:$0xff]
      %v2845 = vld [vmem:[%s14 + $0x5f0] sm:$0xff]
      %v2846 = vld [vmem:[%s14 + $0x5f8] sm:$0xff]
      %v2847 = vld [vmem:[%s14 + $0x600] sm:$0xff]
      %v2848 = vld [vmem:[%s14 + $0x608] sm:$0xff]
      %v2849 = vld [vmem:[%s14 + $0x610] sm:$0xff]
      %v2850 = vld [vmem:[%s14 + $0x618] sm:$0xff]
      %v2851 = vld [vmem:[%s14 + $0x620] sm:$0xff]
      %v2852 = vld [vmem:[%s14 + $0x628] sm:$0xff]
      %v2853 = vld [vmem:[%s14 + $0x630] sm:$0xff]
      %v2854 = vld [vmem:[%s14 + $0x638] sm:$0xff]
      %v2855 = vld [vmem:[%s14 + $0x640] sm:$0xff]
      %v2856 = vld [vmem:[%s14 + $0x648] sm:$0xff]
      %v2857 = vld [vmem:[%s14 + $0x650] sm:$0xff]
      %v2858 = vld [vmem:[%s14 + $0x658] sm:$0xff]
      %v2859 = vld [vmem:[%s14 + $0x660] sm:$0xff]
      %v2860 = vld [vmem:[%s14 + $0x668] sm:$0xff]
      %v2861 = vld [vmem:[%s14 + $0x670] sm:$0xff]
      %v2862 = vld [vmem:[%s14 + $0x678] sm:$0xff]
      %v2863 = vld [vmem:[%s14 + $0x680] sm:$0xff]
      %v2864 = vld [vmem:[%s14 + $0x688] sm:$0xff]
      %v2865 = vld [vmem:[%s14 + $0x690] sm:$0xff]
      %v2866 = vld [vmem:[%s14 + $0x698] sm:$0xff]
      %v2867 = vld [vmem:[%s14 + $0x6a0] sm:$0xff]
      %v2868 = vld [vmem:[%s14 + $0x6a8] sm:$0xff]
      %v2869 = vld [vmem:[%s14 + $0x6b0] sm:$0xff]
      %v2870 = vld [vmem:[%s14 + $0x6b8] sm:$0xff]
      %v2871 = vld [vmem:[%s14 + $0x6c0] sm:$0xff]
      %v2872 = vld [vmem:[%s14 + $0x6c8] sm:$0xff]
      %v2873 = vld [vmem:[%s14 + $0x6d0] sm:$0xf]
      %v2874 = vld [vmem:[%s14 + $0x6d8] sm:$0xf]
      %s2875 = sld [smem:[#allocation6]]
      %v2876 = vstv %s2875
      %v2878 = vsel %vm2626, %v2640, 0
      %v2881 = vsel %vm2626, %v2647, 0
      %v2884 = vsel %vm2626, %v2654, 0
      %vm2886 = vcmask 1043456
      %v2888 = vsel %vm2886, %v2873, 0
      %v2891 = vsel %vm2886, %v2874, 0
      %2893 = vmatpush.msra.mxu0 %v2685
      %2894 = vmatpush.msra.mxu0 %v2683
      %2895 = vmatpush.msra.mxu0 %v2681
      %2896 = vmatpush.msra.mxu0 %v2679
      %2897 = vmatpush.msra.mxu0 %v2677
      %2898 = vmatpush.msra.mxu0 %v2675
      %2899 = vmatpush.msra.mxu0 %v2673
      %2900 = vmatpush.msra.mxu0 %v2671
      %2901 = vmatpush.msra.mxu0 %v2669
      %2902 = vmatpush.msra.mxu0 %v2667
      %2903 = vmatpush.msra.mxu0 %v2665
      %2904 = vmatpush.msra.mxu0 %v2663
      %2905 = vmatpush.msra.mxu0 %v2661
      %2906 = vmatpush.msra.mxu0 %v2659
      %2907 = vmatpush.msra.mxu0 %v2657
      %2908 = vmatpush.msra.mxu0 %v2655
      %2909 = vmatmul.f32.gmra.mxu0 %v2634
      %v2910 = vpop.f32.mrf.mxu0
      %v2911 = vadd.f32 %v2876, %v2910
      %2912 = vmatmul.f32.gmra.mxu0 %v2641
      %v2913 = vpop.f32.mrf.mxu0
      %v2914 = vadd.f32 %v2876, %v2913
      %2915 = vmatmul.f32.gmra.mxu0 %v2648
      %v2916 = vpop.f32.mrf.mxu0
      %v2917 = vadd.f32 %v2876, %v2916
      %2918 = vdwg.mxu0
      %2919 = vmatpush.msra.mxu0 %v2717
      %2920 = vmatpush.msra.mxu0 %v2715
      %2921 = vmatpush.msra.mxu0 %v2713
      %2922 = vmatpush.msra.mxu0 %v2711
      %2923 = vmatpush.msra.mxu0 %v2709
      %2924 = vmatpush.msra.mxu0 %v2707
      %2925 = vmatpush.msra.mxu0 %v2705
      %2926 = vmatpush.msra.mxu0 %v2703
      %2927 = vmatpush.msra.mxu0 %v2701
      %2928 = vmatpush.msra.mxu0 %v2699
      %2929 = vmatpush.msra.mxu0 %v2697
      %2930 = vmatpush.msra.mxu0 %v2695
      %2931 = vmatpush.msra.mxu0 %v2693
      %2932 = vmatpush.msra.mxu0 %v2691
      %2933 = vmatpush.msra.mxu0 %v2689
      %2934 = vmatpush.msra.mxu0 %v2687
      %2935 = vmatmul.f32.gmra.mxu0 %v2635
      %v2936 = vpop.f32.mrf.mxu0
      %v2937 = vadd.f32 %v2911, %v2936
      %2938 = vmatmul.f32.gmra.mxu0 %v2642
      %v2939 = vpop.f32.mrf.mxu0
      %v2940 = vadd.f32 %v2914, %v2939
      %2941 = vmatmul.f32.gmra.mxu0 %v2649
      %v2942 = vpop.f32.mrf.mxu0
      %v2943 = vadd.f32 %v2917, %v2942
      %2944 = vdwg.mxu0
      %2945 = vmatpush.msra.mxu0 %v2749
      %2946 = vmatpush.msra.mxu0 %v2747
      %2947 = vmatpush.msra.mxu0 %v2745
      %2948 = vmatpush.msra.mxu0 %v2743
      %2949 = vmatpush.msra.mxu0 %v2741
      %2950 = vmatpush.msra.mxu0 %v2739
      %2951 = vmatpush.msra.mxu0 %v2737
      %2952 = vmatpush.msra.mxu0 %v2735
      %2953 = vmatpush.msra.mxu0 %v2733
      %2954 = vmatpush.msra.mxu0 %v2731
      %2955 = vmatpush.msra.mxu0 %v2729
      %2956 = vmatpush.msra.mxu0 %v2727
      %2957 = vmatpush.msra.mxu0 %v2725
      %2958 = vmatpush.msra.mxu0 %v2723
      %2959 = vmatpush.msra.mxu0 %v2721
      %2960 = vmatpush.msra.mxu0 %v2719
      %2961 = vmatmul.f32.gmra.mxu0 %v2636
      %v2962 = vpop.f32.mrf.mxu0
      %v2963 = vadd.f32 %v2937, %v2962
      %2964 = vmatmul.f32.gmra.mxu0 %v2643
      %v2965 = vpop.f32.mrf.mxu0
      %v2966 = vadd.f32 %v2940, %v2965
      %2967 = vmatmul.f32.gmra.mxu0 %v2650
      %v2968 = vpop.f32.mrf.mxu0
      %v2969 = vadd.f32 %v2943, %v2968
      %2970 = vdwg.mxu0
      %2971 = vmatpush.msra.mxu0 %v2781
      %2972 = vmatpush.msra.mxu0 %v2779
      %2973 = vmatpush.msra.mxu0 %v2777
      %2974 = vmatpush.msra.mxu0 %v2775
      %2975 = vmatpush.msra.mxu0 %v2773
      %2976 = vmatpush.msra.mxu0 %v2771
      %2977 = vmatpush.msra.mxu0 %v2769
      %2978 = vmatpush.msra.mxu0 %v2767
      %2979 = vmatpush.msra.mxu0 %v2765
      %2980 = vmatpush.msra.mxu0 %v2763
      %2981 = vmatpush.msra.mxu0 %v2761
      %2982 = vmatpush.msra.mxu0 %v2759
      %2983 = vmatpush.msra.mxu0 %v2757
      %2984 = vmatpush.msra.mxu0 %v2755
      %2985 = vmatpush.msra.mxu0 %v2753
      %2986 = vmatpush.msra.mxu0 %v2751
      %2987 = vmatmul.f32.gmra.mxu0 %v2637
      %v2988 = vpop.f32.mrf.mxu0
      %v2989 = vadd.f32 %v2963, %v2988
      %2990 = vmatmul.f32.gmra.mxu0 %v2644
      %v2991 = vpop.f32.mrf.mxu0
      %v2992 = vadd.f32 %v2966, %v2991
      %2993 = vmatmul.f32.gmra.mxu0 %v2651
      %v2994 = vpop.f32.mrf.mxu0
      %v2995 = vadd.f32 %v2969, %v2994
      %2996 = vdwg.mxu0
      %2997 = vmatpush.msra.mxu0 %v2813
      %2998 = vmatpush.msra.mxu0 %v2811
      %2999 = vmatpush.msra.mxu0 %v2809
      %3000 = vmatpush.msra.mxu0 %v2807
      %3001 = vmatpush.msra.mxu0 %v2805
      %3002 = vmatpush.msra.mxu0 %v2803
      %3003 = vmatpush.msra.mxu0 %v2801
      %3004 = vmatpush.msra.mxu0 %v2799
      %3005 = vmatpush.msra.mxu0 %v2797
      %3006 = vmatpush.msra.mxu0 %v2795
      %3007 = vmatpush.msra.mxu0 %v2793
      %3008 = vmatpush.msra.mxu0 %v2791
      %3009 = vmatpush.msra.mxu0 %v2789
      %3010 = vmatpush.msra.mxu0 %v2787
      %3011 = vmatpush.msra.mxu0 %v2785
      %3012 = vmatpush.msra.mxu0 %v2783
      %3013 = vmatmul.f32.gmra.mxu0 %v2638
      %v3014 = vpop.f32.mrf.mxu0
      %v3015 = vadd.f32 %v2989, %v3014
      %3016 = vmatmul.f32.gmra.mxu0 %v2645
      %v3017 = vpop.f32.mrf.mxu0
      %v3018 = vadd.f32 %v2992, %v3017
      %3019 = vmatmul.f32.gmra.mxu0 %v2652
      %v3020 = vpop.f32.mrf.mxu0
      %v3021 = vadd.f32 %v2995, %v3020
      %3022 = vdwg.mxu0
      %3023 = vmatpush.msra.mxu0 %v2845
      %3024 = vmatpush.msra.mxu0 %v2843
      %3025 = vmatpush.msra.mxu0 %v2841
      %3026 = vmatpush.msra.mxu0 %v2839
      %3027 = vmatpush.msra.mxu0 %v2837
      %3028 = vmatpush.msra.mxu0 %v2835
      %3029 = vmatpush.msra.mxu0 %v2833
      %3030 = vmatpush.msra.mxu0 %v2831
      %3031 = vmatpush.msra.mxu0 %v2829
      %3032 = vmatpush.msra.mxu0 %v2827
      %3033 = vmatpush.msra.mxu0 %v2825
      %3034 = vmatpush.msra.mxu0 %v2823
      %3035 = vmatpush.msra.mxu0 %v2821
      %3036 = vmatpush.msra.mxu0 %v2819
      %3037 = vmatpush.msra.mxu0 %v2817
      %3038 = vmatpush.msra.mxu0 %v2815
      %3039 = vmatmul.f32.gmra.mxu0 %v2639
      %v3040 = vpop.f32.mrf.mxu0
      %v3041 = vadd.f32 %v3015, %v3040
      %3042 = vmatmul.f32.gmra.mxu0 %v2646
      %v3043 = vpop.f32.mrf.mxu0
      %v3044 = vadd.f32 %v3018, %v3043
      %3045 = vmatmul.f32.gmra.mxu0 %v2653
      %v3046 = vpop.f32.mrf.mxu0
      %v3047 = vadd.f32 %v3021, %v3046
      %3048 = vdwg.mxu0
      %3049 = vmatpush.msra.mxu0 0.0
      %3050 = vmatpush.msra.mxu0 0.0
      %3051 = vmatpush.msra.mxu0 %v2888
      %3052 = vmatpush.msra.mxu0 %v2871
      %3053 = vmatpush.msra.mxu0 %v2869
      %3054 = vmatpush.msra.mxu0 %v2867
      %3055 = vmatpush.msra.mxu0 %v2865
      %3056 = vmatpush.msra.mxu0 %v2863
      %3057 = vmatpush.msra.mxu0 %v2861
      %3058 = vmatpush.msra.mxu0 %v2859
      %3059 = vmatpush.msra.mxu0 %v2857
      %3060 = vmatpush.msra.mxu0 %v2855
      %3061 = vmatpush.msra.mxu0 %v2853
      %3062 = vmatpush.msra.mxu0 %v2851
      %3063 = vmatpush.msra.mxu0 %v2849
      %3064 = vmatpush.msra.mxu0 %v2847
      %3065 = vmatmul.f32.gmra.mxu0 %v2878
      %v3066 = vpop.f32.mrf.mxu0
      %v3067 = vadd.f32 %v3041, %v3066
      %3068 = vmatmul.f32.gmra.mxu0 %v2881
      %v3069 = vpop.f32.mrf.mxu0
      %v3070 = vadd.f32 %v3044, %v3069
      %3071 = vmatmul.f32.gmra.mxu0 %v2884
      %v3072 = vpop.f32.mrf.mxu0
      %v3073 = vadd.f32 %v3047, %v3072
      %3074 = vdwg.mxu0
      %3075 = vmatpush.msra.mxu0 %v2686
      %3076 = vmatpush.msra.mxu0 %v2684
      %3077 = vmatpush.msra.mxu0 %v2682
      %3078 = vmatpush.msra.mxu0 %v2680
      %3079 = vmatpush.msra.mxu0 %v2678
      %3080 = vmatpush.msra.mxu0 %v2676
      %3081 = vmatpush.msra.mxu0 %v2674
      %3082 = vmatpush.msra.mxu0 %v2672
      %3083 = vmatpush.msra.mxu0 %v2670
      %3084 = vmatpush.msra.mxu0 %v2668
      %3085 = vmatpush.msra.mxu0 %v2666
      %3086 = vmatpush.msra.mxu0 %v2664
      %3087 = vmatpush.msra.mxu0 %v2662
      %3088 = vmatpush.msra.mxu0 %v2660
      %3089 = vmatpush.msra.mxu0 %v2658
      %3090 = vmatpush.msra.mxu0 %v2656
      %3091 = vmatmul.f32.gmra.mxu0 %v2634
      %v3092 = vpop.f32.mrf.mxu0
      %v3093 = vadd.f32 %v2876, %v3092
      %3094 = vmatmul.f32.gmra.mxu0 %v2641
      %v3095 = vpop.f32.mrf.mxu0
      %v3096 = vadd.f32 %v2876, %v3095
      %3097 = vmatmul.f32.gmra.mxu0 %v2648
      %v3098 = vpop.f32.mrf.mxu0
      %v3099 = vadd.f32 %v2876, %v3098
      %3100 = vdwg.mxu0
      %3101 = vmatpush.msra.mxu0 %v2718
      %3102 = vmatpush.msra.mxu0 %v2716
      %3103 = vmatpush.msra.mxu0 %v2714
      %3104 = vmatpush.msra.mxu0 %v2712
      %3105 = vmatpush.msra.mxu0 %v2710
      %3106 = vmatpush.msra.mxu0 %v2708
      %3107 = vmatpush.msra.mxu0 %v2706
      %3108 = vmatpush.msra.mxu0 %v2704
      %3109 = vmatpush.msra.mxu0 %v2702
      %3110 = vmatpush.msra.mxu0 %v2700
      %3111 = vmatpush.msra.mxu0 %v2698
      %3112 = vmatpush.msra.mxu0 %v2696
      %3113 = vmatpush.msra.mxu0 %v2694
      %3114 = vmatpush.msra.mxu0 %v2692
      %3115 = vmatpush.msra.mxu0 %v2690
      %3116 = vmatpush.msra.mxu0 %v2688
      %3117 = vmatmul.f32.gmra.mxu0 %v2635
      %v3118 = vpop.f32.mrf.mxu0
      %v3119 = vadd.f32 %v3093, %v3118
      %3120 = vmatmul.f32.gmra.mxu0 %v2642
      %v3121 = vpop.f32.mrf.mxu0
      %v3122 = vadd.f32 %v3096, %v3121
      %3123 = vmatmul.f32.gmra.mxu0 %v2649
      %v3124 = vpop.f32.mrf.mxu0
      %v3125 = vadd.f32 %v3099, %v3124
      %3126 = vdwg.mxu0
      %3127 = vmatpush.msra.mxu0 %v2750
      %3128 = vmatpush.msra.mxu0 %v2748
      %3129 = vmatpush.msra.mxu0 %v2746
      %3130 = vmatpush.msra.mxu0 %v2744
      %3131 = vmatpush.msra.mxu0 %v2742
      %3132 = vmatpush.msra.mxu0 %v2740
      %3133 = vmatpush.msra.mxu0 %v2738
      %3134 = vmatpush.msra.mxu0 %v2736
      %3135 = vmatpush.msra.mxu0 %v2734
      %3136 = vmatpush.msra.mxu0 %v2732
      %3137 = vmatpush.msra.mxu0 %v2730
      %3138 = vmatpush.msra.mxu0 %v2728
      %3139 = vmatpush.msra.mxu0 %v2726
      %3140 = vmatpush.msra.mxu0 %v2724
      %3141 = vmatpush.msra.mxu0 %v2722
      %3142 = vmatpush.msra.mxu0 %v2720
      %3143 = vmatmul.f32.gmra.mxu0 %v2636
      %v3144 = vpop.f32.mrf.mxu0
      %v3145 = vadd.f32 %v3119, %v3144
      %3146 = vmatmul.f32.gmra.mxu0 %v2643
      %v3147 = vpop.f32.mrf.mxu0
      %v3148 = vadd.f32 %v3122, %v3147
      %3149 = vmatmul.f32.gmra.mxu0 %v2650
      %v3150 = vpop.f32.mrf.mxu0
      %v3151 = vadd.f32 %v3125, %v3150
      %3152 = vdwg.mxu0
      %3153 = vmatpush.msra.mxu0 %v2782
      %3154 = vmatpush.msra.mxu0 %v2780
      %3155 = vmatpush.msra.mxu0 %v2778
      %3156 = vmatpush.msra.mxu0 %v2776
      %3157 = vmatpush.msra.mxu0 %v2774
      %3158 = vmatpush.msra.mxu0 %v2772
      %3159 = vmatpush.msra.mxu0 %v2770
      %3160 = vmatpush.msra.mxu0 %v2768
      %3161 = vmatpush.msra.mxu0 %v2766
      %3162 = vmatpush.msra.mxu0 %v2764
      %3163 = vmatpush.msra.mxu0 %v2762
      %3164 = vmatpush.msra.mxu0 %v2760
      %3165 = vmatpush.msra.mxu0 %v2758
      %3166 = vmatpush.msra.mxu0 %v2756
      %3167 = vmatpush.msra.mxu0 %v2754
      %3168 = vmatpush.msra.mxu0 %v2752
      %3169 = vmatmul.f32.gmra.mxu0 %v2637
      %v3170 = vpop.f32.mrf.mxu0
      %v3171 = vadd.f32 %v3145, %v3170
      %3172 = vmatmul.f32.gmra.mxu0 %v2644
      %v3173 = vpop.f32.mrf.mxu0
      %v3174 = vadd.f32 %v3148, %v3173
      %3175 = vmatmul.f32.gmra.mxu0 %v2651
      %v3176 = vpop.f32.mrf.mxu0
      %v3177 = vadd.f32 %v3151, %v3176
      %3178 = vdwg.mxu0
      %3179 = vmatpush.msra.mxu0 %v2814
      %3180 = vmatpush.msra.mxu0 %v2812
      %3181 = vmatpush.msra.mxu0 %v2810
      %3182 = vmatpush.msra.mxu0 %v2808
      %3183 = vmatpush.msra.mxu0 %v2806
      %3184 = vmatpush.msra.mxu0 %v2804
      %3185 = vmatpush.msra.mxu0 %v2802
      %3186 = vmatpush.msra.mxu0 %v2800
      %3187 = vmatpush.msra.mxu0 %v2798
      %3188 = vmatpush.msra.mxu0 %v2796
      %3189 = vmatpush.msra.mxu0 %v2794
      %3190 = vmatpush.msra.mxu0 %v2792
      %3191 = vmatpush.msra.mxu0 %v2790
      %3192 = vmatpush.msra.mxu0 %v2788
      %3193 = vmatpush.msra.mxu0 %v2786
      %3194 = vmatpush.msra.mxu0 %v2784
      %3195 = vmatmul.f32.gmra.mxu0 %v2638
      %v3196 = vpop.f32.mrf.mxu0
      %v3197 = vadd.f32 %v3171, %v3196
      %3198 = vmatmul.f32.gmra.mxu0 %v2645
      %v3199 = vpop.f32.mrf.mxu0
      %v3200 = vadd.f32 %v3174, %v3199
      %3201 = vmatmul.f32.gmra.mxu0 %v2652
      %v3202 = vpop.f32.mrf.mxu0
      %v3203 = vadd.f32 %v3177, %v3202
      %3204 = vdwg.mxu0
      %3205 = vmatpush.msra.mxu0 %v2846
      %3206 = vmatpush.msra.mxu0 %v2844
      %3207 = vmatpush.msra.mxu0 %v2842
      %3208 = vmatpush.msra.mxu0 %v2840
      %3209 = vmatpush.msra.mxu0 %v2838
      %3210 = vmatpush.msra.mxu0 %v2836
      %3211 = vmatpush.msra.mxu0 %v2834
      %3212 = vmatpush.msra.mxu0 %v2832
      %3213 = vmatpush.msra.mxu0 %v2830
      %3214 = vmatpush.msra.mxu0 %v2828
      %3215 = vmatpush.msra.mxu0 %v2826
      %3216 = vmatpush.msra.mxu0 %v2824
      %3217 = vmatpush.msra.mxu0 %v2822
      %3218 = vmatpush.msra.mxu0 %v2820
      %3219 = vmatpush.msra.mxu0 %v2818
      %3220 = vmatpush.msra.mxu0 %v2816
      %3221 = vmatmul.f32.gmra.mxu0 %v2639
      %v3222 = vpop.f32.mrf.mxu0
      %v3223 = vadd.f32 %v3197, %v3222
      %3224 = vmatmul.f32.gmra.mxu0 %v2646
      %v3225 = vpop.f32.mrf.mxu0
      %v3226 = vadd.f32 %v3200, %v3225
      %3227 = vmatmul.f32.gmra.mxu0 %v2653
      %v3228 = vpop.f32.mrf.mxu0
      %v3229 = vadd.f32 %v3203, %v3228
      %3230 = vdwg.mxu0
      %3231 = vmatpush.msra.mxu0 0.0
      %3232 = vmatpush.msra.mxu0 0.0
      %3233 = vmatpush.msra.mxu0 %v2891
      %3234 = vmatpush.msra.mxu0 %v2872
      %3235 = vmatpush.msra.mxu0 %v2870
      %3236 = vmatpush.msra.mxu0 %v2868
      %3237 = vmatpush.msra.mxu0 %v2866
      %3238 = vmatpush.msra.mxu0 %v2864
      %3239 = vmatpush.msra.mxu0 %v2862
      %3240 = vmatpush.msra.mxu0 %v2860
      %3241 = vmatpush.msra.mxu0 %v2858
      %3242 = vmatpush.msra.mxu0 %v2856
      %3243 = vmatpush.msra.mxu0 %v2854
      %3244 = vmatpush.msra.mxu0 %v2852
      %3245 = vmatpush.msra.mxu0 %v2850
      %3246 = vmatpush.msra.mxu0 %v2848
      %3247 = vmatmul.f32.gmra.mxu0 %v2878
      %v3248 = vpop.f32.mrf.mxu0
      %v3249 = vadd.f32 %v3223, %v3248
      %3250 = vmatmul.f32.gmra.mxu0 %v2881
      %v3251 = vpop.f32.mrf.mxu0
      %v3252 = vadd.f32 %v3226, %v3251
      %3253 = vmatmul.f32.gmra.mxu0 %v2884
      %v3254 = vpop.f32.mrf.mxu0
      %v3255 = vadd.f32 %v3229, %v3254
      %3256 = vdwg.mxu0
      %3257 = vst [vmem:[%s549] sm:$0xff] %v3067
      %vm3258 = vcmask 588800
      %3259 = vst.msk [vmem:[%s549 + $0x8] sm:$0xff] %vm3258, %v3249
      %3260 = vst [vmem:[%s549 + $0x10] sm:$0xff] %v3070
      %3261 = vst.msk [vmem:[%s549 + $0x18] sm:$0xff] %vm3258, %v3252
      %3262 = vst [vmem:[%s549 + $0x20] sm:$0x7] %v3073
      %vm3263 = vcmask 583680
      %3264 = vst.msk [vmem:[%s549 + $0x28] sm:$0x7] %vm3263, %v3255
      %p3265 = scmp.lt.s32.totalorder %s29, 1
      %s3266 = scalar_select %p3265, %s29, 1
      %s3267 = smul.addr %s3266, 6
      %s3268 = smul.addr %s3267, 8
      %s3269 = scalar_lea.vmem %s17, %s3268
      // Predicated region
      $region89: #{eegnet_autoencoder_forward.1} parent=87 // pred_check
        %p3270 = pneg %p409
      $region90: #{eegnet_autoencoder_forward.1} parent=87 // pred_check_branch
        %3272 = sbr.rel (%p3270) target = $region92
      $region91: #{eegnet_autoencoder_forward.1} parent=87 // pred_region
        _
      $region92: #{eegnet_autoencoder_forward.1} parent=87 // pred_fallthru
        _
    $region88: #{eegnet_autoencoder_forward.1} parent=5 // pred_fallthru
      _
    %p3273 = scmp.le.s32.totalorder 2, %s24
    // Predicated region
    $region93: #{eegnet_autoencoder_forward.1} parent=5 // pred_check
      %p3274 = pneg %p3273
    $region94: #{eegnet_autoencoder_forward.1} parent=5 // pred_check_branch
      %3276 = sbr.rel (%p3274) target = $region96
    $region95: #{eegnet_autoencoder_forward.1} parent=5 // pred_region
      %s3277 = ssub.s32 %s24, 2
      // Predicated region
      $region97: #{eegnet_autoencoder_forward.1} parent=95 // pred_check
        %p3278 = pneg %p415
      $region98: #{eegnet_autoencoder_forward.1} parent=95 // pred_check_branch
        %3280 = sbr.rel (%p3278) target = $region100
      $region99: #{eegnet_autoencoder_forward.1} parent=95 // pred_region
        %p3281 = scmp.lt.s32.totalorder %s30, 1
        %s3282 = scalar_select %p3281, %s30, 1
        %s3283 = smul.addr %s3282, 6
        %s3284 = smul.addr %s3283, 8
        %s3285 = scalar_lea.vmem %s17, %s3284
      $region100: #{eegnet_autoencoder_forward.1} parent=95 // pred_fallthru
        _
    $region96: #{eegnet_autoencoder_forward.1} parent=5 // pred_fallthru
      _
  $region6: #{eegnet_autoencoder_forward.1} parent=0 // loop_footer
    %s28 = sadd.s32 1, %s24
  $region7: #{eegnet_autoencoder_forward.1} parent=0 // loop_footer_branch
    %23 = sbr.rel target = $region3
  $region8: #{eegnet_autoencoder_forward.1} parent=0 // loop_exit
    _

</llo_original>
